<compile_context>
chip_gen: v7x
topology: tpu7x:2x2x1
jax: 0.10.0
libtpu: 0.0.40
codegen_flags: <defaults>
</compile_context>

<pallas_src>
import functools

import jax
import jax.numpy as jnp
from jax.experimental import pallas as pl
from jax.experimental.pallas import tpu as pltpu

BN_EPS = 1e-5
LANE = 128

_HAS_BUFFERED = hasattr(pl, "Buffered")
# Narrow "Buffered(1) unsupported on this jax/libtpu" error set (review: do not
# swallow arbitrary runtime errors with a broad `except Exception`).
_FALLBACK_ERRORS = tuple(
    e for e in (TypeError, ValueError, NotImplementedError,
                getattr(pltpu, "LoweringException", None),
                getattr(getattr(jax, "errors", None), "JaxRuntimeError", None))
    if isinstance(e, type) and issubclass(e, Exception))


def _arm_kernel(x_ref, w3_ref, b1_ref, wa_ref, b2_ref, mask_ref, o_ref, *,
                H, W, Cin, Cp):
    """One batch element per grid step.

    x_ref   : (1, (H+3)*(W+2), Cin)  bf16 zero-padded NHWC input, rows flattened
    w3_ref  : (9*Cin, Cp)            bf16 3x3 weights (tap-major), BN1 scale folded
    b1_ref  : (1, Cp)                f32 BN1 bias
    wa_ref  : (Cp, Cp)               f32 1x1 weights (ci, co), BN2 scale & 1/(H*W) folded
    b2_ref  : (1, Cp)                f32 BN2 bias
    mask_ref: (1, H*(W+2))           f32 {0,1} valid-column mask for the pool
    o_ref   : (1, H*(W+2), Cp)       bf16 output in the "wide" row layout
    """
    Wp = W + 2
    HWp = H * Wp

    # ---- 3x3 conv: 9 shifted matmuls over the flattened padded slab. Each tap
    # is a contiguous sublane slice; the accumulator is seeded by the first
    # tap's matmul (no zeros init, one fewer full-tile VPU add).
    acc = jnp.dot(x_ref[0, 0:HWp, :], w3_ref[0:Cin, :],
                  preferred_element_type=jnp.float32)
    for t in range(1, 9):
        kh, kw = divmod(t, 3)
        off = kh * Wp + kw                              # static offset
        acc = acc + jnp.dot(x_ref[0, off:off + HWp, :],
                            w3_ref[t * Cin:(t + 1) * Cin, :],
                            preferred_element_type=jnp.float32)

    # ---- BN1 bias + ReLU (scale already folded into w3).
    feat = jnp.maximum(acc + b1_ref[...], 0.0)          # (HWp, Cp) f32

    # ---- global average pool over the H*W valid pixels as an MXU matvec; the
    # mask zeroes the 2 junk columns per row, 1/(H*W) is folded into wa.
    pooled = jnp.dot(mask_ref[...], feat,
                     preferred_element_type=jnp.float32)      # (1, Cp)

    # ---- 1x1 conv + BN2 bias + sigmoid (tiny; stays f32).
    att = jax.nn.sigmoid(
        jnp.dot(pooled, wa_ref[...], preferred_element_type=jnp.float32)
        + b2_ref[...])                                  # (1, Cp)

    # ---- single fused store: channel-wise rescale + bf16 cast, one write.
    o_ref[0] = (feat * att).astype(o_ref.dtype)


def _vmem_limit_bytes(L, HWp, Cin, Cp, single_buffer_weights):
    """Size the scoped-VMEM request from the actual per-step buffers."""
    nb = 1 if single_buffer_weights else 2
    need = (
        2 * L * Cin * 2            # x block (bf16), double-buffered
        + 2 * HWp * Cp * 2         # out block (bf16), double-buffered
        + nb * 9 * Cin * Cp * 2    # w3 (bf16)
        + nb * Cp * Cp * 4         # wa (f32)
        + nb * 2 * Cp * 4          # b1, b2 (f32)
        + nb * HWp * 4             # pool mask (f32)
        + 2 * HWp * Cp * 4         # in-kernel f32 acc / feat live values
    )
    return int(max(2 * need, 16 * 1024 * 1024))   # 2x headroom, 16 MiB floor


@functools.partial(jax.jit, static_argnames=("single_buffer_weights",))
def _arm_forward(x_nchw, w_conv, bn1_scale, bn1_bias, w_atten, bn2_scale,
                 bn2_bias, *, single_buffer_weights=True):
    N, Cin, H, W = x_nchw.shape
    Cout = w_conv.shape[0]
    Cp = ((Cout + LANE - 1) // LANE) * LANE           # lane-dense channel axis
    Wp = W + 2
    HWp = H * Wp
    L = (H + 3) * Wp                                  # 1 top pad, 2 bottom pad

    # A real PyTorch 1x1 Conv2d weight is (Cout, Cout, 1, 1); accept both.
    if w_atten.ndim == 4:
        w_atten = w_atten.reshape(w_atten.shape[0], w_atten.shape[1])

    f32 = jnp.float32
    # Fold BN1 scale into the 3x3 weights -> flat (9*Cin, Cp) tap-major, bf16.
    w3 = jnp.transpose(w_conv.astype(f32), (2, 3, 1, 0)) * bn1_scale.astype(f32)
    w3 = jnp.pad(w3.reshape(9 * Cin, Cout),
                 ((0, 0), (0, Cp - Cout))).astype(jnp.bfloat16)
    b1 = jnp.pad(bn1_bias.astype(f32), (0, Cp - Cout)).reshape(1, Cp)

    # Fold BN2 scale and the 1/(H*W) of the global average pool into wa (ci, co).
    wa = jnp.transpose(w_atten.astype(f32), (1, 0)) * (
        bn2_scale.astype(f32) / float(H * W))
    wa = jnp.pad(wa, ((0, Cp - Cout), (0, Cp - Cout)))
    b2 = jnp.pad(bn2_bias.astype(f32), (0, Cp - Cout)).reshape(1, Cp)

    # {0,1} mask selecting the W valid columns of every widened (W+2) row.
    mask = (jnp.arange(HWp, dtype=jnp.int32) % Wp < W).astype(f32).reshape(1, HWp)

    # NCHW -> NHWC, zero-pad (1 top / 2 bottom / 1 left-right; the extra bottom
    # rows keep the shifted flat slices in bounds), flatten rows, cast bf16.
    # Under jit the transpose + pad + cast fuse into a single HBM pass.
    x_nhwc = jnp.transpose(x_nchw, (0, 2, 3, 1))
    x_pad = jnp.pad(x_nhwc, ((0, 0), (1, 2), (1, 1), (0, 0)))
    x_flat = x_pad.astype(jnp.bfloat16).reshape(N, L, Cin)

    kernel = functools.partial(_arm_kernel, H=H, W=W, Cin=Cin, Cp=Cp)

    # Grid-invariant operands: request single buffering (saves the second VMEM
    # buffer; no DMA win expected since their index_map is constant).
    wkw = (dict(pipeline_mode=pl.Buffered(1))
           if (single_buffer_weights and _HAS_BUFFERED) else {})

    out_wide = pl.pallas_call(
        kernel,
        out_shape=jax.ShapeDtypeStruct((N, HWp, Cp), jnp.bfloat16),
        grid_spec=pltpu.PrefetchScalarGridSpec(
            num_scalar_prefetch=0,
            grid=(N,),
            in_specs=[
                pl.BlockSpec((1, L, Cin), lambda n: (n, 0, 0)),
                pl.BlockSpec((9 * Cin, Cp), lambda n: (0, 0), **wkw),
                pl.BlockSpec((1, Cp), lambda n: (0, 0), **wkw),
                pl.BlockSpec((Cp, Cp), lambda n: (0, 0), **wkw),
                pl.BlockSpec((1, Cp), lambda n: (0, 0), **wkw),
                pl.BlockSpec((1, HWp), lambda n: (0, 0), **wkw),
            ],
            out_specs=pl.BlockSpec((1, HWp, Cp), lambda n: (n, 0, 0)),
        ),
        compiler_params=pltpu.CompilerParams(
            dimension_semantics=("parallel",),
            vmem_limit_bytes=_vmem_limit_bytes(L, HWp, Cin, Cp,
                                               single_buffer_weights),
        ),
    )(x_flat, w3, b1, wa, b2, mask)

    # Drop the 2 junk columns + padded channels, cast back to f32 and return
    # NCHW to match the PyTorch interface (one fused pass under jit; consumers
    # that accept NHWC could take the sliced array directly and skip it).
    out = out_wide.reshape(N, H, Wp, Cp)[:, :, :W, :Cout].astype(jnp.float32)
    return jnp.transpose(out, (0, 3, 1, 2))


def attention_refinement_module(x_nchw, w_conv, bn1_scale, bn1_bias,
                                w_atten, bn2_scale, bn2_bias):
    """x_nchw: (N, Cin, H, W). Returns (N, Cout, H, W) f32, matching PyTorch."""
    if not _HAS_BUFFERED:
        return _arm_forward(x_nchw, w_conv, bn1_scale, bn1_bias,
                            w_atten, bn2_scale, bn2_bias,
                            single_buffer_weights=False)
    try:
        return _arm_forward(x_nchw, w_conv, bn1_scale, bn1_bias,
                            w_atten, bn2_scale, bn2_bias,
                            single_buffer_weights=True)
    except _FALLBACK_ERRORS:
        # pl.Buffered(1) present but rejected by this jax/libtpu combination:
        # retry with default double-buffered pipelining for the weights only.
        return _arm_forward(x_nchw, w_conv, bn1_scale, bn1_bias,
                            w_atten, bn2_scale, bn2_bias,
                            single_buffer_weights=False)


def _reference(x_nchw, w_conv, bn1_scale, bn1_bias, w_atten, bn2_scale, bn2_bias):
    """Pure-JAX f32 reference mirroring the PyTorch forward (eval-mode BN)."""
    if w_atten.ndim == 4:
        w_atten = w_atten.reshape(w_atten.shape[0], w_atten.shape[1])
    feat = jax.lax.conv_general_dilated(
        x_nchw, w_conv, window_strides=(1, 1), padding=((1, 1), (1, 1)),
        dimension_numbers=("NCHW", "OIHW", "NCHW"))
    feat = jnp.maximum(feat * bn1_scale[None, :, None, None]
                       + bn1_bias[None, :, None, None], 0.0)
    pooled = jnp.mean(feat, axis=(2, 3))                       # (N, Cout)
    att = jax.nn.sigmoid(jnp.einsum("oc,nc->no", w_atten, pooled)
                         * bn2_scale[None, :] + bn2_bias[None, :])
    return feat * att[:, :, None, None]


if __name__ == "__main__":
    N, Cin, Cout, H, W = 2, 4, 8, 16, 16

    key = jax.random.PRNGKey(0)
    k_x, k_w3, k_wa, k_g1, k_b1, k_g2, k_b2 = jax.random.split(key, 7)

    x = jax.random.normal(k_x, (N, Cin, H, W), jnp.float32)

    # Kaiming-normal (a=1 -> gain 1): std = 1/sqrt(fan_in).
    w_conv = jax.random.normal(k_w3, (Cout, Cin, 3, 3), jnp.float32) / jnp.sqrt(
        Cin * 9.0)
    # 1x1 conv weight in genuine PyTorch Conv2d layout (Cout, Cout, 1, 1).
    w_atten = jax.random.normal(k_wa, (Cout, Cout, 1, 1), jnp.float32) / jnp.sqrt(
        float(Cout))

    # BatchNorm (eval mode): fold gamma/beta/running stats into scale/bias.
    gamma1 = 1.0 + 0.1 * jax.random.normal(k_g1, (Cout,), jnp.float32)
    beta1 = 0.1 * jax.random.normal(k_b1, (Cout,), jnp.float32)
    rmean1 = jnp.zeros((Cout,), jnp.float32)
    rvar1 = jnp.ones((Cout,), jnp.float32)
    bn1_scale = gamma1 / jnp.sqrt(rvar1 + BN_EPS)
    bn1_bias = beta1 - rmean1 * bn1_scale

    gamma2 = 1.0 + 0.1 * jax.random.normal(k_g2, (Cout,), jnp.float32)
    beta2 = 0.1 * jax.random.normal(k_b2, (Cout,), jnp.float32)
    rmean2 = jnp.zeros((Cout,), jnp.float32)
    rvar2 = jnp.ones((Cout,), jnp.float32)
    bn2_scale = gamma2 / jnp.sqrt(rvar2 + BN_EPS)
    bn2_bias = beta2 - rmean2 * bn2_scale

    out = attention_refinement_module(
        x, w_conv, bn1_scale, bn1_bias, w_atten, bn2_scale, bn2_bias)
    out = jax.block_until_ready(out)

    ref = _reference(
        x, w_conv, bn1_scale, bn1_bias, w_atten, bn2_scale, bn2_bias)

    assert out.shape == (N, Cout, H, W), out.shape
    # Kernel matmuls run in bf16 (f32 accumulation) and the fused output is
    # stored in bf16; compare against the pure-f32 reference with a
    # correspondingly loose tolerance.
    max_err = float(jnp.max(jnp.abs(out - ref)))
    assert jnp.allclose(out, ref, atol=5e-2, rtol=5e-2), max_err

    print("KERNEL_OK")
</pallas_src>

<mosaic_0001>
module attributes {stable_mosaic.version = 11 : i64} {
  func.func @_arm_kernel(%arg0: i32, %arg1: memref<1x342x4xbf16, #tpu.memory_space<vmem>>, %arg2: memref<36x128xbf16, #tpu.memory_space<vmem>>, %arg3: memref<1x128xf32, #tpu.memory_space<vmem>>, %arg4: memref<128x128xf32, #tpu.memory_space<vmem>>, %arg5: memref<1x128xf32, #tpu.memory_space<vmem>>, %arg6: memref<1x288xf32, #tpu.memory_space<vmem>>, %arg7: memref<1x288x128xbf16, #tpu.memory_space<vmem>>) attributes {dimension_semantics = [#tpu.dimension_semantics<parallel>], iteration_bounds = array<i64: 2>, scalar_prefetch = 0 : i64, scratch_operands = 0 : i64, tpu.core_type = #tpu.core_type<tc>, window_params = [{transform_indices = @transform_0, window_bounds = array<i64: 1, 342, 4>}, {pipeline_mode = #tpu.pipeline_mode<synchronous>, transform_indices = @transform_1, window_bounds = array<i64: 36, 128>}, {pipeline_mode = #tpu.pipeline_mode<synchronous>, transform_indices = @transform_2, window_bounds = array<i64: 1, 128>}, {pipeline_mode = #tpu.pipeline_mode<synchronous>, transform_indices = @transform_3, window_bounds = array<i64: 128, 128>}, {pipeline_mode = #tpu.pipeline_mode<synchronous>, transform_indices = @transform_4, window_bounds = array<i64: 1, 128>}, {pipeline_mode = #tpu.pipeline_mode<synchronous>, transform_indices = @transform_5, window_bounds = array<i64: 1, 288>}, {transform_indices = @transform_6, window_bounds = array<i64: 1, 288, 128>}]} {
    %c0 = arith.constant 0 : index
    %c0_0 = arith.constant 0 : index
    %c0_1 = arith.constant 0 : index
    %0 = vector.load %arg1[%c0, %c0_0, %c0_1] : memref<1x342x4xbf16, #tpu.memory_space<vmem>>, vector<1x288x4xbf16>
    %1 = vector.shape_cast %0 : vector<1x288x4xbf16> to vector<288x4xbf16>
    %c0_2 = arith.constant 0 : index
    %c0_3 = arith.constant 0 : index
    %2 = vector.load %arg2[%c0_2, %c0_3] : memref<36x128xbf16, #tpu.memory_space<vmem>>, vector<4x128xbf16>
    %cst = arith.constant dense<0.000000e+00> : vector<288x128xf32>
    %3 = tpu.matmul %1, %2, %cst {dimension_numbers = #tpu.dot_dimension_numbers<[1], [0], [0], [1], [0, 0, 1, 1], [], []>} : vector<288x4xbf16>, vector<4x128xbf16>, vector<288x128xf32> -> vector<288x128xf32>
    %c0_4 = arith.constant 0 : index
    %c1 = arith.constant 1 : index
    %c0_5 = arith.constant 0 : index
    %4 = vector.load %arg1[%c0_4, %c1, %c0_5] : memref<1x342x4xbf16, #tpu.memory_space<vmem>>, vector<1x288x4xbf16>
    %5 = vector.shape_cast %4 : vector<1x288x4xbf16> to vector<288x4xbf16>
    %c4 = arith.constant 4 : index
    %c0_6 = arith.constant 0 : index
    %6 = vector.load %arg2[%c4, %c0_6] : memref<36x128xbf16, #tpu.memory_space<vmem>>, vector<4x128xbf16>
    %cst_7 = arith.constant dense<0.000000e+00> : vector<288x128xf32>
    %7 = tpu.matmul %5, %6, %cst_7 {dimension_numbers = #tpu.dot_dimension_numbers<[1], [0], [0], [1], [0, 0, 1, 1], [], []>} : vector<288x4xbf16>, vector<4x128xbf16>, vector<288x128xf32> -> vector<288x128xf32>
    %8 = arith.addf %3, %7 : vector<288x128xf32>
    %c0_8 = arith.constant 0 : index
    %c2 = arith.constant 2 : index
    %c0_9 = arith.constant 0 : index
    %9 = vector.load %arg1[%c0_8, %c2, %c0_9] : memref<1x342x4xbf16, #tpu.memory_space<vmem>>, vector<1x288x4xbf16>
    %10 = vector.shape_cast %9 : vector<1x288x4xbf16> to vector<288x4xbf16>
    %c8 = arith.constant 8 : index
    %c0_10 = arith.constant 0 : index
    %11 = vector.load %arg2[%c8, %c0_10] : memref<36x128xbf16, #tpu.memory_space<vmem>>, vector<4x128xbf16>
    %cst_11 = arith.constant dense<0.000000e+00> : vector<288x128xf32>
    %12 = tpu.matmul %10, %11, %cst_11 {dimension_numbers = #tpu.dot_dimension_numbers<[1], [0], [0], [1], [0, 0, 1, 1], [], []>} : vector<288x4xbf16>, vector<4x128xbf16>, vector<288x128xf32> -> vector<288x128xf32>
    %13 = arith.addf %8, %12 : vector<288x128xf32>
    %c0_12 = arith.constant 0 : index
    %c18 = arith.constant 18 : index
    %c0_13 = arith.constant 0 : index
    %14 = vector.load %arg1[%c0_12, %c18, %c0_13] : memref<1x342x4xbf16, #tpu.memory_space<vmem>>, vector<1x288x4xbf16>
    %15 = vector.shape_cast %14 : vector<1x288x4xbf16> to vector<288x4xbf16>
    %c12 = arith.constant 12 : index
    %c0_14 = arith.constant 0 : index
    %16 = vector.load %arg2[%c12, %c0_14] : memref<36x128xbf16, #tpu.memory_space<vmem>>, vector<4x128xbf16>
    %cst_15 = arith.constant dense<0.000000e+00> : vector<288x128xf32>
    %17 = tpu.matmul %15, %16, %cst_15 {dimension_numbers = #tpu.dot_dimension_numbers<[1], [0], [0], [1], [0, 0, 1, 1], [], []>} : vector<288x4xbf16>, vector<4x128xbf16>, vector<288x128xf32> -> vector<288x128xf32>
    %18 = arith.addf %13, %17 : vector<288x128xf32>
    %c0_16 = arith.constant 0 : index
    %c19 = arith.constant 19 : index
    %c0_17 = arith.constant 0 : index
    %19 = vector.load %arg1[%c0_16, %c19, %c0_17] : memref<1x342x4xbf16, #tpu.memory_space<vmem>>, vector<1x288x4xbf16>
    %20 = vector.shape_cast %19 : vector<1x288x4xbf16> to vector<288x4xbf16>
    %c16 = arith.constant 16 : index
    %c0_18 = arith.constant 0 : index
    %21 = vector.load %arg2[%c16, %c0_18] : memref<36x128xbf16, #tpu.memory_space<vmem>>, vector<4x128xbf16>
    %cst_19 = arith.constant dense<0.000000e+00> : vector<288x128xf32>
    %22 = tpu.matmul %20, %21, %cst_19 {dimension_numbers = #tpu.dot_dimension_numbers<[1], [0], [0], [1], [0, 0, 1, 1], [], []>} : vector<288x4xbf16>, vector<4x128xbf16>, vector<288x128xf32> -> vector<288x128xf32>
    %23 = arith.addf %18, %22 : vector<288x128xf32>
    %c0_20 = arith.constant 0 : index
    %c20 = arith.constant 20 : index
    %c0_21 = arith.constant 0 : index
    %24 = vector.load %arg1[%c0_20, %c20, %c0_21] : memref<1x342x4xbf16, #tpu.memory_space<vmem>>, vector<1x288x4xbf16>
    %25 = vector.shape_cast %24 : vector<1x288x4xbf16> to vector<288x4xbf16>
    %c20_22 = arith.constant 20 : index
    %c0_23 = arith.constant 0 : index
    %26 = vector.load %arg2[%c20_22, %c0_23] : memref<36x128xbf16, #tpu.memory_space<vmem>>, vector<4x128xbf16>
    %cst_24 = arith.constant dense<0.000000e+00> : vector<288x128xf32>
    %27 = tpu.matmul %25, %26, %cst_24 {dimension_numbers = #tpu.dot_dimension_numbers<[1], [0], [0], [1], [0, 0, 1, 1], [], []>} : vector<288x4xbf16>, vector<4x128xbf16>, vector<288x128xf32> -> vector<288x128xf32>
    %28 = arith.addf %23, %27 : vector<288x128xf32>
    %c0_25 = arith.constant 0 : index
    %c36 = arith.constant 36 : index
    %c0_26 = arith.constant 0 : index
    %29 = vector.load %arg1[%c0_25, %c36, %c0_26] : memref<1x342x4xbf16, #tpu.memory_space<vmem>>, vector<1x288x4xbf16>
    %30 = vector.shape_cast %29 : vector<1x288x4xbf16> to vector<288x4xbf16>
    %c24 = arith.constant 24 : index
    %c0_27 = arith.constant 0 : index
    %31 = vector.load %arg2[%c24, %c0_27] : memref<36x128xbf16, #tpu.memory_space<vmem>>, vector<4x128xbf16>
    %cst_28 = arith.constant dense<0.000000e+00> : vector<288x128xf32>
    %32 = tpu.matmul %30, %31, %cst_28 {dimension_numbers = #tpu.dot_dimension_numbers<[1], [0], [0], [1], [0, 0, 1, 1], [], []>} : vector<288x4xbf16>, vector<4x128xbf16>, vector<288x128xf32> -> vector<288x128xf32>
    %33 = arith.addf %28, %32 : vector<288x128xf32>
    %c0_29 = arith.constant 0 : index
    %c37 = arith.constant 37 : index
    %c0_30 = arith.constant 0 : index
    %34 = vector.load %arg1[%c0_29, %c37, %c0_30] : memref<1x342x4xbf16, #tpu.memory_space<vmem>>, vector<1x288x4xbf16>
    %35 = vector.shape_cast %34 : vector<1x288x4xbf16> to vector<288x4xbf16>
    %c28 = arith.constant 28 : index
    %c0_31 = arith.constant 0 : index
    %36 = vector.load %arg2[%c28, %c0_31] : memref<36x128xbf16, #tpu.memory_space<vmem>>, vector<4x128xbf16>
    %cst_32 = arith.constant dense<0.000000e+00> : vector<288x128xf32>
    %37 = tpu.matmul %35, %36, %cst_32 {dimension_numbers = #tpu.dot_dimension_numbers<[1], [0], [0], [1], [0, 0, 1, 1], [], []>} : vector<288x4xbf16>, vector<4x128xbf16>, vector<288x128xf32> -> vector<288x128xf32>
    %38 = arith.addf %33, %37 : vector<288x128xf32>
    %c0_33 = arith.constant 0 : index
    %c38 = arith.constant 38 : index
    %c0_34 = arith.constant 0 : index
    %39 = vector.load %arg1[%c0_33, %c38, %c0_34] : memref<1x342x4xbf16, #tpu.memory_space<vmem>>, vector<1x288x4xbf16>
    %40 = vector.shape_cast %39 : vector<1x288x4xbf16> to vector<288x4xbf16>
    %c32 = arith.constant 32 : index
    %c0_35 = arith.constant 0 : index
    %41 = vector.load %arg2[%c32, %c0_35] : memref<36x128xbf16, #tpu.memory_space<vmem>>, vector<4x128xbf16>
    %cst_36 = arith.constant dense<0.000000e+00> : vector<288x128xf32>
    %42 = tpu.matmul %40, %41, %cst_36 {dimension_numbers = #tpu.dot_dimension_numbers<[1], [0], [0], [1], [0, 0, 1, 1], [], []>} : vector<288x4xbf16>, vector<4x128xbf16>, vector<288x128xf32> -> vector<288x128xf32>
    %43 = arith.addf %38, %42 : vector<288x128xf32>
    %c0_37 = arith.constant 0 : index
    %c0_38 = arith.constant 0 : index
    %44 = vector.load %arg3[%c0_37, %c0_38] : memref<1x128xf32, #tpu.memory_space<vmem>>, vector<1x128xf32>
    %45 = vector.broadcast %44 : vector<1x128xf32> to vector<288x128xf32>
    %46 = arith.addf %43, %45 : vector<288x128xf32>
    %cst_39 = arith.constant 0.000000e+00 : f32
    %47 = vector.broadcast %cst_39 : f32 to vector<288x128xf32>
    %48 = arith.maximumf %46, %47 : vector<288x128xf32>
    %c0_40 = arith.constant 0 : index
    %c0_41 = arith.constant 0 : index
    %49 = vector.load %arg6[%c0_40, %c0_41] : memref<1x288xf32, #tpu.memory_space<vmem>>, vector<1x288xf32>
    %cst_42 = arith.constant dense<0.000000e+00> : vector<1x128xf32>
    %50 = tpu.matmul %49, %48, %cst_42 {dimension_numbers = #tpu.dot_dimension_numbers<[1], [0], [0], [1], [0, 0, 1, 1], [], []>} : vector<1x288xf32>, vector<288x128xf32>, vector<1x128xf32> -> vector<1x128xf32>
    %c0_43 = arith.constant 0 : index
    %c0_44 = arith.constant 0 : index
    %51 = vector.load %arg4[%c0_43, %c0_44] : memref<128x128xf32, #tpu.memory_space<vmem>>, vector<128x128xf32>
    %cst_45 = arith.constant dense<0.000000e+00> : vector<1x128xf32>
    %52 = tpu.matmul %50, %51, %cst_45 {dimension_numbers = #tpu.dot_dimension_numbers<[1], [0], [0], [1], [0, 0, 1, 1], [], []>} : vector<1x128xf32>, vector<128x128xf32>, vector<1x128xf32> -> vector<1x128xf32>
    %c0_46 = arith.constant 0 : index
    %c0_47 = arith.constant 0 : index
    %53 = vector.load %arg5[%c0_46, %c0_47] : memref<1x128xf32, #tpu.memory_space<vmem>>, vector<1x128xf32>
    %54 = arith.addf %52, %53 : vector<1x128xf32>
    %55 = arith.negf %54 : vector<1x128xf32>
    %56 = math.exp %55 : vector<1x128xf32>
    %cst_48 = arith.constant 1.000000e+00 : f32
    %57 = vector.broadcast %cst_48 : f32 to vector<1x128xf32>
    %58 = arith.addf %57, %56 : vector<1x128xf32>
    %59 = arith.divf %57, %58 : vector<1x128xf32>
    %60 = vector.broadcast %59 : vector<1x128xf32> to vector<288x128xf32>
    %61 = arith.mulf %48, %60 : vector<288x128xf32>
    %62 = arith.truncf %61 : vector<288x128xf32> to vector<288x128xbf16>
    %c0_49 = arith.constant 0 : index
    %c0_50 = arith.constant 0 : index
    %c0_51 = arith.constant 0 : index
    %63 = vector.load %arg7[%c0_49, %c0_50, %c0_51] : memref<1x288x128xbf16, #tpu.memory_space<vmem>>, vector<1x288x128xbf16>
    %64 = vector.shape_cast %63 : vector<1x288x128xbf16> to vector<288x128xbf16>
    %65 = vector.shape_cast %62 : vector<288x128xbf16> to vector<1x288x128xbf16>
    tpu.vector_store %arg7[%c0_49, %c0_50, %c0_51], %65 {strides = array<i32>} : memref<1x288x128xbf16, #tpu.memory_space<vmem>>, vector<1x288x128xbf16>,
    return
  }
  func.func @transform_0(%arg0: i32) -> (i32, i32, i32) {
    %c0_i32 = arith.constant 0 : i32
    %c0_i32_0 = arith.constant 0 : i32
    %c0_i32_1 = arith.constant 0 : i32
    return %arg0, %c0_i32, %c0_i32_0 : i32, i32, i32
  }
  func.func @transform_1(%arg0: i32) -> (i32, i32) {
    %c0_i32 = arith.constant 0 : i32
    %c0_i32_0 = arith.constant 0 : i32
    %c0_i32_1 = arith.constant 0 : i32
    return %c0_i32, %c0_i32_0 : i32, i32
  }
  func.func @transform_2(%arg0: i32) -> (i32, i32) {
    %c0_i32 = arith.constant 0 : i32
    %c0_i32_0 = arith.constant 0 : i32
    %c0_i32_1 = arith.constant 0 : i32
    return %c0_i32, %c0_i32_0 : i32, i32
  }
  func.func @transform_3(%arg0: i32) -> (i32, i32) {
    %c0_i32 = arith.constant 0 : i32
    %c0_i32_0 = arith.constant 0 : i32
    %c0_i32_1 = arith.constant 0 : i32
    return %c0_i32, %c0_i32_0 : i32, i32
  }
  func.func @transform_4(%arg0: i32) -> (i32, i32) {
    %c0_i32 = arith.constant 0 : i32
    %c0_i32_0 = arith.constant 0 : i32
    %c0_i32_1 = arith.constant 0 : i32
    return %c0_i32, %c0_i32_0 : i32, i32
  }
  func.func @transform_5(%arg0: i32) -> (i32, i32) {
    %c0_i32 = arith.constant 0 : i32
    %c0_i32_0 = arith.constant 0 : i32
    %c0_i32_1 = arith.constant 0 : i32
    return %c0_i32, %c0_i32_0 : i32, i32
  }
  func.func @transform_6(%arg0: i32) -> (i32, i32, i32) {
    %c0_i32 = arith.constant 0 : i32
    %c0_i32_0 = arith.constant 0 : i32
    %c0_i32_1 = arith.constant 0 : i32
    return %arg0, %c0_i32, %c0_i32_0 : i32, i32, i32
  }
}

</mosaic_0001>

<llo_original>
// kernel: _arm_forward.1
$region0: #{_arm_forward.1}
  #allocation0 [shape = 'u32[]', space=smem, size = 0x4, offset = 0x4, fixed_abs, tag = 'smem constant byte address 0x4 - core index']
  #allocation1 [shape = 'u32[144,128]{1,0:T(1,128)}', space=vmem, size = 0x12000, scoped, tag = 'internal scratch']
  %s0 = inlined_call_operand.vmem [shape: bf16[2,342,4], index: 0, kind: input, shape index: {}]
  %s1 = inlined_call_operand.vmem [shape: bf16[36,128], index: 1, kind: input, shape index: {}]
  %s2 = inlined_call_operand.vmem [shape: f32[1,128], index: 2, kind: input, shape index: {}]
  %s3 = inlined_call_operand.vmem [shape: f32[128,128], index: 3, kind: input, shape index: {}]
  %s4 = inlined_call_operand.vmem [shape: f32[1,128], index: 4, kind: input, shape index: {}]
  %s5 = inlined_call_operand.vmem [shape: f32[1,288], index: 5, kind: input, shape index: {}]
  %s6 = inlined_call_operand.vmem [shape: bf16[2,288,128], index: 6, kind: output, shape index: {}]
  %s7 = sld [smem:[#allocation0]]
  $region57: #{_arm_forward.1} parent=0
    _
  %s9 = ssub.s32 1, %s7
  %s10 = scalar_select 0, %s9, %s7
  loop: start=0, step=1, limit=4
  $region2: #{_arm_forward.1} parent=0 // loop_pre_header
    _
  $region3: #{_arm_forward.1} parent=0 // loop_header
    %s12 = sphi 0, %s16
    %p13 = scmp.ge.s32.totalorder %s12, 4
    %s22 = sphi 0, %s24
    %s25 = sphi 0, %s22
    %s26 = sphi 0, %s25
    %s42 = sphi 0, %s26
    %s46 = sphi 0, %s46
    %s48 = sphi 0, %s46
    %s49 = sphi 0, %s48
    %s63 = sphi 0, %s49
    %s67 = sphi 0, %s67
    %s69 = sphi 0, %s67
    %s70 = sphi 0, %s69
    %s84 = sphi 0, %s70
    %s88 = sphi 0, %s88
    %s90 = sphi 0, %s88
    %s91 = sphi 0, %s90
    %s105 = sphi 0, %s91
    %s109 = sphi 0, %s109
    %s111 = sphi 0, %s109
    %s112 = sphi 0, %s111
    %s126 = sphi 0, %s112
    %s130 = sphi 0, %s130
    %s132 = sphi 0, %s130
    %s133 = sphi 0, %s132
    %s147 = sphi 0, %s133
    %s153 = sphi 0, %s155
    %s156 = sphi 0, %s153
    %s157 = sphi 0, %s156
    %s173 = sphi 0, %s157
  $region4: #{_arm_forward.1} parent=0 // loop_header_branch
    %15 = sbr.rel (%p13) target = $region8
  $region5: #{_arm_forward.1} parent=0 // loop_body
    %s17 = ssub.s32 %s12, 1
    %s18 = ssub.s32 %s12, 2
    %s19 = sadd.s32 %s12, 1
    %s20 = ssub.s32 %s12, %s19
    %p21 = scmp.eq.s32.totalorder %s20, 0
    %s23 = sadd.s32 %s22, 1
    %s24 = scalar_select %p21, %s22, %s23
    %p27 = pneg %p21
    %p28 = scmp.eq.s32.totalorder %s12, 1
    %p29 = por %p27, %p28
    %p30 = scmp.ne.s32.totalorder %s22, %s25
    %p31 = scmp.eq.s32.totalorder %s12, 0
    %p32 = por %p30, %p31
    %p33 = scmp.ne.s32.totalorder %s22, %s25
    %p34 = scmp.eq.s32.totalorder %s17, 1
    %p35 = por %p33, %p34
    %p36 = scmp.ne.s32.totalorder %s25, %s26
    %p37 = scmp.eq.s32.totalorder %s17, 0
    %p38 = por %p36, %p37
    %p39 = scmp.ne.s32.totalorder %s25, %s26
    %p40 = scmp.eq.s32.totalorder %s18, 1
    %p41 = por %p39, %p40
    %p43 = scmp.ne.s32.totalorder %s26, %s42
    %p44 = scmp.eq.s32.totalorder %s18, 0
    %p45 = por %p43, %p44
    %s47 = sadd.s32 %s46, 1
    %p50 = scmp.eq.s32.totalorder %s12, 1
    %p51 = scmp.ne.s32.totalorder %s46, %s48
    %p52 = scmp.eq.s32.totalorder %s12, 0
    %p53 = por %p51, %p52
    %p54 = scmp.ne.s32.totalorder %s46, %s48
    %p55 = scmp.eq.s32.totalorder %s17, 1
    %p56 = por %p54, %p55
    %p57 = scmp.ne.s32.totalorder %s48, %s49
    %p58 = scmp.eq.s32.totalorder %s17, 0
    %p59 = por %p57, %p58
    %p60 = scmp.ne.s32.totalorder %s48, %s49
    %p61 = scmp.eq.s32.totalorder %s18, 1
    %p62 = por %p60, %p61
    %p64 = scmp.ne.s32.totalorder %s49, %s63
    %p65 = scmp.eq.s32.totalorder %s18, 0
    %p66 = por %p64, %p65
    %s68 = sadd.s32 %s67, 1
    %p71 = scmp.eq.s32.totalorder %s12, 1
    %p72 = scmp.ne.s32.totalorder %s67, %s69
    %p73 = scmp.eq.s32.totalorder %s12, 0
    %p74 = por %p72, %p73
    %p75 = scmp.ne.s32.totalorder %s67, %s69
    %p76 = scmp.eq.s32.totalorder %s17, 1
    %p77 = por %p75, %p76
    %p78 = scmp.ne.s32.totalorder %s69, %s70
    %p79 = scmp.eq.s32.totalorder %s17, 0
    %p80 = por %p78, %p79
    %p81 = scmp.ne.s32.totalorder %s69, %s70
    %p82 = scmp.eq.s32.totalorder %s18, 1
    %p83 = por %p81, %p82
    %p85 = scmp.ne.s32.totalorder %s70, %s84
    %p86 = scmp.eq.s32.totalorder %s18, 0
    %p87 = por %p85, %p86
    %s89 = sadd.s32 %s88, 1
    %p92 = scmp.eq.s32.totalorder %s12, 1
    %p93 = scmp.ne.s32.totalorder %s88, %s90
    %p94 = scmp.eq.s32.totalorder %s12, 0
    %p95 = por %p93, %p94
    %p96 = scmp.ne.s32.totalorder %s88, %s90
    %p97 = scmp.eq.s32.totalorder %s17, 1
    %p98 = por %p96, %p97
    %p99 = scmp.ne.s32.totalorder %s90, %s91
    %p100 = scmp.eq.s32.totalorder %s17, 0
    %p101 = por %p99, %p100
    %p102 = scmp.ne.s32.totalorder %s90, %s91
    %p103 = scmp.eq.s32.totalorder %s18, 1
    %p104 = por %p102, %p103
    %p106 = scmp.ne.s32.totalorder %s91, %s105
    %p107 = scmp.eq.s32.totalorder %s18, 0
    %p108 = por %p106, %p107
    %s110 = sadd.s32 %s109, 1
    %p113 = scmp.eq.s32.totalorder %s12, 1
    %p114 = scmp.ne.s32.totalorder %s109, %s111
    %p115 = scmp.eq.s32.totalorder %s12, 0
    %p116 = por %p114, %p115
    %p117 = scmp.ne.s32.totalorder %s109, %s111
    %p118 = scmp.eq.s32.totalorder %s17, 1
    %p119 = por %p117, %p118
    %p120 = scmp.ne.s32.totalorder %s111, %s112
    %p121 = scmp.eq.s32.totalorder %s17, 0
    %p122 = por %p120, %p121
    %p123 = scmp.ne.s32.totalorder %s111, %s112
    %p124 = scmp.eq.s32.totalorder %s18, 1
    %p125 = por %p123, %p124
    %p127 = scmp.ne.s32.totalorder %s112, %s126
    %p128 = scmp.eq.s32.totalorder %s18, 0
    %p129 = por %p127, %p128
    %s131 = sadd.s32 %s130, 1
    %p134 = scmp.eq.s32.totalorder %s12, 1
    %p135 = scmp.ne.s32.totalorder %s130, %s132
    %p136 = scmp.eq.s32.totalorder %s12, 0
    %p137 = por %p135, %p136
    %p138 = scmp.ne.s32.totalorder %s130, %s132
    %p139 = scmp.eq.s32.totalorder %s17, 1
    %p140 = por %p138, %p139
    %p141 = scmp.ne.s32.totalorder %s132, %s133
    %p142 = scmp.eq.s32.totalorder %s17, 0
    %p143 = por %p141, %p142
    %p144 = scmp.ne.s32.totalorder %s132, %s133
    %p145 = scmp.eq.s32.totalorder %s18, 1
    %p146 = por %p144, %p145
    %p148 = scmp.ne.s32.totalorder %s133, %s147
    %p149 = scmp.eq.s32.totalorder %s18, 0
    %p150 = por %p148, %p149
    %s151 = ssub.s32 %s12, %s19
    %p152 = scmp.eq.s32.totalorder %s151, 0
    %s154 = sadd.s32 %s153, 1
    %s155 = scalar_select %p152, %s153, %s154
    %p158 = pneg %p152
    %p159 = scmp.eq.s32.totalorder %s12, 1
    %p160 = por %p158, %p159
    %p161 = scmp.ne.s32.totalorder %s153, %s156
    %p162 = scmp.eq.s32.totalorder %s12, 0
    %p163 = por %p161, %p162
    %p164 = scmp.ne.s32.totalorder %s153, %s156
    %p165 = scmp.eq.s32.totalorder %s17, 1
    %p166 = por %p164, %p165
    %p167 = scmp.ne.s32.totalorder %s156, %s157
    %p168 = scmp.eq.s32.totalorder %s17, 0
    %p169 = por %p167, %p168
    %p170 = scmp.ne.s32.totalorder %s156, %s157
    %p171 = scmp.eq.s32.totalorder %s18, 1
    %p172 = por %p170, %p171
    %p174 = scmp.ne.s32.totalorder %s157, %s173
    %p175 = scmp.eq.s32.totalorder %s18, 0
    %p176 = por %p174, %p175
    %p177 = scmp.le.s32.totalorder 1, %s12
    %p178 = scmp.lt.s32.totalorder %s12, 3
    %p179 = pnand %p177, %p178
    %p180 = pneg %p179
    // Predicated region
    $region9: #{_arm_forward.1} parent=5 // pred_check
      _
    $region10: #{_arm_forward.1} parent=5 // pred_check_branch
      %182 = sbr.rel (%p179) target = $region12
    $region11: #{_arm_forward.1} parent=5 // pred_region
      %s183 = ssub.s32 %s12, 1
      // Predicated region
      $region13: #{_arm_forward.1} parent=11 // pred_check
        %p184 = pneg %p59
      $region14: #{_arm_forward.1} parent=11 // pred_check_branch
        %186 = sbr.rel (%p184) target = $region16
      $region15: #{_arm_forward.1} parent=11 // pred_region
        _
      $region16: #{_arm_forward.1} parent=11 // pred_fallthru
        _
      // Predicated region
      $region17: #{_arm_forward.1} parent=11 // pred_check
        %p187 = pneg %p80
      $region18: #{_arm_forward.1} parent=11 // pred_check_branch
        %189 = sbr.rel (%p187) target = $region20
      $region19: #{_arm_forward.1} parent=11 // pred_region
        _
      $region20: #{_arm_forward.1} parent=11 // pred_fallthru
        _
      // Predicated region
      $region21: #{_arm_forward.1} parent=11 // pred_check
        %p190 = pneg %p101
      $region22: #{_arm_forward.1} parent=11 // pred_check_branch
        %192 = sbr.rel (%p190) target = $region24
      $region23: #{_arm_forward.1} parent=11 // pred_region
        _
      $region24: #{_arm_forward.1} parent=11 // pred_fallthru
        _
      // Predicated region
      $region25: #{_arm_forward.1} parent=11 // pred_check
        %p193 = pneg %p122
      $region26: #{_arm_forward.1} parent=11 // pred_check_branch
        %195 = sbr.rel (%p193) target = $region28
      $region27: #{_arm_forward.1} parent=11 // pred_region
        _
      $region28: #{_arm_forward.1} parent=11 // pred_fallthru
        _
      // Predicated region
      $region29: #{_arm_forward.1} parent=11 // pred_check
        %p196 = pneg %p143
      $region30: #{_arm_forward.1} parent=11 // pred_check_branch
        %198 = sbr.rel (%p196) target = $region32
      $region31: #{_arm_forward.1} parent=11 // pred_region
        _
      $region32: #{_arm_forward.1} parent=11 // pred_fallthru
        _
    $region12: #{_arm_forward.1} parent=5 // pred_fallthru
      _
    %p199 = scmp.lt.s32.totalorder %s12, 2
    // Predicated region
    $region33: #{_arm_forward.1} parent=5 // pred_check
      %p200 = pneg %p199
    $region34: #{_arm_forward.1} parent=5 // pred_check_branch
      %202 = sbr.rel (%p200) target = $region36
    $region35: #{_arm_forward.1} parent=5 // pred_region
      // Predicated region
      $region37: #{_arm_forward.1} parent=35 // pred_check
        %p203 = pneg %p32
      $region38: #{_arm_forward.1} parent=35 // pred_check_branch
        %205 = sbr.rel (%p203) target = $region40
      $region39: #{_arm_forward.1} parent=35 // pred_region
        %p206 = scmp.lt.s32.totalorder %s12, 1
        %s207 = scalar_select %p206, %s12, 1
        %s208 = smul.addr %s207, 43
        %s209 = smul.addr %s208, 4
        %s210 = scalar_lea.vmem %s0, %s209
      $region40: #{_arm_forward.1} parent=35 // pred_fallthru
        _
    $region36: #{_arm_forward.1} parent=5 // pred_fallthru
      _
    %p211 = scmp.le.s32.totalorder 1, %s12
    %p212 = scmp.lt.s32.totalorder %s12, 3
    %p213 = pnand %p211, %p212
    %p214 = pneg %p213
    // Predicated region
    $region41: #{_arm_forward.1} parent=5 // pred_check
      _
    $region42: #{_arm_forward.1} parent=5 // pred_check_branch
      %216 = sbr.rel (%p213) target = $region44
    $region43: #{_arm_forward.1} parent=5 // pred_region
      %s217 = ssub.s32 %s12, 1
      %p218 = scmp.lt.s32.totalorder %s17, 1
      %s219 = scalar_select %p218, %s17, 1
      %s220 = smul.addr %s219, 43
      %s221 = smul.addr %s220, 4
      %s222 = scalar_lea.vmem %s0, %s221
      %p223 = pneg %p38
      %p224 = pneg %p35
      %p225 = pneg %p59
      %p226 = pneg %p56
      %p227 = pneg %p80
      %p228 = pneg %p77
      %p229 = pneg %p101
      %p230 = pneg %p98
      %p231 = pneg %p122
      %p232 = pneg %p119
      %p233 = pneg %p143
      %p234 = pneg %p140
      %p235 = pneg %p169
      %p236 = pneg %p166
      %p237 = scmp.lt.s32.totalorder %s17, 1
      %s238 = scalar_select %p237, %s17, 1
      %s239 = smul.addr %s238, 36
      %s240 = smul.addr %s239, 4
      %s241 = scalar_lea.vmem %s6, %s240
      %p242 = scmp.lt.s32.totalorder %s17, 1
      %s243 = scalar_select %p242, %s17, 1
      %s244 = smul.addr %s243, 43
      %s245 = smul.addr %s244, 4
      %s246 = scalar_lea.vmem %s0, %s245
      %p247 = scmp.lt.s32.totalorder %s17, 1
      %s248 = scalar_select %p247, %s17, 1
      %s249 = smul.addr %s248, 36
      %s250 = smul.addr %s249, 4
      %s251 = scalar_lea.vmem %s6, %s250
      %v253 = vld [vmem:[%s246] sm:$0xf]
      %v254 = vld [vmem:[%s246 + $0x4] sm:$0xf]
      %v255 = vld [vmem:[%s246 + $0x8] sm:$0xf]
      %v256 = vld [vmem:[%s246 + $0xc] sm:$0xf]
      %v257 = vld [vmem:[%s246 + $0x10] sm:$0xf]
      %v258 = vld [vmem:[%s246 + $0x14] sm:$0xf]
      %v259 = vld [vmem:[%s246 + $0x18] sm:$0xf]
      %v260 = vld [vmem:[%s246 + $0x1c] sm:$0xf]
      %v261 = vld [vmem:[%s246 + $0x20] sm:$0xf]
      %v262 = vld [vmem:[%s246 + $0x24] sm:$0xf]
      %v263 = vld [vmem:[%s246 + $0x28] sm:$0xf]
      %v264 = vld [vmem:[%s246 + $0x2c] sm:$0xf]
      %v265 = vld [vmem:[%s246 + $0x30] sm:$0xf]
      %v266 = vld [vmem:[%s246 + $0x34] sm:$0xf]
      %v267 = vld [vmem:[%s246 + $0x38] sm:$0xf]
      %v268 = vld [vmem:[%s246 + $0x3c] sm:$0xf]
      %v269 = vld [vmem:[%s246 + $0x40] sm:$0xf]
      %v270 = vld [vmem:[%s246 + $0x44] sm:$0xf]
      %v271 = vld [vmem:[%s246 + $0x48] sm:$0xf]
      %v272 = vld [vmem:[%s246 + $0x4c] sm:$0xf]
      %v273 = vld [vmem:[%s246 + $0x50] sm:$0xf]
      %v274 = vld [vmem:[%s246 + $0x54] sm:$0xf]
      %v275 = vld [vmem:[%s246 + $0x58] sm:$0xf]
      %v276 = vld [vmem:[%s246 + $0x5c] sm:$0xf]
      %v277 = vld [vmem:[%s246 + $0x60] sm:$0xf]
      %v278 = vld [vmem:[%s246 + $0x64] sm:$0xf]
      %v279 = vld [vmem:[%s246 + $0x68] sm:$0xf]
      %v280 = vld [vmem:[%s246 + $0x6c] sm:$0xf]
      %v281 = vld [vmem:[%s246 + $0x70] sm:$0xf]
      %v282 = vld [vmem:[%s246 + $0x74] sm:$0xf]
      %v283 = vld [vmem:[%s246 + $0x78] sm:$0xf]
      %v284 = vld [vmem:[%s246 + $0x7c] sm:$0xf]
      %v285 = vld [vmem:[%s246 + $0x80] sm:$0xf]
      %v286 = vld [vmem:[%s246 + $0x84] sm:$0xf]
      %v287 = vld [vmem:[%s246 + $0x88] sm:$0xf]
      %v288 = vld [vmem:[%s246 + $0x8c] sm:$0xf]
      %v289 = vld [vmem:[%s1] sm:$0x3]
      %v290 = vld [vmem:[%s246 + $0x90] sm:$0x1]
      %v291 = vld [vmem:[%s1] sm:$0xc]
      %v329 = vunpack.c.l.b16 %v253
      %v330 = vunpack.c.l.b16 %v254
      %v331 = vunpack.c.l.b16 %v255
      %v332 = vunpack.c.l.b16 %v256
      %v333 = vunpack.c.l.b16 %v257
      %v334 = vunpack.c.l.b16 %v258
      %v335 = vunpack.c.l.b16 %v259
      %v336 = vunpack.c.l.b16 %v260
      %v337 = vunpack.c.l.b16 %v261
      %v338 = vunpack.c.l.b16 %v262
      %v339 = vunpack.c.l.b16 %v263
      %v340 = vunpack.c.l.b16 %v264
      %v341 = vunpack.c.l.b16 %v265
      %v342 = vunpack.c.l.b16 %v266
      %v343 = vunpack.c.l.b16 %v267
      %v344 = vunpack.c.l.b16 %v268
      %v345 = vunpack.c.l.b16 %v269
      %v346 = vunpack.c.l.b16 %v270
      %v347 = vunpack.c.l.b16 %v271
      %v348 = vunpack.c.l.b16 %v272
      %v349 = vunpack.c.l.b16 %v273
      %v350 = vunpack.c.l.b16 %v274
      %v351 = vunpack.c.l.b16 %v275
      %v352 = vunpack.c.l.b16 %v276
      %v353 = vunpack.c.l.b16 %v277
      %v354 = vunpack.c.l.b16 %v278
      %v355 = vunpack.c.l.b16 %v279
      %v356 = vunpack.c.l.b16 %v280
      %v357 = vunpack.c.l.b16 %v281
      %v358 = vunpack.c.l.b16 %v282
      %v359 = vunpack.c.l.b16 %v283
      %v360 = vunpack.c.l.b16 %v284
      %v361 = vunpack.c.l.b16 %v285
      %v362 = vunpack.c.l.b16 %v286
      %v363 = vunpack.c.l.b16 %v287
      %v364 = vunpack.c.l.b16 %v288
      %v365 = vunpack.c.l.b16 %v290
      %v366 = vpack.c.b16 %v330, %v329
      %v367 = vpack.c.b16 %v332, %v331
      %v368 = vpack.c.b16 %v334, %v333
      %v369 = vpack.c.b16 %v336, %v335
      %v370 = vpack.c.b16 %v338, %v337
      %v371 = vpack.c.b16 %v340, %v339
      %v372 = vpack.c.b16 %v342, %v341
      %v373 = vpack.c.b16 %v344, %v343
      %v374 = vpack.c.b16 %v346, %v345
      %v375 = vpack.c.b16 %v348, %v347
      %v376 = vpack.c.b16 %v350, %v349
      %v377 = vpack.c.b16 %v352, %v351
      %v378 = vpack.c.b16 %v354, %v353
      %v379 = vpack.c.b16 %v356, %v355
      %v380 = vpack.c.b16 %v358, %v357
      %v381 = vpack.c.b16 %v360, %v359
      %v382 = vpack.c.b16 %v362, %v361
      %v383 = vpack.c.b16 %v364, %v363
      %v384 = vpack.c.b16 %v365, %v365
      %vm385 = vsmask.f32 7424
      %v387 = vshrl.u32 %v366, 16
      %v389 = vshll.u32 %v366, 16
      %v391 = vrot.slane %v389, 1
      %v392 = vor.u32 %v387, %v391
      %v394 = vshll.u32 %v367, 16
      %v396 = vrot.slane %v394, 1
      %v397 = vsel %vm385, %v392, %v396
      %v398 = vshrl.u32 %v367, 16
      %v400 = vor.u32 %v398, %v396
      %v402 = vshll.u32 %v368, 16
      %v404 = vrot.slane %v402, 1
      %v405 = vsel %vm385, %v400, %v404
      %v406 = vshrl.u32 %v368, 16
      %v408 = vor.u32 %v406, %v404
      %v410 = vshll.u32 %v369, 16
      %v412 = vrot.slane %v410, 1
      %v413 = vsel %vm385, %v408, %v412
      %v414 = vshrl.u32 %v369, 16
      %v416 = vor.u32 %v414, %v412
      %v418 = vshll.u32 %v370, 16
      %v420 = vrot.slane %v418, 1
      %v421 = vsel %vm385, %v416, %v420
      %v422 = vshrl.u32 %v370, 16
      %v424 = vor.u32 %v422, %v420
      %v426 = vshll.u32 %v371, 16
      %v428 = vrot.slane %v426, 1
      %v429 = vsel %vm385, %v424, %v428
      %v430 = vshrl.u32 %v371, 16
      %v432 = vor.u32 %v430, %v428
      %v434 = vshll.u32 %v372, 16
      %v436 = vrot.slane %v434, 1
      %v437 = vsel %vm385, %v432, %v436
      %v438 = vshrl.u32 %v372, 16
      %v440 = vor.u32 %v438, %v436
      %v442 = vshll.u32 %v373, 16
      %v444 = vrot.slane %v442, 1
      %v445 = vsel %vm385, %v440, %v444
      %v446 = vshrl.u32 %v373, 16
      %v448 = vor.u32 %v446, %v444
      %v450 = vshll.u32 %v374, 16
      %v452 = vrot.slane %v450, 1
      %v453 = vsel %vm385, %v448, %v452
      %v454 = vshrl.u32 %v374, 16
      %v456 = vor.u32 %v454, %v452
      %v458 = vshll.u32 %v375, 16
      %v460 = vrot.slane %v458, 1
      %v461 = vsel %vm385, %v456, %v460
      %v462 = vshrl.u32 %v375, 16
      %v464 = vor.u32 %v462, %v460
      %v466 = vshll.u32 %v376, 16
      %v468 = vrot.slane %v466, 1
      %v469 = vsel %vm385, %v464, %v468
      %v470 = vshrl.u32 %v376, 16
      %v472 = vor.u32 %v470, %v468
      %v474 = vshll.u32 %v377, 16
      %v476 = vrot.slane %v474, 1
      %v477 = vsel %vm385, %v472, %v476
      %v478 = vshrl.u32 %v377, 16
      %v480 = vor.u32 %v478, %v476
      %v482 = vshll.u32 %v378, 16
      %v484 = vrot.slane %v482, 1
      %v485 = vsel %vm385, %v480, %v484
      %v486 = vshrl.u32 %v378, 16
      %v488 = vor.u32 %v486, %v484
      %v490 = vshll.u32 %v379, 16
      %v492 = vrot.slane %v490, 1
      %v493 = vsel %vm385, %v488, %v492
      %v494 = vshrl.u32 %v379, 16
      %v496 = vor.u32 %v494, %v492
      %v498 = vshll.u32 %v380, 16
      %v500 = vrot.slane %v498, 1
      %v501 = vsel %vm385, %v496, %v500
      %v502 = vshrl.u32 %v380, 16
      %v504 = vor.u32 %v502, %v500
      %v506 = vshll.u32 %v381, 16
      %v508 = vrot.slane %v506, 1
      %v509 = vsel %vm385, %v504, %v508
      %v510 = vshrl.u32 %v381, 16
      %v512 = vor.u32 %v510, %v508
      %v514 = vshll.u32 %v382, 16
      %v516 = vrot.slane %v514, 1
      %v517 = vsel %vm385, %v512, %v516
      %v518 = vshrl.u32 %v382, 16
      %v520 = vor.u32 %v518, %v516
      %v522 = vshll.u32 %v383, 16
      %v524 = vrot.slane %v522, 1
      %v525 = vsel %vm385, %v520, %v524
      %v526 = vshrl.u32 %v383, 16
      %v528 = vor.u32 %v526, %v524
      %v530 = vshll.u32 %v384, 16
      %v532 = vrot.slane %v530, 1
      %v533 = vsel %vm385, %v528, %v532
      %v535 = vunpack.c.l.b16 %v291
      %v536 = vpack.c.b16 %v535, %v535
      %v537 = vrot.slane %v536, 2
      %vm538 = vcmask 31744
      %v540 = vsel %vm538, %v397, 0
      %v543 = vsel %vm538, %v405, 0
      %v546 = vsel %vm538, %v413, 0
      %v549 = vsel %vm538, %v421, 0
      %v552 = vsel %vm538, %v429, 0
      %v555 = vsel %vm538, %v437, 0
      %v558 = vsel %vm538, %v445, 0
      %v561 = vsel %vm538, %v453, 0
      %v564 = vsel %vm538, %v461, 0
      %v567 = vsel %vm538, %v469, 0
      %v570 = vsel %vm538, %v477, 0
      %v573 = vsel %vm538, %v485, 0
      %v576 = vsel %vm538, %v493, 0
      %v579 = vsel %vm538, %v501, 0
      %v582 = vsel %vm538, %v509, 0
      %v585 = vsel %vm538, %v517, 0
      %v588 = vsel %vm538, %v525, 0
      %v591 = vsel %vm538, %v533, 0
      %vm593 = vcmask 1041408
      %v595 = vsel %vm593, %v537, 0
      %597 = vmatprep.subr.bf16.mxu0 0
      %598 = vmatpush1.bf16.msra.mxu0 %v595
      %599 = vmatprep.subr.bf16.mxu0 0
      %600 = vmatpush1.bf16.msra.mxu0 0
      %601 = vmatprep.subr.bf16.mxu0 0
      %602 = vmatpush1.bf16.msra.mxu0 0
      %603 = vmatprep.subr.bf16.mxu0 0
      %604 = vmatpush1.bf16.msra.mxu0 0
      %605 = vmatprep.subr.bf16.mxu0 0
      %606 = vmatpush1.bf16.msra.mxu0 0
      %607 = vmatprep.subr.bf16.mxu0 0
      %608 = vmatpush1.bf16.msra.mxu0 0
      %609 = vmatprep.subr.bf16.mxu0 0
      %610 = vmatpush1.bf16.msra.mxu0 0
      %611 = vmatprep.subr.bf16.mxu0 0
      %612 = vmatpush1.bf16.msra.mxu0 0
      %613 = vmatprep.subr.bf16.mxu0 0
      %614 = vmatpush1.bf16.msra.mxu0 0
      %615 = vmatprep.subr.bf16.mxu0 0
      %616 = vmatpush1.bf16.msra.mxu0 0
      %617 = vmatprep.subr.bf16.mxu0 0
      %618 = vmatpush1.bf16.msra.mxu0 0
      %619 = vmatprep.subr.bf16.mxu0 0
      %620 = vmatpush1.bf16.msra.mxu0 0
      %621 = vmatprep.subr.bf16.mxu0 0
      %622 = vmatpush1.bf16.msra.mxu0 0
      %623 = vmatprep.subr.bf16.mxu0 0
      %624 = vmatpush1.bf16.msra.mxu0 0
      %625 = vmatprep.subr.bf16.mxu0 0
      %626 = vmatpush1.bf16.msra.mxu0 0
      %627 = vmatprep.subr.bf16.mxu0 0
      %628 = vmatpush1.bf16.msra.mxu0 0
      %629 = vmatprep.mubr.bf16.mxu0 0
      %630 = vmatmul.mubr.bf16.gmra.mrb[0].mxu0 %v540
      %v631 = vpop.f32.mrb[0].mxu0
      %v632 = vadd.f32 0.0, %v631
      %v633 = vpop.f32.mrb[0].mxu0
      %v634 = vpop.f32.mrb[0].mxu0
      %v635 = vadd.f32 0.0, %v634
      %v636 = vpop.f32.mrb[0].mxu0
      %637 = vmatprep.mubr.bf16.mxu0 0
      %638 = vmatmul.mubr.bf16.gmra.mrb[0].mxu0 %v543
      %v639 = vpop.f32.mrb[0].mxu0
      %v640 = vadd.f32 0.0, %v639
      %v641 = vpop.f32.mrb[0].mxu0
      %v642 = vpop.f32.mrb[0].mxu0
      %v643 = vadd.f32 0.0, %v642
      %v644 = vpop.f32.mrb[0].mxu0
      %645 = vmatprep.mubr.bf16.mxu0 0
      %646 = vmatmul.mubr.bf16.gmra.mrb[0].mxu0 %v546
      %v647 = vpop.f32.mrb[0].mxu0
      %v648 = vadd.f32 0.0, %v647
      %v649 = vpop.f32.mrb[0].mxu0
      %v650 = vpop.f32.mrb[0].mxu0
      %v651 = vadd.f32 0.0, %v650
      %v652 = vpop.f32.mrb[0].mxu0
      %653 = vmatprep.mubr.bf16.mxu0 0
      %654 = vmatmul.mubr.bf16.gmra.mrb[0].mxu0 %v549
      %v655 = vpop.f32.mrb[0].mxu0
      %v656 = vadd.f32 0.0, %v655
      %v657 = vpop.f32.mrb[0].mxu0
      %v658 = vpop.f32.mrb[0].mxu0
      %v659 = vadd.f32 0.0, %v658
      %v660 = vpop.f32.mrb[0].mxu0
      %661 = vmatprep.mubr.bf16.mxu0 0
      %662 = vmatmul.mubr.bf16.gmra.mrb[0].mxu0 %v552
      %v663 = vpop.f32.mrb[0].mxu0
      %v664 = vadd.f32 0.0, %v663
      %v665 = vpop.f32.mrb[0].mxu0
      %v666 = vpop.f32.mrb[0].mxu0
      %v667 = vadd.f32 0.0, %v666
      %v668 = vpop.f32.mrb[0].mxu0
      %669 = vmatprep.mubr.bf16.mxu0 0
      %670 = vmatmul.mubr.bf16.gmra.mrb[0].mxu0 %v555
      %v671 = vpop.f32.mrb[0].mxu0
      %v672 = vadd.f32 0.0, %v671
      %v673 = vpop.f32.mrb[0].mxu0
      %v674 = vpop.f32.mrb[0].mxu0
      %v675 = vadd.f32 0.0, %v674
      %v676 = vpop.f32.mrb[0].mxu0
      %677 = vmatprep.mubr.bf16.mxu0 0
      %678 = vmatmul.mubr.bf16.gmra.mrb[0].mxu0 %v558
      %v679 = vpop.f32.mrb[0].mxu0
      %v680 = vadd.f32 0.0, %v679
      %v681 = vpop.f32.mrb[0].mxu0
      %v682 = vpop.f32.mrb[0].mxu0
      %v683 = vadd.f32 0.0, %v682
      %v684 = vpop.f32.mrb[0].mxu0
      %685 = vmatprep.mubr.bf16.mxu0 0
      %686 = vmatmul.mubr.bf16.gmra.mrb[0].mxu0 %v561
      %v687 = vpop.f32.mrb[0].mxu0
      %v688 = vadd.f32 0.0, %v687
      %v689 = vpop.f32.mrb[0].mxu0
      %v690 = vpop.f32.mrb[0].mxu0
      %v691 = vadd.f32 0.0, %v690
      %v692 = vpop.f32.mrb[0].mxu0
      %693 = vmatprep.mubr.bf16.mxu0 0
      %694 = vmatmul.mubr.bf16.gmra.mrb[0].mxu0 %v564
      %v695 = vpop.f32.mrb[0].mxu0
      %v696 = vadd.f32 0.0, %v695
      %v697 = vpop.f32.mrb[0].mxu0
      %v698 = vpop.f32.mrb[0].mxu0
      %v699 = vadd.f32 0.0, %v698
      %v700 = vpop.f32.mrb[0].mxu0
      %701 = vmatprep.mubr.bf16.mxu0 0
      %702 = vmatmul.mubr.bf16.gmra.mrb[0].mxu0 %v567
      %v703 = vpop.f32.mrb[0].mxu0
      %v704 = vadd.f32 0.0, %v703
      %v705 = vpop.f32.mrb[0].mxu0
      %v706 = vpop.f32.mrb[0].mxu0
      %v707 = vadd.f32 0.0, %v706
      %v708 = vpop.f32.mrb[0].mxu0
      %709 = vmatprep.mubr.bf16.mxu0 0
      %710 = vmatmul.mubr.bf16.gmra.mrb[0].mxu0 %v570
      %v711 = vpop.f32.mrb[0].mxu0
      %v712 = vadd.f32 0.0, %v711
      %v713 = vpop.f32.mrb[0].mxu0
      %v714 = vpop.f32.mrb[0].mxu0
      %v715 = vadd.f32 0.0, %v714
      %v716 = vpop.f32.mrb[0].mxu0
      %717 = vmatprep.mubr.bf16.mxu0 0
      %718 = vmatmul.mubr.bf16.gmra.mrb[0].mxu0 %v573
      %v719 = vpop.f32.mrb[0].mxu0
      %v720 = vadd.f32 0.0, %v719
      %v721 = vpop.f32.mrb[0].mxu0
      %v722 = vpop.f32.mrb[0].mxu0
      %v723 = vadd.f32 0.0, %v722
      %v724 = vpop.f32.mrb[0].mxu0
      %725 = vmatprep.mubr.bf16.mxu0 0
      %726 = vmatmul.mubr.bf16.gmra.mrb[0].mxu0 %v576
      %v727 = vpop.f32.mrb[0].mxu0
      %v728 = vadd.f32 0.0, %v727
      %v729 = vpop.f32.mrb[0].mxu0
      %v730 = vpop.f32.mrb[0].mxu0
      %v731 = vadd.f32 0.0, %v730
      %v732 = vpop.f32.mrb[0].mxu0
      %733 = vmatprep.mubr.bf16.mxu0 0
      %734 = vmatmul.mubr.bf16.gmra.mrb[0].mxu0 %v579
      %v735 = vpop.f32.mrb[0].mxu0
      %v736 = vadd.f32 0.0, %v735
      %v737 = vpop.f32.mrb[0].mxu0
      %v738 = vpop.f32.mrb[0].mxu0
      %v739 = vadd.f32 0.0, %v738
      %v740 = vpop.f32.mrb[0].mxu0
      %741 = vmatprep.mubr.bf16.mxu0 0
      %742 = vmatmul.mubr.bf16.gmra.mrb[0].mxu0 %v582
      %v743 = vpop.f32.mrb[0].mxu0
      %v744 = vadd.f32 0.0, %v743
      %v745 = vpop.f32.mrb[0].mxu0
      %v746 = vpop.f32.mrb[0].mxu0
      %v747 = vadd.f32 0.0, %v746
      %v748 = vpop.f32.mrb[0].mxu0
      %749 = vmatprep.mubr.bf16.mxu0 0
      %750 = vmatmul.mubr.bf16.gmra.mrb[0].mxu0 %v585
      %v751 = vpop.f32.mrb[0].mxu0
      %v752 = vadd.f32 0.0, %v751
      %v753 = vpop.f32.mrb[0].mxu0
      %v754 = vpop.f32.mrb[0].mxu0
      %v755 = vadd.f32 0.0, %v754
      %v756 = vpop.f32.mrb[0].mxu0
      %757 = vmatprep.mubr.bf16.mxu0 0
      %758 = vmatmul.mubr.bf16.gmra.mrb[0].mxu0 %v588
      %v759 = vpop.f32.mrb[0].mxu0
      %v760 = vadd.f32 0.0, %v759
      %v761 = vpop.f32.mrb[0].mxu0
      %v762 = vpop.f32.mrb[0].mxu0
      %v763 = vadd.f32 0.0, %v762
      %v764 = vpop.f32.mrb[0].mxu0
      %765 = vmatprep.mubr.bf16.mxu0 0
      %766 = vmatmul.mubr.bf16.gmra.mrb[0].mxu0 %v591
      %v767 = vpop.f32.mrb[0].mxu0
      %v768 = vadd.f32 0.0, %v767
      %v769 = vpop.f32.mrb[0].mxu0
      %v770 = vpop.f32.mrb[0].mxu0
      %v771 = vadd.f32 0.0, %v770
      %v772 = vpop.f32.mrb[0].mxu0
      %773 = vdwg.mxu0
      %v774 = vsel %vm538, %v366, 0
      %v776 = vsel %vm538, %v367, 0
      %v778 = vsel %vm538, %v368, 0
      %v780 = vsel %vm538, %v369, 0
      %v782 = vsel %vm538, %v370, 0
      %v784 = vsel %vm538, %v371, 0
      %v786 = vsel %vm538, %v372, 0
      %v788 = vsel %vm538, %v373, 0
      %v790 = vsel %vm538, %v374, 0
      %v792 = vsel %vm538, %v375, 0
      %v794 = vsel %vm538, %v376, 0
      %v796 = vsel %vm538, %v377, 0
      %v798 = vsel %vm538, %v378, 0
      %v800 = vsel %vm538, %v379, 0
      %v802 = vsel %vm538, %v380, 0
      %v804 = vsel %vm538, %v381, 0
      %v806 = vsel %vm538, %v382, 0
      %v808 = vsel %vm538, %v383, 0
      %v811 = vsel %vm593, %v289, 0
      %813 = vmatprep.subr.bf16.mxu0 0
      %814 = vmatpush1.bf16.msra.mxu0 %v811
      %815 = vmatprep.subr.bf16.mxu0 0
      %816 = vmatpush1.bf16.msra.mxu0 0
      %817 = vmatprep.subr.bf16.mxu0 0
      %818 = vmatpush1.bf16.msra.mxu0 0
      %819 = vmatprep.subr.bf16.mxu0 0
      %820 = vmatpush1.bf16.msra.mxu0 0
      %821 = vmatprep.subr.bf16.mxu0 0
      %822 = vmatpush1.bf16.msra.mxu0 0
      %823 = vmatprep.subr.bf16.mxu0 0
      %824 = vmatpush1.bf16.msra.mxu0 0
      %825 = vmatprep.subr.bf16.mxu0 0
      %826 = vmatpush1.bf16.msra.mxu0 0
      %827 = vmatprep.subr.bf16.mxu0 0
      %828 = vmatpush1.bf16.msra.mxu0 0
      %829 = vmatprep.subr.bf16.mxu0 0
      %830 = vmatpush1.bf16.msra.mxu0 0
      %831 = vmatprep.subr.bf16.mxu0 0
      %832 = vmatpush1.bf16.msra.mxu0 0
      %833 = vmatprep.subr.bf16.mxu0 0
      %834 = vmatpush1.bf16.msra.mxu0 0
      %835 = vmatprep.subr.bf16.mxu0 0
      %836 = vmatpush1.bf16.msra.mxu0 0
      %837 = vmatprep.subr.bf16.mxu0 0
      %838 = vmatpush1.bf16.msra.mxu0 0
      %839 = vmatprep.subr.bf16.mxu0 0
      %840 = vmatpush1.bf16.msra.mxu0 0
      %841 = vmatprep.subr.bf16.mxu0 0
      %842 = vmatpush1.bf16.msra.mxu0 0
      %843 = vmatprep.subr.bf16.mxu0 0
      %844 = vmatpush1.bf16.msra.mxu0 0
      %845 = vmatprep.mubr.bf16.mxu0 0
      %846 = vmatmul.mubr.bf16.gmra.mrb[0].mxu0 %v774
      %v847 = vpop.f32.mrb[0].mxu0
      %v848 = vadd.f32 %v632, %v847
      %v849 = vpop.f32.mrb[0].mxu0
      %v850 = vpop.f32.mrb[0].mxu0
      %v851 = vadd.f32 %v635, %v850
      %v852 = vpop.f32.mrb[0].mxu0
      %853 = vmatprep.mubr.bf16.mxu0 0
      %854 = vmatmul.mubr.bf16.gmra.mrb[0].mxu0 %v776
      %v855 = vpop.f32.mrb[0].mxu0
      %v856 = vadd.f32 %v640, %v855
      %v857 = vpop.f32.mrb[0].mxu0
      %v858 = vpop.f32.mrb[0].mxu0
      %v859 = vadd.f32 %v643, %v858
      %v860 = vpop.f32.mrb[0].mxu0
      %861 = vmatprep.mubr.bf16.mxu0 0
      %862 = vmatmul.mubr.bf16.gmra.mrb[0].mxu0 %v778
      %v863 = vpop.f32.mrb[0].mxu0
      %v864 = vadd.f32 %v648, %v863
      %v865 = vpop.f32.mrb[0].mxu0
      %v866 = vpop.f32.mrb[0].mxu0
      %v867 = vadd.f32 %v651, %v866
      %v868 = vpop.f32.mrb[0].mxu0
      %869 = vmatprep.mubr.bf16.mxu0 0
      %870 = vmatmul.mubr.bf16.gmra.mrb[0].mxu0 %v780
      %v871 = vpop.f32.mrb[0].mxu0
      %v872 = vadd.f32 %v656, %v871
      %v873 = vpop.f32.mrb[0].mxu0
      %v874 = vpop.f32.mrb[0].mxu0
      %v875 = vadd.f32 %v659, %v874
      %v876 = vpop.f32.mrb[0].mxu0
      %877 = vmatprep.mubr.bf16.mxu0 0
      %878 = vmatmul.mubr.bf16.gmra.mrb[0].mxu0 %v782
      %v879 = vpop.f32.mrb[0].mxu0
      %v880 = vadd.f32 %v664, %v879
      %v881 = vpop.f32.mrb[0].mxu0
      %v882 = vpop.f32.mrb[0].mxu0
      %v883 = vadd.f32 %v667, %v882
      %v884 = vpop.f32.mrb[0].mxu0
      %885 = vmatprep.mubr.bf16.mxu0 0
      %886 = vmatmul.mubr.bf16.gmra.mrb[0].mxu0 %v784
      %v887 = vpop.f32.mrb[0].mxu0
      %v888 = vadd.f32 %v672, %v887
      %v889 = vpop.f32.mrb[0].mxu0
      %v890 = vpop.f32.mrb[0].mxu0
      %v891 = vadd.f32 %v675, %v890
      %v892 = vpop.f32.mrb[0].mxu0
      %893 = vmatprep.mubr.bf16.mxu0 0
      %894 = vmatmul.mubr.bf16.gmra.mrb[0].mxu0 %v786
      %v895 = vpop.f32.mrb[0].mxu0
      %v896 = vadd.f32 %v680, %v895
      %v897 = vpop.f32.mrb[0].mxu0
      %v898 = vpop.f32.mrb[0].mxu0
      %v899 = vadd.f32 %v683, %v898
      %v900 = vpop.f32.mrb[0].mxu0
      %901 = vmatprep.mubr.bf16.mxu0 0
      %902 = vmatmul.mubr.bf16.gmra.mrb[0].mxu0 %v788
      %v903 = vpop.f32.mrb[0].mxu0
      %v904 = vadd.f32 %v688, %v903
      %v905 = vpop.f32.mrb[0].mxu0
      %v906 = vpop.f32.mrb[0].mxu0
      %v907 = vadd.f32 %v691, %v906
      %v908 = vpop.f32.mrb[0].mxu0
      %909 = vmatprep.mubr.bf16.mxu0 0
      %910 = vmatmul.mubr.bf16.gmra.mrb[0].mxu0 %v790
      %v911 = vpop.f32.mrb[0].mxu0
      %v912 = vadd.f32 %v696, %v911
      %v913 = vpop.f32.mrb[0].mxu0
      %v914 = vpop.f32.mrb[0].mxu0
      %v915 = vadd.f32 %v699, %v914
      %v916 = vpop.f32.mrb[0].mxu0
      %917 = vmatprep.mubr.bf16.mxu0 0
      %918 = vmatmul.mubr.bf16.gmra.mrb[0].mxu0 %v792
      %v919 = vpop.f32.mrb[0].mxu0
      %v920 = vadd.f32 %v704, %v919
      %v921 = vpop.f32.mrb[0].mxu0
      %v922 = vpop.f32.mrb[0].mxu0
      %v923 = vadd.f32 %v707, %v922
      %v924 = vpop.f32.mrb[0].mxu0
      %925 = vmatprep.mubr.bf16.mxu0 0
      %926 = vmatmul.mubr.bf16.gmra.mrb[0].mxu0 %v794
      %v927 = vpop.f32.mrb[0].mxu0
      %v928 = vadd.f32 %v712, %v927
      %v929 = vpop.f32.mrb[0].mxu0
      %v930 = vpop.f32.mrb[0].mxu0
      %v931 = vadd.f32 %v715, %v930
      %v932 = vpop.f32.mrb[0].mxu0
      %933 = vmatprep.mubr.bf16.mxu0 0
      %934 = vmatmul.mubr.bf16.gmra.mrb[0].mxu0 %v796
      %v935 = vpop.f32.mrb[0].mxu0
      %v936 = vadd.f32 %v720, %v935
      %v937 = vpop.f32.mrb[0].mxu0
      %v938 = vpop.f32.mrb[0].mxu0
      %v939 = vadd.f32 %v723, %v938
      %v940 = vpop.f32.mrb[0].mxu0
      %941 = vmatprep.mubr.bf16.mxu0 0
      %942 = vmatmul.mubr.bf16.gmra.mrb[0].mxu0 %v798
      %v943 = vpop.f32.mrb[0].mxu0
      %v944 = vadd.f32 %v728, %v943
      %v945 = vpop.f32.mrb[0].mxu0
      %v946 = vpop.f32.mrb[0].mxu0
      %v947 = vadd.f32 %v731, %v946
      %v948 = vpop.f32.mrb[0].mxu0
      %949 = vmatprep.mubr.bf16.mxu0 0
      %950 = vmatmul.mubr.bf16.gmra.mrb[0].mxu0 %v800
      %v951 = vpop.f32.mrb[0].mxu0
      %v952 = vadd.f32 %v736, %v951
      %v953 = vpop.f32.mrb[0].mxu0
      %v954 = vpop.f32.mrb[0].mxu0
      %v955 = vadd.f32 %v739, %v954
      %v956 = vpop.f32.mrb[0].mxu0
      %957 = vmatprep.mubr.bf16.mxu0 0
      %958 = vmatmul.mubr.bf16.gmra.mrb[0].mxu0 %v802
      %v959 = vpop.f32.mrb[0].mxu0
      %v960 = vadd.f32 %v744, %v959
      %v961 = vpop.f32.mrb[0].mxu0
      %v962 = vpop.f32.mrb[0].mxu0
      %v963 = vadd.f32 %v747, %v962
      %v964 = vpop.f32.mrb[0].mxu0
      %965 = vmatprep.mubr.bf16.mxu0 0
      %966 = vmatmul.mubr.bf16.gmra.mrb[0].mxu0 %v804
      %v967 = vpop.f32.mrb[0].mxu0
      %v968 = vadd.f32 %v752, %v967
      %v969 = vpop.f32.mrb[0].mxu0
      %v970 = vpop.f32.mrb[0].mxu0
      %v971 = vadd.f32 %v755, %v970
      %v972 = vpop.f32.mrb[0].mxu0
      %973 = vmatprep.mubr.bf16.mxu0 0
      %974 = vmatmul.mubr.bf16.gmra.mrb[0].mxu0 %v806
      %v975 = vpop.f32.mrb[0].mxu0
      %v976 = vadd.f32 %v760, %v975
      %v977 = vpop.f32.mrb[0].mxu0
      %v978 = vpop.f32.mrb[0].mxu0
      %v979 = vadd.f32 %v763, %v978
      %v980 = vpop.f32.mrb[0].mxu0
      %981 = vmatprep.mubr.bf16.mxu0 0
      %982 = vmatmul.mubr.bf16.gmra.mrb[0].mxu0 %v808
      %v983 = vpop.f32.mrb[0].mxu0
      %v984 = vadd.f32 %v768, %v983
      %v985 = vpop.f32.mrb[0].mxu0
      %v986 = vpop.f32.mrb[0].mxu0
      %v987 = vadd.f32 %v771, %v986
      %v988 = vpop.f32.mrb[0].mxu0
      %989 = vdwg.mxu0
      %v990 = vld [vmem:[%s246] sm:$0xe]
      %v991 = vld [vmem:[%s1 + $0x4] sm:$0x3]
      %v993 = vunpack.c.l.b16 %v990
      %v994 = vpack.c.b16 %v330, %v993
      %vm995 = vcmask 1046528
      %v996 = vrot.slane %v994, 1
      %v997 = vrot.slane %v367, 1
      %v998 = vsel %vm995, %v996, %v997
      %v999 = vrot.slane %v368, 1
      %v1000 = vsel %vm995, %v997, %v999
      %v1001 = vrot.slane %v369, 1
      %v1002 = vsel %vm995, %v999, %v1001
      %v1003 = vrot.slane %v370, 1
      %v1004 = vsel %vm995, %v1001, %v1003
      %v1005 = vrot.slane %v371, 1
      %v1006 = vsel %vm995, %v1003, %v1005
      %v1007 = vrot.slane %v372, 1
      %v1008 = vsel %vm995, %v1005, %v1007
      %v1009 = vrot.slane %v373, 1
      %v1010 = vsel %vm995, %v1007, %v1009
      %v1011 = vrot.slane %v374, 1
      %v1012 = vsel %vm995, %v1009, %v1011
      %v1013 = vrot.slane %v375, 1
      %v1014 = vsel %vm995, %v1011, %v1013
      %v1015 = vrot.slane %v376, 1
      %v1016 = vsel %vm995, %v1013, %v1015
      %v1017 = vrot.slane %v377, 1
      %v1018 = vsel %vm995, %v1015, %v1017
      %v1019 = vrot.slane %v378, 1
      %v1020 = vsel %vm995, %v1017, %v1019
      %v1021 = vrot.slane %v379, 1
      %v1022 = vsel %vm995, %v1019, %v1021
      %v1023 = vrot.slane %v380, 1
      %v1024 = vsel %vm995, %v1021, %v1023
      %v1025 = vrot.slane %v381, 1
      %v1026 = vsel %vm995, %v1023, %v1025
      %v1027 = vrot.slane %v382, 1
      %v1028 = vsel %vm995, %v1025, %v1027
      %v1029 = vrot.slane %v383, 1
      %v1030 = vsel %vm995, %v1027, %v1029
      %v1031 = vrot.slane %v384, 1
      %v1032 = vsel %vm995, %v1029, %v1031
      %v1034 = vsel %vm538, %v998, 0
      %v1037 = vsel %vm538, %v1000, 0
      %v1040 = vsel %vm538, %v1002, 0
      %v1043 = vsel %vm538, %v1004, 0
      %v1046 = vsel %vm538, %v1006, 0
      %v1049 = vsel %vm538, %v1008, 0
      %v1052 = vsel %vm538, %v1010, 0
      %v1055 = vsel %vm538, %v1012, 0
      %v1058 = vsel %vm538, %v1014, 0
      %v1061 = vsel %vm538, %v1016, 0
      %v1064 = vsel %vm538, %v1018, 0
      %v1067 = vsel %vm538, %v1020, 0
      %v1070 = vsel %vm538, %v1022, 0
      %v1073 = vsel %vm538, %v1024, 0
      %v1076 = vsel %vm538, %v1026, 0
      %v1079 = vsel %vm538, %v1028, 0
      %v1082 = vsel %vm538, %v1030, 0
      %v1085 = vsel %vm538, %v1032, 0
      %v1088 = vsel %vm593, %v991, 0
      %1090 = vmatprep.subr.bf16.mxu0 0
      %1091 = vmatpush1.bf16.msra.mxu0 %v1088
      %1092 = vmatprep.subr.bf16.mxu0 0
      %1093 = vmatpush1.bf16.msra.mxu0 0
      %1094 = vmatprep.subr.bf16.mxu0 0
      %1095 = vmatpush1.bf16.msra.mxu0 0
      %1096 = vmatprep.subr.bf16.mxu0 0
      %1097 = vmatpush1.bf16.msra.mxu0 0
      %1098 = vmatprep.subr.bf16.mxu0 0
      %1099 = vmatpush1.bf16.msra.mxu0 0
      %1100 = vmatprep.subr.bf16.mxu0 0
      %1101 = vmatpush1.bf16.msra.mxu0 0
      %1102 = vmatprep.subr.bf16.mxu0 0
      %1103 = vmatpush1.bf16.msra.mxu0 0
      %1104 = vmatprep.subr.bf16.mxu0 0
      %1105 = vmatpush1.bf16.msra.mxu0 0
      %1106 = vmatprep.subr.bf16.mxu0 0
      %1107 = vmatpush1.bf16.msra.mxu0 0
      %1108 = vmatprep.subr.bf16.mxu0 0
      %1109 = vmatpush1.bf16.msra.mxu0 0
      %1110 = vmatprep.subr.bf16.mxu0 0
      %1111 = vmatpush1.bf16.msra.mxu0 0
      %1112 = vmatprep.subr.bf16.mxu0 0
      %1113 = vmatpush1.bf16.msra.mxu0 0
      %1114 = vmatprep.subr.bf16.mxu0 0
      %1115 = vmatpush1.bf16.msra.mxu0 0
      %1116 = vmatprep.subr.bf16.mxu0 0
      %1117 = vmatpush1.bf16.msra.mxu0 0
      %1118 = vmatprep.subr.bf16.mxu0 0
      %1119 = vmatpush1.bf16.msra.mxu0 0
      %1120 = vmatprep.subr.bf16.mxu0 0
      %1121 = vmatpush1.bf16.msra.mxu0 0
      %1122 = vmatprep.mubr.bf16.mxu0 0
      %1123 = vmatmul.mubr.bf16.gmra.mrb[0].mxu0 %v1034
      %v1124 = vpop.f32.mrb[0].mxu0
      %v1125 = vadd.f32 0.0, %v1124
      %v1126 = vpop.f32.mrb[0].mxu0
      %v1127 = vpop.f32.mrb[0].mxu0
      %v1128 = vadd.f32 0.0, %v1127
      %v1129 = vpop.f32.mrb[0].mxu0
      %1130 = vmatprep.mubr.bf16.mxu0 0
      %1131 = vmatmul.mubr.bf16.gmra.mrb[0].mxu0 %v1037
      %v1132 = vpop.f32.mrb[0].mxu0
      %v1133 = vadd.f32 0.0, %v1132
      %v1134 = vpop.f32.mrb[0].mxu0
      %v1135 = vpop.f32.mrb[0].mxu0
      %v1136 = vadd.f32 0.0, %v1135
      %v1137 = vpop.f32.mrb[0].mxu0
      %1138 = vmatprep.mubr.bf16.mxu0 0
      %1139 = vmatmul.mubr.bf16.gmra.mrb[0].mxu0 %v1040
      %v1140 = vpop.f32.mrb[0].mxu0
      %v1141 = vadd.f32 0.0, %v1140
      %v1142 = vpop.f32.mrb[0].mxu0
      %v1143 = vpop.f32.mrb[0].mxu0
      %v1144 = vadd.f32 0.0, %v1143
      %v1145 = vpop.f32.mrb[0].mxu0
      %1146 = vmatprep.mubr.bf16.mxu0 0
      %1147 = vmatmul.mubr.bf16.gmra.mrb[0].mxu0 %v1043
      %v1148 = vpop.f32.mrb[0].mxu0
      %v1149 = vadd.f32 0.0, %v1148
      %v1150 = vpop.f32.mrb[0].mxu0
      %v1151 = vpop.f32.mrb[0].mxu0
      %v1152 = vadd.f32 0.0, %v1151
      %v1153 = vpop.f32.mrb[0].mxu0
      %1154 = vmatprep.mubr.bf16.mxu0 0
      %1155 = vmatmul.mubr.bf16.gmra.mrb[0].mxu0 %v1046
      %v1156 = vpop.f32.mrb[0].mxu0
      %v1157 = vadd.f32 0.0, %v1156
      %v1158 = vpop.f32.mrb[0].mxu0
      %v1159 = vpop.f32.mrb[0].mxu0
      %v1160 = vadd.f32 0.0, %v1159
      %v1161 = vpop.f32.mrb[0].mxu0
      %1162 = vmatprep.mubr.bf16.mxu0 0
      %1163 = vmatmul.mubr.bf16.gmra.mrb[0].mxu0 %v1049
      %v1164 = vpop.f32.mrb[0].mxu0
      %v1165 = vadd.f32 0.0, %v1164
      %v1166 = vpop.f32.mrb[0].mxu0
      %v1167 = vpop.f32.mrb[0].mxu0
      %v1168 = vadd.f32 0.0, %v1167
      %v1169 = vpop.f32.mrb[0].mxu0
      %1170 = vmatprep.mubr.bf16.mxu0 0
      %1171 = vmatmul.mubr.bf16.gmra.mrb[0].mxu0 %v1052
      %v1172 = vpop.f32.mrb[0].mxu0
      %v1173 = vadd.f32 0.0, %v1172
      %v1174 = vpop.f32.mrb[0].mxu0
      %v1175 = vpop.f32.mrb[0].mxu0
      %v1176 = vadd.f32 0.0, %v1175
      %v1177 = vpop.f32.mrb[0].mxu0
      %1178 = vmatprep.mubr.bf16.mxu0 0
      %1179 = vmatmul.mubr.bf16.gmra.mrb[0].mxu0 %v1055
      %v1180 = vpop.f32.mrb[0].mxu0
      %v1181 = vadd.f32 0.0, %v1180
      %v1182 = vpop.f32.mrb[0].mxu0
      %v1183 = vpop.f32.mrb[0].mxu0
      %v1184 = vadd.f32 0.0, %v1183
      %v1185 = vpop.f32.mrb[0].mxu0
      %1186 = vmatprep.mubr.bf16.mxu0 0
      %1187 = vmatmul.mubr.bf16.gmra.mrb[0].mxu0 %v1058
      %v1188 = vpop.f32.mrb[0].mxu0
      %v1189 = vadd.f32 0.0, %v1188
      %v1190 = vpop.f32.mrb[0].mxu0
      %v1191 = vpop.f32.mrb[0].mxu0
      %v1192 = vadd.f32 0.0, %v1191
      %v1193 = vpop.f32.mrb[0].mxu0
      %1194 = vmatprep.mubr.bf16.mxu0 0
      %1195 = vmatmul.mubr.bf16.gmra.mrb[0].mxu0 %v1061
      %v1196 = vpop.f32.mrb[0].mxu0
      %v1197 = vadd.f32 0.0, %v1196
      %v1198 = vpop.f32.mrb[0].mxu0
      %v1199 = vpop.f32.mrb[0].mxu0
      %v1200 = vadd.f32 0.0, %v1199
      %v1201 = vpop.f32.mrb[0].mxu0
      %1202 = vmatprep.mubr.bf16.mxu0 0
      %1203 = vmatmul.mubr.bf16.gmra.mrb[0].mxu0 %v1064
      %v1204 = vpop.f32.mrb[0].mxu0
      %v1205 = vadd.f32 0.0, %v1204
      %v1206 = vpop.f32.mrb[0].mxu0
      %v1207 = vpop.f32.mrb[0].mxu0
      %v1208 = vadd.f32 0.0, %v1207
      %v1209 = vpop.f32.mrb[0].mxu0
      %1210 = vmatprep.mubr.bf16.mxu0 0
      %1211 = vmatmul.mubr.bf16.gmra.mrb[0].mxu0 %v1067
      %v1212 = vpop.f32.mrb[0].mxu0
      %v1213 = vadd.f32 0.0, %v1212
      %v1214 = vpop.f32.mrb[0].mxu0
      %v1215 = vpop.f32.mrb[0].mxu0
      %v1216 = vadd.f32 0.0, %v1215
      %v1217 = vpop.f32.mrb[0].mxu0
      %1218 = vmatprep.mubr.bf16.mxu0 0
      %1219 = vmatmul.mubr.bf16.gmra.mrb[0].mxu0 %v1070
      %v1220 = vpop.f32.mrb[0].mxu0
      %v1221 = vadd.f32 0.0, %v1220
      %v1222 = vpop.f32.mrb[0].mxu0
      %v1223 = vpop.f32.mrb[0].mxu0
      %v1224 = vadd.f32 0.0, %v1223
      %v1225 = vpop.f32.mrb[0].mxu0
      %1226 = vmatprep.mubr.bf16.mxu0 0
      %1227 = vmatmul.mubr.bf16.gmra.mrb[0].mxu0 %v1073
      %v1228 = vpop.f32.mrb[0].mxu0
      %v1229 = vadd.f32 0.0, %v1228
      %v1230 = vpop.f32.mrb[0].mxu0
      %v1231 = vpop.f32.mrb[0].mxu0
      %v1232 = vadd.f32 0.0, %v1231
      %v1233 = vpop.f32.mrb[0].mxu0
      %1234 = vmatprep.mubr.bf16.mxu0 0
      %1235 = vmatmul.mubr.bf16.gmra.mrb[0].mxu0 %v1076
      %v1236 = vpop.f32.mrb[0].mxu0
      %v1237 = vadd.f32 0.0, %v1236
      %v1238 = vpop.f32.mrb[0].mxu0
      %v1239 = vpop.f32.mrb[0].mxu0
      %v1240 = vadd.f32 0.0, %v1239
      %v1241 = vpop.f32.mrb[0].mxu0
      %1242 = vmatprep.mubr.bf16.mxu0 0
      %1243 = vmatmul.mubr.bf16.gmra.mrb[0].mxu0 %v1079
      %v1244 = vpop.f32.mrb[0].mxu0
      %v1245 = vadd.f32 0.0, %v1244
      %v1246 = vpop.f32.mrb[0].mxu0
      %v1247 = vpop.f32.mrb[0].mxu0
      %v1248 = vadd.f32 0.0, %v1247
      %v1249 = vpop.f32.mrb[0].mxu0
      %1250 = vmatprep.mubr.bf16.mxu0 0
      %1251 = vmatmul.mubr.bf16.gmra.mrb[0].mxu0 %v1082
      %v1252 = vpop.f32.mrb[0].mxu0
      %v1253 = vadd.f32 0.0, %v1252
      %v1254 = vpop.f32.mrb[0].mxu0
      %v1255 = vpop.f32.mrb[0].mxu0
      %v1256 = vadd.f32 0.0, %v1255
      %v1257 = vpop.f32.mrb[0].mxu0
      %1258 = vmatprep.mubr.bf16.mxu0 0
      %1259 = vmatmul.mubr.bf16.gmra.mrb[0].mxu0 %v1085
      %v1260 = vpop.f32.mrb[0].mxu0
      %v1261 = vadd.f32 0.0, %v1260
      %v1262 = vpop.f32.mrb[0].mxu0
      %v1263 = vpop.f32.mrb[0].mxu0
      %v1264 = vadd.f32 0.0, %v1263
      %v1265 = vpop.f32.mrb[0].mxu0
      %1266 = vdwg.mxu0
      %v1267 = vadd.f32 %v848, %v1125
      %v1268 = vadd.f32 %v851, %v1128
      %v1269 = vadd.f32 %v856, %v1133
      %v1270 = vadd.f32 %v859, %v1136
      %v1271 = vadd.f32 %v864, %v1141
      %v1272 = vadd.f32 %v867, %v1144
      %v1273 = vadd.f32 %v872, %v1149
      %v1274 = vadd.f32 %v875, %v1152
      %v1275 = vadd.f32 %v880, %v1157
      %v1276 = vadd.f32 %v883, %v1160
      %v1277 = vadd.f32 %v888, %v1165
      %v1278 = vadd.f32 %v891, %v1168
      %v1279 = vadd.f32 %v896, %v1173
      %v1280 = vadd.f32 %v899, %v1176
      %v1281 = vadd.f32 %v904, %v1181
      %v1282 = vadd.f32 %v907, %v1184
      %v1283 = vadd.f32 %v912, %v1189
      %v1284 = vadd.f32 %v915, %v1192
      %v1285 = vadd.f32 %v920, %v1197
      %v1286 = vadd.f32 %v923, %v1200
      %v1287 = vadd.f32 %v928, %v1205
      %v1288 = vadd.f32 %v931, %v1208
      %v1289 = vadd.f32 %v936, %v1213
      %v1290 = vadd.f32 %v939, %v1216
      %v1291 = vadd.f32 %v944, %v1221
      %v1292 = vadd.f32 %v947, %v1224
      %v1293 = vadd.f32 %v952, %v1229
      %v1294 = vadd.f32 %v955, %v1232
      %v1295 = vadd.f32 %v960, %v1237
      %v1296 = vadd.f32 %v963, %v1240
      %v1297 = vadd.f32 %v968, %v1245
      %v1298 = vadd.f32 %v971, %v1248
      %v1299 = vadd.f32 %v976, %v1253
      %v1300 = vadd.f32 %v979, %v1256
      %v1301 = vadd.f32 %v984, %v1261
      %v1302 = vadd.f32 %v987, %v1264
      %v1303 = vld [vmem:[%s246 + $0x8] sm:$0xe]
      %v1304 = vld [vmem:[%s246 + $0xc] sm:$0xf]
      %v1305 = vld [vmem:[%s246 + $0x10] sm:$0xf]
      %v1306 = vld [vmem:[%s246 + $0x14] sm:$0xf]
      %v1307 = vld [vmem:[%s246 + $0x18] sm:$0xf]
      %v1308 = vld [vmem:[%s246 + $0x1c] sm:$0xf]
      %v1309 = vld [vmem:[%s246 + $0x20] sm:$0xf]
      %v1310 = vld [vmem:[%s246 + $0x24] sm:$0xf]
      %v1311 = vld [vmem:[%s246 + $0x28] sm:$0xf]
      %v1312 = vld [vmem:[%s246 + $0x2c] sm:$0xf]
      %v1313 = vld [vmem:[%s246 + $0x30] sm:$0xf]
      %v1314 = vld [vmem:[%s246 + $0x34] sm:$0xf]
      %v1315 = vld [vmem:[%s246 + $0x38] sm:$0xf]
      %v1316 = vld [vmem:[%s246 + $0x3c] sm:$0xf]
      %v1317 = vld [vmem:[%s246 + $0x40] sm:$0xf]
      %v1318 = vld [vmem:[%s246 + $0x44] sm:$0xf]
      %v1319 = vld [vmem:[%s246 + $0x48] sm:$0xf]
      %v1320 = vld [vmem:[%s246 + $0x4c] sm:$0xf]
      %v1321 = vld [vmem:[%s246 + $0x50] sm:$0xf]
      %v1322 = vld [vmem:[%s246 + $0x54] sm:$0xf]
      %v1323 = vld [vmem:[%s246 + $0x58] sm:$0xf]
      %v1324 = vld [vmem:[%s246 + $0x5c] sm:$0xf]
      %v1325 = vld [vmem:[%s246 + $0x60] sm:$0xf]
      %v1326 = vld [vmem:[%s246 + $0x64] sm:$0xf]
      %v1327 = vld [vmem:[%s246 + $0x68] sm:$0xf]
      %v1328 = vld [vmem:[%s246 + $0x6c] sm:$0xf]
      %v1329 = vld [vmem:[%s246 + $0x70] sm:$0xf]
      %v1330 = vld [vmem:[%s246 + $0x74] sm:$0xf]
      %v1331 = vld [vmem:[%s246 + $0x78] sm:$0xf]
      %v1332 = vld [vmem:[%s246 + $0x7c] sm:$0xf]
      %v1333 = vld [vmem:[%s246 + $0x80] sm:$0xf]
      %v1334 = vld [vmem:[%s246 + $0x84] sm:$0xf]
      %v1335 = vld [vmem:[%s246 + $0x88] sm:$0xf]
      %v1336 = vld [vmem:[%s246 + $0x8c] sm:$0xf]
      %v1337 = vld [vmem:[%s246 + $0x90] sm:$0xf]
      %v1338 = vld [vmem:[%s246 + $0x94] sm:$0xf]
      %v1339 = vld [vmem:[%s246 + $0x98] sm:$0x1]
      %v1340 = vld [vmem:[%s1 + $0x4] sm:$0xc]
      %v1378 = vunpack.c.l.b16 %v1303
      %v1379 = vunpack.c.l.b16 %v1304
      %v1380 = vunpack.c.l.b16 %v1305
      %v1381 = vunpack.c.l.b16 %v1306
      %v1382 = vunpack.c.l.b16 %v1307
      %v1383 = vunpack.c.l.b16 %v1308
      %v1384 = vunpack.c.l.b16 %v1309
      %v1385 = vunpack.c.l.b16 %v1310
      %v1386 = vunpack.c.l.b16 %v1311
      %v1387 = vunpack.c.l.b16 %v1312
      %v1388 = vunpack.c.l.b16 %v1313
      %v1389 = vunpack.c.l.b16 %v1314
      %v1390 = vunpack.c.l.b16 %v1315
      %v1391 = vunpack.c.l.b16 %v1316
      %v1392 = vunpack.c.l.b16 %v1317
      %v1393 = vunpack.c.l.b16 %v1318
      %v1394 = vunpack.c.l.b16 %v1319
      %v1395 = vunpack.c.l.b16 %v1320
      %v1396 = vunpack.c.l.b16 %v1321
      %v1397 = vunpack.c.l.b16 %v1322
      %v1398 = vunpack.c.l.b16 %v1323
      %v1399 = vunpack.c.l.b16 %v1324
      %v1400 = vunpack.c.l.b16 %v1325
      %v1401 = vunpack.c.l.b16 %v1326
      %v1402 = vunpack.c.l.b16 %v1327
      %v1403 = vunpack.c.l.b16 %v1328
      %v1404 = vunpack.c.l.b16 %v1329
      %v1405 = vunpack.c.l.b16 %v1330
      %v1406 = vunpack.c.l.b16 %v1331
      %v1407 = vunpack.c.l.b16 %v1332
      %v1408 = vunpack.c.l.b16 %v1333
      %v1409 = vunpack.c.l.b16 %v1334
      %v1410 = vunpack.c.l.b16 %v1335
      %v1411 = vunpack.c.l.b16 %v1336
      %v1412 = vunpack.c.l.b16 %v1337
      %v1413 = vunpack.c.l.b16 %v1338
      %v1414 = vunpack.c.l.b16 %v1339
      %v1415 = vpack.c.b16 %v1379, %v1378
      %v1416 = vpack.c.b16 %v1381, %v1380
      %v1417 = vpack.c.b16 %v1383, %v1382
      %v1418 = vpack.c.b16 %v1385, %v1384
      %v1419 = vpack.c.b16 %v1387, %v1386
      %v1420 = vpack.c.b16 %v1389, %v1388
      %v1421 = vpack.c.b16 %v1391, %v1390
      %v1422 = vpack.c.b16 %v1393, %v1392
      %v1423 = vpack.c.b16 %v1395, %v1394
      %v1424 = vpack.c.b16 %v1397, %v1396
      %v1425 = vpack.c.b16 %v1399, %v1398
      %v1426 = vpack.c.b16 %v1401, %v1400
      %v1427 = vpack.c.b16 %v1403, %v1402
      %v1428 = vpack.c.b16 %v1405, %v1404
      %v1429 = vpack.c.b16 %v1407, %v1406
      %v1430 = vpack.c.b16 %v1409, %v1408
      %v1431 = vpack.c.b16 %v1411, %v1410
      %v1432 = vpack.c.b16 %v1413, %v1412
      %v1433 = vpack.c.b16 %v1414, %v1414
      %v1434 = vrot.slane %v1415, 1
      %v1435 = vrot.slane %v1416, 1
      %v1436 = vsel %vm995, %v1434, %v1435
      %v1437 = vrot.slane %v1417, 1
      %v1438 = vsel %vm995, %v1435, %v1437
      %v1439 = vrot.slane %v1418, 1
      %v1440 = vsel %vm995, %v1437, %v1439
      %v1441 = vrot.slane %v1419, 1
      %v1442 = vsel %vm995, %v1439, %v1441
      %v1443 = vrot.slane %v1420, 1
      %v1444 = vsel %vm995, %v1441, %v1443
      %v1445 = vrot.slane %v1421, 1
      %v1446 = vsel %vm995, %v1443, %v1445
      %v1447 = vrot.slane %v1422, 1
      %v1448 = vsel %vm995, %v1445, %v1447
      %v1449 = vrot.slane %v1423, 1
      %v1450 = vsel %vm995, %v1447, %v1449
      %v1451 = vrot.slane %v1424, 1
      %v1452 = vsel %vm995, %v1449, %v1451
      %v1453 = vrot.slane %v1425, 1
      %v1454 = vsel %vm995, %v1451, %v1453
      %v1455 = vrot.slane %v1426, 1
      %v1456 = vsel %vm995, %v1453, %v1455
      %v1457 = vrot.slane %v1427, 1
      %v1458 = vsel %vm995, %v1455, %v1457
      %v1459 = vrot.slane %v1428, 1
      %v1460 = vsel %vm995, %v1457, %v1459
      %v1461 = vrot.slane %v1429, 1
      %v1462 = vsel %vm995, %v1459, %v1461
      %v1463 = vrot.slane %v1430, 1
      %v1464 = vsel %vm995, %v1461, %v1463
      %v1465 = vrot.slane %v1431, 1
      %v1466 = vsel %vm995, %v1463, %v1465
      %v1467 = vrot.slane %v1432, 1
      %v1468 = vsel %vm995, %v1465, %v1467
      %v1469 = vrot.slane %v1433, 1
      %v1470 = vsel %vm995, %v1467, %v1469
      %v1472 = vunpack.c.l.b16 %v1340
      %v1473 = vpack.c.b16 %v1472, %v1472
      %v1474 = vrot.slane %v1473, 2
      %v1476 = vsel %vm538, %v1436, 0
      %v1479 = vsel %vm538, %v1438, 0
      %v1482 = vsel %vm538, %v1440, 0
      %v1485 = vsel %vm538, %v1442, 0
      %v1488 = vsel %vm538, %v1444, 0
      %v1491 = vsel %vm538, %v1446, 0
      %v1494 = vsel %vm538, %v1448, 0
      %v1497 = vsel %vm538, %v1450, 0
      %v1500 = vsel %vm538, %v1452, 0
      %v1503 = vsel %vm538, %v1454, 0
      %v1506 = vsel %vm538, %v1456, 0
      %v1509 = vsel %vm538, %v1458, 0
      %v1512 = vsel %vm538, %v1460, 0
      %v1515 = vsel %vm538, %v1462, 0
      %v1518 = vsel %vm538, %v1464, 0
      %v1521 = vsel %vm538, %v1466, 0
      %v1524 = vsel %vm538, %v1468, 0
      %v1527 = vsel %vm538, %v1470, 0
      %v1530 = vsel %vm593, %v1474, 0
      %1532 = vmatprep.subr.bf16.mxu0 0
      %1533 = vmatpush1.bf16.msra.mxu0 %v1530
      %1534 = vmatprep.subr.bf16.mxu0 0
      %1535 = vmatpush1.bf16.msra.mxu0 0
      %1536 = vmatprep.subr.bf16.mxu0 0
      %1537 = vmatpush1.bf16.msra.mxu0 0
      %1538 = vmatprep.subr.bf16.mxu0 0
      %1539 = vmatpush1.bf16.msra.mxu0 0
      %1540 = vmatprep.subr.bf16.mxu0 0
      %1541 = vmatpush1.bf16.msra.mxu0 0
      %1542 = vmatprep.subr.bf16.mxu0 0
      %1543 = vmatpush1.bf16.msra.mxu0 0
      %1544 = vmatprep.subr.bf16.mxu0 0
      %1545 = vmatpush1.bf16.msra.mxu0 0
      %1546 = vmatprep.subr.bf16.mxu0 0
      %1547 = vmatpush1.bf16.msra.mxu0 0
      %1548 = vmatprep.subr.bf16.mxu0 0
      %1549 = vmatpush1.bf16.msra.mxu0 0
      %1550 = vmatprep.subr.bf16.mxu0 0
      %1551 = vmatpush1.bf16.msra.mxu0 0
      %1552 = vmatprep.subr.bf16.mxu0 0
      %1553 = vmatpush1.bf16.msra.mxu0 0
      %1554 = vmatprep.subr.bf16.mxu0 0
      %1555 = vmatpush1.bf16.msra.mxu0 0
      %1556 = vmatprep.subr.bf16.mxu0 0
      %1557 = vmatpush1.bf16.msra.mxu0 0
      %1558 = vmatprep.subr.bf16.mxu0 0
      %1559 = vmatpush1.bf16.msra.mxu0 0
      %1560 = vmatprep.subr.bf16.mxu0 0
      %1561 = vmatpush1.bf16.msra.mxu0 0
      %1562 = vmatprep.subr.bf16.mxu0 0
      %1563 = vmatpush1.bf16.msra.mxu0 0
      %1564 = vmatprep.mubr.bf16.mxu0 0
      %1565 = vmatmul.mubr.bf16.gmra.mrb[0].mxu0 %v1476
      %v1566 = vpop.f32.mrb[0].mxu0
      %v1567 = vadd.f32 0.0, %v1566
      %v1568 = vpop.f32.mrb[0].mxu0
      %v1569 = vpop.f32.mrb[0].mxu0
      %v1570 = vadd.f32 0.0, %v1569
      %v1571 = vpop.f32.mrb[0].mxu0
      %1572 = vmatprep.mubr.bf16.mxu0 0
      %1573 = vmatmul.mubr.bf16.gmra.mrb[0].mxu0 %v1479
      %v1574 = vpop.f32.mrb[0].mxu0
      %v1575 = vadd.f32 0.0, %v1574
      %v1576 = vpop.f32.mrb[0].mxu0
      %v1577 = vpop.f32.mrb[0].mxu0
      %v1578 = vadd.f32 0.0, %v1577
      %v1579 = vpop.f32.mrb[0].mxu0
      %1580 = vmatprep.mubr.bf16.mxu0 0
      %1581 = vmatmul.mubr.bf16.gmra.mrb[0].mxu0 %v1482
      %v1582 = vpop.f32.mrb[0].mxu0
      %v1583 = vadd.f32 0.0, %v1582
      %v1584 = vpop.f32.mrb[0].mxu0
      %v1585 = vpop.f32.mrb[0].mxu0
      %v1586 = vadd.f32 0.0, %v1585
      %v1587 = vpop.f32.mrb[0].mxu0
      %1588 = vmatprep.mubr.bf16.mxu0 0
      %1589 = vmatmul.mubr.bf16.gmra.mrb[0].mxu0 %v1485
      %v1590 = vpop.f32.mrb[0].mxu0
      %v1591 = vadd.f32 0.0, %v1590
      %v1592 = vpop.f32.mrb[0].mxu0
      %v1593 = vpop.f32.mrb[0].mxu0
      %v1594 = vadd.f32 0.0, %v1593
      %v1595 = vpop.f32.mrb[0].mxu0
      %1596 = vmatprep.mubr.bf16.mxu0 0
      %1597 = vmatmul.mubr.bf16.gmra.mrb[0].mxu0 %v1488
      %v1598 = vpop.f32.mrb[0].mxu0
      %v1599 = vadd.f32 0.0, %v1598
      %v1600 = vpop.f32.mrb[0].mxu0
      %v1601 = vpop.f32.mrb[0].mxu0
      %v1602 = vadd.f32 0.0, %v1601
      %v1603 = vpop.f32.mrb[0].mxu0
      %1604 = vmatprep.mubr.bf16.mxu0 0
      %1605 = vmatmul.mubr.bf16.gmra.mrb[0].mxu0 %v1491
      %v1606 = vpop.f32.mrb[0].mxu0
      %v1607 = vadd.f32 0.0, %v1606
      %v1608 = vpop.f32.mrb[0].mxu0
      %v1609 = vpop.f32.mrb[0].mxu0
      %v1610 = vadd.f32 0.0, %v1609
      %v1611 = vpop.f32.mrb[0].mxu0
      %1612 = vmatprep.mubr.bf16.mxu0 0
      %1613 = vmatmul.mubr.bf16.gmra.mrb[0].mxu0 %v1494
      %v1614 = vpop.f32.mrb[0].mxu0
      %v1615 = vadd.f32 0.0, %v1614
      %v1616 = vpop.f32.mrb[0].mxu0
      %v1617 = vpop.f32.mrb[0].mxu0
      %v1618 = vadd.f32 0.0, %v1617
      %v1619 = vpop.f32.mrb[0].mxu0
      %1620 = vmatprep.mubr.bf16.mxu0 0
      %1621 = vmatmul.mubr.bf16.gmra.mrb[0].mxu0 %v1497
      %v1622 = vpop.f32.mrb[0].mxu0
      %v1623 = vadd.f32 0.0, %v1622
      %v1624 = vpop.f32.mrb[0].mxu0
      %v1625 = vpop.f32.mrb[0].mxu0
      %v1626 = vadd.f32 0.0, %v1625
      %v1627 = vpop.f32.mrb[0].mxu0
      %1628 = vmatprep.mubr.bf16.mxu0 0
      %1629 = vmatmul.mubr.bf16.gmra.mrb[0].mxu0 %v1500
      %v1630 = vpop.f32.mrb[0].mxu0
      %v1631 = vadd.f32 0.0, %v1630
      %v1632 = vpop.f32.mrb[0].mxu0
      %v1633 = vpop.f32.mrb[0].mxu0
      %v1634 = vadd.f32 0.0, %v1633
      %v1635 = vpop.f32.mrb[0].mxu0
      %1636 = vmatprep.mubr.bf16.mxu0 0
      %1637 = vmatmul.mubr.bf16.gmra.mrb[0].mxu0 %v1503
      %v1638 = vpop.f32.mrb[0].mxu0
      %v1639 = vadd.f32 0.0, %v1638
      %v1640 = vpop.f32.mrb[0].mxu0
      %v1641 = vpop.f32.mrb[0].mxu0
      %v1642 = vadd.f32 0.0, %v1641
      %v1643 = vpop.f32.mrb[0].mxu0
      %1644 = vmatprep.mubr.bf16.mxu0 0
      %1645 = vmatmul.mubr.bf16.gmra.mrb[0].mxu0 %v1506
      %v1646 = vpop.f32.mrb[0].mxu0
      %v1647 = vadd.f32 0.0, %v1646
      %v1648 = vpop.f32.mrb[0].mxu0
      %v1649 = vpop.f32.mrb[0].mxu0
      %v1650 = vadd.f32 0.0, %v1649
      %v1651 = vpop.f32.mrb[0].mxu0
      %1652 = vmatprep.mubr.bf16.mxu0 0
      %1653 = vmatmul.mubr.bf16.gmra.mrb[0].mxu0 %v1509
      %v1654 = vpop.f32.mrb[0].mxu0
      %v1655 = vadd.f32 0.0, %v1654
      %v1656 = vpop.f32.mrb[0].mxu0
      %v1657 = vpop.f32.mrb[0].mxu0
      %v1658 = vadd.f32 0.0, %v1657
      %v1659 = vpop.f32.mrb[0].mxu0
      %1660 = vmatprep.mubr.bf16.mxu0 0
      %1661 = vmatmul.mubr.bf16.gmra.mrb[0].mxu0 %v1512
      %v1662 = vpop.f32.mrb[0].mxu0
      %v1663 = vadd.f32 0.0, %v1662
      %v1664 = vpop.f32.mrb[0].mxu0
      %v1665 = vpop.f32.mrb[0].mxu0
      %v1666 = vadd.f32 0.0, %v1665
      %v1667 = vpop.f32.mrb[0].mxu0
      %1668 = vmatprep.mubr.bf16.mxu0 0
      %1669 = vmatmul.mubr.bf16.gmra.mrb[0].mxu0 %v1515
      %v1670 = vpop.f32.mrb[0].mxu0
      %v1671 = vadd.f32 0.0, %v1670
      %v1672 = vpop.f32.mrb[0].mxu0
      %v1673 = vpop.f32.mrb[0].mxu0
      %v1674 = vadd.f32 0.0, %v1673
      %v1675 = vpop.f32.mrb[0].mxu0
      %1676 = vmatprep.mubr.bf16.mxu0 0
      %1677 = vmatmul.mubr.bf16.gmra.mrb[0].mxu0 %v1518
      %v1678 = vpop.f32.mrb[0].mxu0
      %v1679 = vadd.f32 0.0, %v1678
      %v1680 = vpop.f32.mrb[0].mxu0
      %v1681 = vpop.f32.mrb[0].mxu0
      %v1682 = vadd.f32 0.0, %v1681
      %v1683 = vpop.f32.mrb[0].mxu0
      %1684 = vmatprep.mubr.bf16.mxu0 0
      %1685 = vmatmul.mubr.bf16.gmra.mrb[0].mxu0 %v1521
      %v1686 = vpop.f32.mrb[0].mxu0
      %v1687 = vadd.f32 0.0, %v1686
      %v1688 = vpop.f32.mrb[0].mxu0
      %v1689 = vpop.f32.mrb[0].mxu0
      %v1690 = vadd.f32 0.0, %v1689
      %v1691 = vpop.f32.mrb[0].mxu0
      %1692 = vmatprep.mubr.bf16.mxu0 0
      %1693 = vmatmul.mubr.bf16.gmra.mrb[0].mxu0 %v1524
      %v1694 = vpop.f32.mrb[0].mxu0
      %v1695 = vadd.f32 0.0, %v1694
      %v1696 = vpop.f32.mrb[0].mxu0
      %v1697 = vpop.f32.mrb[0].mxu0
      %v1698 = vadd.f32 0.0, %v1697
      %v1699 = vpop.f32.mrb[0].mxu0
      %1700 = vmatprep.mubr.bf16.mxu0 0
      %1701 = vmatmul.mubr.bf16.gmra.mrb[0].mxu0 %v1527
      %v1702 = vpop.f32.mrb[0].mxu0
      %v1703 = vadd.f32 0.0, %v1702
      %v1704 = vpop.f32.mrb[0].mxu0
      %v1705 = vpop.f32.mrb[0].mxu0
      %v1706 = vadd.f32 0.0, %v1705
      %v1707 = vpop.f32.mrb[0].mxu0
      %1708 = vdwg.mxu0
      %v1709 = vadd.f32 %v1267, %v1567
      %v1710 = vadd.f32 %v1268, %v1570
      %v1711 = vadd.f32 %v1269, %v1575
      %v1712 = vadd.f32 %v1270, %v1578
      %v1713 = vadd.f32 %v1271, %v1583
      %v1714 = vadd.f32 %v1272, %v1586
      %v1715 = vadd.f32 %v1273, %v1591
      %v1716 = vadd.f32 %v1274, %v1594
      %v1717 = vadd.f32 %v1275, %v1599
      %v1718 = vadd.f32 %v1276, %v1602
      %v1719 = vadd.f32 %v1277, %v1607
      %v1720 = vadd.f32 %v1278, %v1610
      %v1721 = vadd.f32 %v1279, %v1615
      %v1722 = vadd.f32 %v1280, %v1618
      %v1723 = vadd.f32 %v1281, %v1623
      %v1724 = vadd.f32 %v1282, %v1626
      %v1725 = vadd.f32 %v1283, %v1631
      %v1726 = vadd.f32 %v1284, %v1634
      %v1727 = vadd.f32 %v1285, %v1639
      %v1728 = vadd.f32 %v1286, %v1642
      %v1729 = vadd.f32 %v1287, %v1647
      %v1730 = vadd.f32 %v1288, %v1650
      %v1731 = vadd.f32 %v1289, %v1655
      %v1732 = vadd.f32 %v1290, %v1658
      %v1733 = vadd.f32 %v1291, %v1663
      %v1734 = vadd.f32 %v1292, %v1666
      %v1735 = vadd.f32 %v1293, %v1671
      %v1736 = vadd.f32 %v1294, %v1674
      %v1737 = vadd.f32 %v1295, %v1679
      %v1738 = vadd.f32 %v1296, %v1682
      %v1739 = vadd.f32 %v1297, %v1687
      %v1740 = vadd.f32 %v1298, %v1690
      %v1741 = vadd.f32 %v1299, %v1695
      %v1742 = vadd.f32 %v1300, %v1698
      %v1743 = vadd.f32 %v1301, %v1703
      %v1744 = vadd.f32 %v1302, %v1706
      %v1745 = vld [vmem:[%s246 + $0x98] sm:$0x3]
      %v1746 = vld [vmem:[%s1 + $0x8] sm:$0x3]
      %v1748 = vunpack.c.l.b16 %v1745
      %v1749 = vpack.c.b16 %v1748, %v1748
      %vm1750 = vsmask.f32 6400
      %v1752 = vshrl.u32 %v1415, 16
      %v1754 = vrot.slane %v1752, 1
      %v1755 = vshll.u32 %v1415, 16
      %v1757 = vrot.slane %v1755, 2
      %v1758 = vor.u32 %v1754, %v1757
      %v1760 = vshrl.u32 %v1416, 16
      %v1762 = vrot.slane %v1760, 1
      %v1763 = vshll.u32 %v1416, 16
      %v1765 = vrot.slane %v1763, 2
      %v1766 = vor.u32 %v1762, %v1765
      %v1767 = vsel %vm1750, %v1758, %v1766
      %v1769 = vshrl.u32 %v1417, 16
      %v1771 = vrot.slane %v1769, 1
      %v1772 = vshll.u32 %v1417, 16
      %v1774 = vrot.slane %v1772, 2
      %v1775 = vor.u32 %v1771, %v1774
      %v1776 = vsel %vm1750, %v1766, %v1775
      %v1778 = vshrl.u32 %v1418, 16
      %v1780 = vrot.slane %v1778, 1
      %v1781 = vshll.u32 %v1418, 16
      %v1783 = vrot.slane %v1781, 2
      %v1784 = vor.u32 %v1780, %v1783
      %v1785 = vsel %vm1750, %v1775, %v1784
      %v1787 = vshrl.u32 %v1419, 16
      %v1789 = vrot.slane %v1787, 1
      %v1790 = vshll.u32 %v1419, 16
      %v1792 = vrot.slane %v1790, 2
      %v1793 = vor.u32 %v1789, %v1792
      %v1794 = vsel %vm1750, %v1784, %v1793
      %v1796 = vshrl.u32 %v1420, 16
      %v1798 = vrot.slane %v1796, 1
      %v1799 = vshll.u32 %v1420, 16
      %v1801 = vrot.slane %v1799, 2
      %v1802 = vor.u32 %v1798, %v1801
      %v1803 = vsel %vm1750, %v1793, %v1802
      %v1805 = vshrl.u32 %v1421, 16
      %v1807 = vrot.slane %v1805, 1
      %v1808 = vshll.u32 %v1421, 16
      %v1810 = vrot.slane %v1808, 2
      %v1811 = vor.u32 %v1807, %v1810
      %v1812 = vsel %vm1750, %v1802, %v1811
      %v1814 = vshrl.u32 %v1422, 16
      %v1816 = vrot.slane %v1814, 1
      %v1817 = vshll.u32 %v1422, 16
      %v1819 = vrot.slane %v1817, 2
      %v1820 = vor.u32 %v1816, %v1819
      %v1821 = vsel %vm1750, %v1811, %v1820
      %v1823 = vshrl.u32 %v1423, 16
      %v1825 = vrot.slane %v1823, 1
      %v1826 = vshll.u32 %v1423, 16
      %v1828 = vrot.slane %v1826, 2
      %v1829 = vor.u32 %v1825, %v1828
      %v1830 = vsel %vm1750, %v1820, %v1829
      %v1832 = vshrl.u32 %v1424, 16
      %v1834 = vrot.slane %v1832, 1
      %v1835 = vshll.u32 %v1424, 16
      %v1837 = vrot.slane %v1835, 2
      %v1838 = vor.u32 %v1834, %v1837
      %v1839 = vsel %vm1750, %v1829, %v1838
      %v1841 = vshrl.u32 %v1425, 16
      %v1843 = vrot.slane %v1841, 1
      %v1844 = vshll.u32 %v1425, 16
      %v1846 = vrot.slane %v1844, 2
      %v1847 = vor.u32 %v1843, %v1846
      %v1848 = vsel %vm1750, %v1838, %v1847
      %v1850 = vshrl.u32 %v1426, 16
      %v1852 = vrot.slane %v1850, 1
      %v1853 = vshll.u32 %v1426, 16
      %v1855 = vrot.slane %v1853, 2
      %v1856 = vor.u32 %v1852, %v1855
      %v1857 = vsel %vm1750, %v1847, %v1856
      %v1859 = vshrl.u32 %v1427, 16
      %v1861 = vrot.slane %v1859, 1
      %v1862 = vshll.u32 %v1427, 16
      %v1864 = vrot.slane %v1862, 2
      %v1865 = vor.u32 %v1861, %v1864
      %v1866 = vsel %vm1750, %v1856, %v1865
      %v1868 = vshrl.u32 %v1428, 16
      %v1870 = vrot.slane %v1868, 1
      %v1871 = vshll.u32 %v1428, 16
      %v1873 = vrot.slane %v1871, 2
      %v1874 = vor.u32 %v1870, %v1873
      %v1875 = vsel %vm1750, %v1865, %v1874
      %v1877 = vshrl.u32 %v1429, 16
      %v1879 = vrot.slane %v1877, 1
      %v1880 = vshll.u32 %v1429, 16
      %v1882 = vrot.slane %v1880, 2
      %v1883 = vor.u32 %v1879, %v1882
      %v1884 = vsel %vm1750, %v1874, %v1883
      %v1886 = vshrl.u32 %v1430, 16
      %v1888 = vrot.slane %v1886, 1
      %v1889 = vshll.u32 %v1430, 16
      %v1891 = vrot.slane %v1889, 2
      %v1892 = vor.u32 %v1888, %v1891
      %v1893 = vsel %vm1750, %v1883, %v1892
      %v1895 = vshrl.u32 %v1431, 16
      %v1897 = vrot.slane %v1895, 1
      %v1898 = vshll.u32 %v1431, 16
      %v1900 = vrot.slane %v1898, 2
      %v1901 = vor.u32 %v1897, %v1900
      %v1902 = vsel %vm1750, %v1892, %v1901
      %v1904 = vshrl.u32 %v1432, 16
      %v1906 = vrot.slane %v1904, 1
      %v1907 = vshll.u32 %v1432, 16
      %v1909 = vrot.slane %v1907, 2
      %v1910 = vor.u32 %v1906, %v1909
      %v1911 = vsel %vm1750, %v1901, %v1910
      %v1913 = vshrl.u32 %v1749, 16
      %v1915 = vrot.slane %v1913, 1
      %v1916 = vshll.u32 %v1749, 16
      %v1918 = vrot.slane %v1916, 2
      %v1919 = vor.u32 %v1915, %v1918
      %v1920 = vsel %vm1750, %v1910, %v1919
      %v1922 = vsel %vm538, %v1767, 0
      %v1925 = vsel %vm538, %v1776, 0
      %v1928 = vsel %vm538, %v1785, 0
      %v1931 = vsel %vm538, %v1794, 0
      %v1934 = vsel %vm538, %v1803, 0
      %v1937 = vsel %vm538, %v1812, 0
      %v1940 = vsel %vm538, %v1821, 0
      %v1943 = vsel %vm538, %v1830, 0
      %v1946 = vsel %vm538, %v1839, 0
      %v1949 = vsel %vm538, %v1848, 0
      %v1952 = vsel %vm538, %v1857, 0
      %v1955 = vsel %vm538, %v1866, 0
      %v1958 = vsel %vm538, %v1875, 0
      %v1961 = vsel %vm538, %v1884, 0
      %v1964 = vsel %vm538, %v1893, 0
      %v1967 = vsel %vm538, %v1902, 0
      %v1970 = vsel %vm538, %v1911, 0
      %v1973 = vsel %vm538, %v1920, 0
      %v1976 = vsel %vm593, %v1746, 0
      %1978 = vmatprep.subr.bf16.mxu0 0
      %1979 = vmatpush1.bf16.msra.mxu0 %v1976
      %1980 = vmatprep.subr.bf16.mxu0 0
      %1981 = vmatpush1.bf16.msra.mxu0 0
      %1982 = vmatprep.subr.bf16.mxu0 0
      %1983 = vmatpush1.bf16.msra.mxu0 0
      %1984 = vmatprep.subr.bf16.mxu0 0
      %1985 = vmatpush1.bf16.msra.mxu0 0
      %1986 = vmatprep.subr.bf16.mxu0 0
      %1987 = vmatpush1.bf16.msra.mxu0 0
      %1988 = vmatprep.subr.bf16.mxu0 0
      %1989 = vmatpush1.bf16.msra.mxu0 0
      %1990 = vmatprep.subr.bf16.mxu0 0
      %1991 = vmatpush1.bf16.msra.mxu0 0
      %1992 = vmatprep.subr.bf16.mxu0 0
      %1993 = vmatpush1.bf16.msra.mxu0 0
      %1994 = vmatprep.subr.bf16.mxu0 0
      %1995 = vmatpush1.bf16.msra.mxu0 0
      %1996 = vmatprep.subr.bf16.mxu0 0
      %1997 = vmatpush1.bf16.msra.mxu0 0
      %1998 = vmatprep.subr.bf16.mxu0 0
      %1999 = vmatpush1.bf16.msra.mxu0 0
      %2000 = vmatprep.subr.bf16.mxu0 0
      %2001 = vmatpush1.bf16.msra.mxu0 0
      %2002 = vmatprep.subr.bf16.mxu0 0
      %2003 = vmatpush1.bf16.msra.mxu0 0
      %2004 = vmatprep.subr.bf16.mxu0 0
      %2005 = vmatpush1.bf16.msra.mxu0 0
      %2006 = vmatprep.subr.bf16.mxu0 0
      %2007 = vmatpush1.bf16.msra.mxu0 0
      %2008 = vmatprep.subr.bf16.mxu0 0
      %2009 = vmatpush1.bf16.msra.mxu0 0
      %2010 = vmatprep.mubr.bf16.mxu0 0
      %2011 = vmatmul.mubr.bf16.gmra.mrb[0].mxu0 %v1922
      %v2012 = vpop.f32.mrb[0].mxu0
      %v2013 = vadd.f32 0.0, %v2012
      %v2014 = vpop.f32.mrb[0].mxu0
      %v2015 = vpop.f32.mrb[0].mxu0
      %v2016 = vadd.f32 0.0, %v2015
      %v2017 = vpop.f32.mrb[0].mxu0
      %2018 = vmatprep.mubr.bf16.mxu0 0
      %2019 = vmatmul.mubr.bf16.gmra.mrb[0].mxu0 %v1925
      %v2020 = vpop.f32.mrb[0].mxu0
      %v2021 = vadd.f32 0.0, %v2020
      %v2022 = vpop.f32.mrb[0].mxu0
      %v2023 = vpop.f32.mrb[0].mxu0
      %v2024 = vadd.f32 0.0, %v2023
      %v2025 = vpop.f32.mrb[0].mxu0
      %2026 = vmatprep.mubr.bf16.mxu0 0
      %2027 = vmatmul.mubr.bf16.gmra.mrb[0].mxu0 %v1928
      %v2028 = vpop.f32.mrb[0].mxu0
      %v2029 = vadd.f32 0.0, %v2028
      %v2030 = vpop.f32.mrb[0].mxu0
      %v2031 = vpop.f32.mrb[0].mxu0
      %v2032 = vadd.f32 0.0, %v2031
      %v2033 = vpop.f32.mrb[0].mxu0
      %2034 = vmatprep.mubr.bf16.mxu0 0
      %2035 = vmatmul.mubr.bf16.gmra.mrb[0].mxu0 %v1931
      %v2036 = vpop.f32.mrb[0].mxu0
      %v2037 = vadd.f32 0.0, %v2036
      %v2038 = vpop.f32.mrb[0].mxu0
      %v2039 = vpop.f32.mrb[0].mxu0
      %v2040 = vadd.f32 0.0, %v2039
      %v2041 = vpop.f32.mrb[0].mxu0
      %2042 = vmatprep.mubr.bf16.mxu0 0
      %2043 = vmatmul.mubr.bf16.gmra.mrb[0].mxu0 %v1934
      %v2044 = vpop.f32.mrb[0].mxu0
      %v2045 = vadd.f32 0.0, %v2044
      %v2046 = vpop.f32.mrb[0].mxu0
      %v2047 = vpop.f32.mrb[0].mxu0
      %v2048 = vadd.f32 0.0, %v2047
      %v2049 = vpop.f32.mrb[0].mxu0
      %2050 = vmatprep.mubr.bf16.mxu0 0
      %2051 = vmatmul.mubr.bf16.gmra.mrb[0].mxu0 %v1937
      %v2052 = vpop.f32.mrb[0].mxu0
      %v2053 = vadd.f32 0.0, %v2052
      %v2054 = vpop.f32.mrb[0].mxu0
      %v2055 = vpop.f32.mrb[0].mxu0
      %v2056 = vadd.f32 0.0, %v2055
      %v2057 = vpop.f32.mrb[0].mxu0
      %2058 = vmatprep.mubr.bf16.mxu0 0
      %2059 = vmatmul.mubr.bf16.gmra.mrb[0].mxu0 %v1940
      %v2060 = vpop.f32.mrb[0].mxu0
      %v2061 = vadd.f32 0.0, %v2060
      %v2062 = vpop.f32.mrb[0].mxu0
      %v2063 = vpop.f32.mrb[0].mxu0
      %v2064 = vadd.f32 0.0, %v2063
      %v2065 = vpop.f32.mrb[0].mxu0
      %2066 = vmatprep.mubr.bf16.mxu0 0
      %2067 = vmatmul.mubr.bf16.gmra.mrb[0].mxu0 %v1943
      %v2068 = vpop.f32.mrb[0].mxu0
      %v2069 = vadd.f32 0.0, %v2068
      %v2070 = vpop.f32.mrb[0].mxu0
      %v2071 = vpop.f32.mrb[0].mxu0
      %v2072 = vadd.f32 0.0, %v2071
      %v2073 = vpop.f32.mrb[0].mxu0
      %2074 = vmatprep.mubr.bf16.mxu0 0
      %2075 = vmatmul.mubr.bf16.gmra.mrb[0].mxu0 %v1946
      %v2076 = vpop.f32.mrb[0].mxu0
      %v2077 = vadd.f32 0.0, %v2076
      %v2078 = vpop.f32.mrb[0].mxu0
      %v2079 = vpop.f32.mrb[0].mxu0
      %v2080 = vadd.f32 0.0, %v2079
      %v2081 = vpop.f32.mrb[0].mxu0
      %2082 = vmatprep.mubr.bf16.mxu0 0
      %2083 = vmatmul.mubr.bf16.gmra.mrb[0].mxu0 %v1949
      %v2084 = vpop.f32.mrb[0].mxu0
      %v2085 = vadd.f32 0.0, %v2084
      %v2086 = vpop.f32.mrb[0].mxu0
      %v2087 = vpop.f32.mrb[0].mxu0
      %v2088 = vadd.f32 0.0, %v2087
      %v2089 = vpop.f32.mrb[0].mxu0
      %2090 = vmatprep.mubr.bf16.mxu0 0
      %2091 = vmatmul.mubr.bf16.gmra.mrb[0].mxu0 %v1952
      %v2092 = vpop.f32.mrb[0].mxu0
      %v2093 = vadd.f32 0.0, %v2092
      %v2094 = vpop.f32.mrb[0].mxu0
      %v2095 = vpop.f32.mrb[0].mxu0
      %v2096 = vadd.f32 0.0, %v2095
      %v2097 = vpop.f32.mrb[0].mxu0
      %2098 = vmatprep.mubr.bf16.mxu0 0
      %2099 = vmatmul.mubr.bf16.gmra.mrb[0].mxu0 %v1955
      %v2100 = vpop.f32.mrb[0].mxu0
      %v2101 = vadd.f32 0.0, %v2100
      %v2102 = vpop.f32.mrb[0].mxu0
      %v2103 = vpop.f32.mrb[0].mxu0
      %v2104 = vadd.f32 0.0, %v2103
      %v2105 = vpop.f32.mrb[0].mxu0
      %2106 = vmatprep.mubr.bf16.mxu0 0
      %2107 = vmatmul.mubr.bf16.gmra.mrb[0].mxu0 %v1958
      %v2108 = vpop.f32.mrb[0].mxu0
      %v2109 = vadd.f32 0.0, %v2108
      %v2110 = vpop.f32.mrb[0].mxu0
      %v2111 = vpop.f32.mrb[0].mxu0
      %v2112 = vadd.f32 0.0, %v2111
      %v2113 = vpop.f32.mrb[0].mxu0
      %2114 = vmatprep.mubr.bf16.mxu0 0
      %2115 = vmatmul.mubr.bf16.gmra.mrb[0].mxu0 %v1961
      %v2116 = vpop.f32.mrb[0].mxu0
      %v2117 = vadd.f32 0.0, %v2116
      %v2118 = vpop.f32.mrb[0].mxu0
      %v2119 = vpop.f32.mrb[0].mxu0
      %v2120 = vadd.f32 0.0, %v2119
      %v2121 = vpop.f32.mrb[0].mxu0
      %2122 = vmatprep.mubr.bf16.mxu0 0
      %2123 = vmatmul.mubr.bf16.gmra.mrb[0].mxu0 %v1964
      %v2124 = vpop.f32.mrb[0].mxu0
      %v2125 = vadd.f32 0.0, %v2124
      %v2126 = vpop.f32.mrb[0].mxu0
      %v2127 = vpop.f32.mrb[0].mxu0
      %v2128 = vadd.f32 0.0, %v2127
      %v2129 = vpop.f32.mrb[0].mxu0
      %2130 = vmatprep.mubr.bf16.mxu0 0
      %2131 = vmatmul.mubr.bf16.gmra.mrb[0].mxu0 %v1967
      %v2132 = vpop.f32.mrb[0].mxu0
      %v2133 = vadd.f32 0.0, %v2132
      %v2134 = vpop.f32.mrb[0].mxu0
      %v2135 = vpop.f32.mrb[0].mxu0
      %v2136 = vadd.f32 0.0, %v2135
      %v2137 = vpop.f32.mrb[0].mxu0
      %2138 = vmatprep.mubr.bf16.mxu0 0
      %2139 = vmatmul.mubr.bf16.gmra.mrb[0].mxu0 %v1970
      %v2140 = vpop.f32.mrb[0].mxu0
      %v2141 = vadd.f32 0.0, %v2140
      %v2142 = vpop.f32.mrb[0].mxu0
      %v2143 = vpop.f32.mrb[0].mxu0
      %v2144 = vadd.f32 0.0, %v2143
      %v2145 = vpop.f32.mrb[0].mxu0
      %2146 = vmatprep.mubr.bf16.mxu0 0
      %2147 = vmatmul.mubr.bf16.gmra.mrb[0].mxu0 %v1973
      %v2148 = vpop.f32.mrb[0].mxu0
      %v2149 = vadd.f32 0.0, %v2148
      %v2150 = vpop.f32.mrb[0].mxu0
      %v2151 = vpop.f32.mrb[0].mxu0
      %v2152 = vadd.f32 0.0, %v2151
      %v2153 = vpop.f32.mrb[0].mxu0
      %2154 = vdwg.mxu0
      %v2155 = vadd.f32 %v1709, %v2013
      %v2156 = vadd.f32 %v1710, %v2016
      %v2157 = vadd.f32 %v1711, %v2021
      %v2158 = vadd.f32 %v1712, %v2024
      %v2159 = vadd.f32 %v1713, %v2029
      %v2160 = vadd.f32 %v1714, %v2032
      %v2161 = vadd.f32 %v1715, %v2037
      %v2162 = vadd.f32 %v1716, %v2040
      %v2163 = vadd.f32 %v1717, %v2045
      %v2164 = vadd.f32 %v1718, %v2048
      %v2165 = vadd.f32 %v1719, %v2053
      %v2166 = vadd.f32 %v1720, %v2056
      %v2167 = vadd.f32 %v1721, %v2061
      %v2168 = vadd.f32 %v1722, %v2064
      %v2169 = vadd.f32 %v1723, %v2069
      %v2170 = vadd.f32 %v1724, %v2072
      %v2171 = vadd.f32 %v1725, %v2077
      %v2172 = vadd.f32 %v1726, %v2080
      %v2173 = vadd.f32 %v1727, %v2085
      %v2174 = vadd.f32 %v1728, %v2088
      %v2175 = vadd.f32 %v1729, %v2093
      %v2176 = vadd.f32 %v1730, %v2096
      %v2177 = vadd.f32 %v1731, %v2101
      %v2178 = vadd.f32 %v1732, %v2104
      %v2179 = vadd.f32 %v1733, %v2109
      %v2180 = vadd.f32 %v1734, %v2112
      %v2181 = vadd.f32 %v1735, %v2117
      %v2182 = vadd.f32 %v1736, %v2120
      %v2183 = vadd.f32 %v1737, %v2125
      %v2184 = vadd.f32 %v1738, %v2128
      %v2185 = vadd.f32 %v1739, %v2133
      %v2186 = vadd.f32 %v1740, %v2136
      %v2187 = vadd.f32 %v1741, %v2141
      %v2188 = vadd.f32 %v1742, %v2144
      %v2189 = vadd.f32 %v1743, %v2149
      %v2190 = vadd.f32 %v1744, %v2152
      %v2191 = vld [vmem:[%s246 + $0x8] sm:$0xc]
      %v2192 = vld [vmem:[%s1 + $0x8] sm:$0xc]
      %v2194 = vunpack.c.l.b16 %v2191
      %v2195 = vpack.c.b16 %v1379, %v2194
      %vm2196 = vcmask 1045504
      %v2197 = vrot.slane %v2195, 2
      %v2198 = vrot.slane %v1416, 2
      %v2199 = vsel %vm2196, %v2197, %v2198
      %v2200 = vrot.slane %v1417, 2
      %v2201 = vsel %vm2196, %v2198, %v2200
      %v2202 = vrot.slane %v1418, 2
      %v2203 = vsel %vm2196, %v2200, %v2202
      %v2204 = vrot.slane %v1419, 2
      %v2205 = vsel %vm2196, %v2202, %v2204
      %v2206 = vrot.slane %v1420, 2
      %v2207 = vsel %vm2196, %v2204, %v2206
      %v2208 = vrot.slane %v1421, 2
      %v2209 = vsel %vm2196, %v2206, %v2208
      %v2210 = vrot.slane %v1422, 2
      %v2211 = vsel %vm2196, %v2208, %v2210
      %v2212 = vrot.slane %v1423, 2
      %v2213 = vsel %vm2196, %v2210, %v2212
      %v2214 = vrot.slane %v1424, 2
      %v2215 = vsel %vm2196, %v2212, %v2214
      %v2216 = vrot.slane %v1425, 2
      %v2217 = vsel %vm2196, %v2214, %v2216
      %v2218 = vrot.slane %v1426, 2
      %v2219 = vsel %vm2196, %v2216, %v2218
      %v2220 = vrot.slane %v1427, 2
      %v2221 = vsel %vm2196, %v2218, %v2220
      %v2222 = vrot.slane %v1428, 2
      %v2223 = vsel %vm2196, %v2220, %v2222
      %v2224 = vrot.slane %v1429, 2
      %v2225 = vsel %vm2196, %v2222, %v2224
      %v2226 = vrot.slane %v1430, 2
      %v2227 = vsel %vm2196, %v2224, %v2226
      %v2228 = vrot.slane %v1431, 2
      %v2229 = vsel %vm2196, %v2226, %v2228
      %v2230 = vrot.slane %v1432, 2
      %v2231 = vsel %vm2196, %v2228, %v2230
      %v2232 = vrot.slane %v1749, 2
      %v2233 = vsel %vm2196, %v2230, %v2232
      %v2235 = vunpack.c.l.b16 %v2192
      %v2236 = vpack.c.b16 %v2235, %v2235
      %v2237 = vrot.slane %v2236, 2
      %v2239 = vsel %vm538, %v2199, 0
      %v2242 = vsel %vm538, %v2201, 0
      %v2245 = vsel %vm538, %v2203, 0
      %v2248 = vsel %vm538, %v2205, 0
      %v2251 = vsel %vm538, %v2207, 0
      %v2254 = vsel %vm538, %v2209, 0
      %v2257 = vsel %vm538, %v2211, 0
      %v2260 = vsel %vm538, %v2213, 0
      %v2263 = vsel %vm538, %v2215, 0
      %v2266 = vsel %vm538, %v2217, 0
      %v2269 = vsel %vm538, %v2219, 0
      %v2272 = vsel %vm538, %v2221, 0
      %v2275 = vsel %vm538, %v2223, 0
      %v2278 = vsel %vm538, %v2225, 0
      %v2281 = vsel %vm538, %v2227, 0
      %v2284 = vsel %vm538, %v2229, 0
      %v2287 = vsel %vm538, %v2231, 0
      %v2290 = vsel %vm538, %v2233, 0
      %v2293 = vsel %vm593, %v2237, 0
      %2295 = vmatprep.subr.bf16.mxu0 0
      %2296 = vmatpush1.bf16.msra.mxu0 %v2293
      %2297 = vmatprep.subr.bf16.mxu0 0
      %2298 = vmatpush1.bf16.msra.mxu0 0
      %2299 = vmatprep.subr.bf16.mxu0 0
      %2300 = vmatpush1.bf16.msra.mxu0 0
      %2301 = vmatprep.subr.bf16.mxu0 0
      %2302 = vmatpush1.bf16.msra.mxu0 0
      %2303 = vmatprep.subr.bf16.mxu0 0
      %2304 = vmatpush1.bf16.msra.mxu0 0
      %2305 = vmatprep.subr.bf16.mxu0 0
      %2306 = vmatpush1.bf16.msra.mxu0 0
      %2307 = vmatprep.subr.bf16.mxu0 0
      %2308 = vmatpush1.bf16.msra.mxu0 0
      %2309 = vmatprep.subr.bf16.mxu0 0
      %2310 = vmatpush1.bf16.msra.mxu0 0
      %2311 = vmatprep.subr.bf16.mxu0 0
      %2312 = vmatpush1.bf16.msra.mxu0 0
      %2313 = vmatprep.subr.bf16.mxu0 0
      %2314 = vmatpush1.bf16.msra.mxu0 0
      %2315 = vmatprep.subr.bf16.mxu0 0
      %2316 = vmatpush1.bf16.msra.mxu0 0
      %2317 = vmatprep.subr.bf16.mxu0 0
      %2318 = vmatpush1.bf16.msra.mxu0 0
      %2319 = vmatprep.subr.bf16.mxu0 0
      %2320 = vmatpush1.bf16.msra.mxu0 0
      %2321 = vmatprep.subr.bf16.mxu0 0
      %2322 = vmatpush1.bf16.msra.mxu0 0
      %2323 = vmatprep.subr.bf16.mxu0 0
      %2324 = vmatpush1.bf16.msra.mxu0 0
      %2325 = vmatprep.subr.bf16.mxu0 0
      %2326 = vmatpush1.bf16.msra.mxu0 0
      %2327 = vmatprep.mubr.bf16.mxu0 0
      %2328 = vmatmul.mubr.bf16.gmra.mrb[0].mxu0 %v2239
      %v2329 = vpop.f32.mrb[0].mxu0
      %v2330 = vadd.f32 0.0, %v2329
      %v2331 = vpop.f32.mrb[0].mxu0
      %v2332 = vpop.f32.mrb[0].mxu0
      %v2333 = vadd.f32 0.0, %v2332
      %v2334 = vpop.f32.mrb[0].mxu0
      %2335 = vmatprep.mubr.bf16.mxu0 0
      %2336 = vmatmul.mubr.bf16.gmra.mrb[0].mxu0 %v2242
      %v2337 = vpop.f32.mrb[0].mxu0
      %v2338 = vadd.f32 0.0, %v2337
      %v2339 = vpop.f32.mrb[0].mxu0
      %v2340 = vpop.f32.mrb[0].mxu0
      %v2341 = vadd.f32 0.0, %v2340
      %v2342 = vpop.f32.mrb[0].mxu0
      %2343 = vmatprep.mubr.bf16.mxu0 0
      %2344 = vmatmul.mubr.bf16.gmra.mrb[0].mxu0 %v2245
      %v2345 = vpop.f32.mrb[0].mxu0
      %v2346 = vadd.f32 0.0, %v2345
      %v2347 = vpop.f32.mrb[0].mxu0
      %v2348 = vpop.f32.mrb[0].mxu0
      %v2349 = vadd.f32 0.0, %v2348
      %v2350 = vpop.f32.mrb[0].mxu0
      %2351 = vmatprep.mubr.bf16.mxu0 0
      %2352 = vmatmul.mubr.bf16.gmra.mrb[0].mxu0 %v2248
      %v2353 = vpop.f32.mrb[0].mxu0
      %v2354 = vadd.f32 0.0, %v2353
      %v2355 = vpop.f32.mrb[0].mxu0
      %v2356 = vpop.f32.mrb[0].mxu0
      %v2357 = vadd.f32 0.0, %v2356
      %v2358 = vpop.f32.mrb[0].mxu0
      %2359 = vmatprep.mubr.bf16.mxu0 0
      %2360 = vmatmul.mubr.bf16.gmra.mrb[0].mxu0 %v2251
      %v2361 = vpop.f32.mrb[0].mxu0
      %v2362 = vadd.f32 0.0, %v2361
      %v2363 = vpop.f32.mrb[0].mxu0
      %v2364 = vpop.f32.mrb[0].mxu0
      %v2365 = vadd.f32 0.0, %v2364
      %v2366 = vpop.f32.mrb[0].mxu0
      %2367 = vmatprep.mubr.bf16.mxu0 0
      %2368 = vmatmul.mubr.bf16.gmra.mrb[0].mxu0 %v2254
      %v2369 = vpop.f32.mrb[0].mxu0
      %v2370 = vadd.f32 0.0, %v2369
      %v2371 = vpop.f32.mrb[0].mxu0
      %v2372 = vpop.f32.mrb[0].mxu0
      %v2373 = vadd.f32 0.0, %v2372
      %v2374 = vpop.f32.mrb[0].mxu0
      %2375 = vmatprep.mubr.bf16.mxu0 0
      %2376 = vmatmul.mubr.bf16.gmra.mrb[0].mxu0 %v2257
      %v2377 = vpop.f32.mrb[0].mxu0
      %v2378 = vadd.f32 0.0, %v2377
      %v2379 = vpop.f32.mrb[0].mxu0
      %v2380 = vpop.f32.mrb[0].mxu0
      %v2381 = vadd.f32 0.0, %v2380
      %v2382 = vpop.f32.mrb[0].mxu0
      %2383 = vmatprep.mubr.bf16.mxu0 0
      %2384 = vmatmul.mubr.bf16.gmra.mrb[0].mxu0 %v2260
      %v2385 = vpop.f32.mrb[0].mxu0
      %v2386 = vadd.f32 0.0, %v2385
      %v2387 = vpop.f32.mrb[0].mxu0
      %v2388 = vpop.f32.mrb[0].mxu0
      %v2389 = vadd.f32 0.0, %v2388
      %v2390 = vpop.f32.mrb[0].mxu0
      %2391 = vmatprep.mubr.bf16.mxu0 0
      %2392 = vmatmul.mubr.bf16.gmra.mrb[0].mxu0 %v2263
      %v2393 = vpop.f32.mrb[0].mxu0
      %v2394 = vadd.f32 0.0, %v2393
      %v2395 = vpop.f32.mrb[0].mxu0
      %v2396 = vpop.f32.mrb[0].mxu0
      %v2397 = vadd.f32 0.0, %v2396
      %v2398 = vpop.f32.mrb[0].mxu0
      %2399 = vmatprep.mubr.bf16.mxu0 0
      %2400 = vmatmul.mubr.bf16.gmra.mrb[0].mxu0 %v2266
      %v2401 = vpop.f32.mrb[0].mxu0
      %v2402 = vadd.f32 0.0, %v2401
      %v2403 = vpop.f32.mrb[0].mxu0
      %v2404 = vpop.f32.mrb[0].mxu0
      %v2405 = vadd.f32 0.0, %v2404
      %v2406 = vpop.f32.mrb[0].mxu0
      %2407 = vmatprep.mubr.bf16.mxu0 0
      %2408 = vmatmul.mubr.bf16.gmra.mrb[0].mxu0 %v2269
      %v2409 = vpop.f32.mrb[0].mxu0
      %v2410 = vadd.f32 0.0, %v2409
      %v2411 = vpop.f32.mrb[0].mxu0
      %v2412 = vpop.f32.mrb[0].mxu0
      %v2413 = vadd.f32 0.0, %v2412
      %v2414 = vpop.f32.mrb[0].mxu0
      %2415 = vmatprep.mubr.bf16.mxu0 0
      %2416 = vmatmul.mubr.bf16.gmra.mrb[0].mxu0 %v2272
      %v2417 = vpop.f32.mrb[0].mxu0
      %v2418 = vadd.f32 0.0, %v2417
      %v2419 = vpop.f32.mrb[0].mxu0
      %v2420 = vpop.f32.mrb[0].mxu0
      %v2421 = vadd.f32 0.0, %v2420
      %v2422 = vpop.f32.mrb[0].mxu0
      %2423 = vmatprep.mubr.bf16.mxu0 0
      %2424 = vmatmul.mubr.bf16.gmra.mrb[0].mxu0 %v2275
      %v2425 = vpop.f32.mrb[0].mxu0
      %v2426 = vadd.f32 0.0, %v2425
      %v2427 = vpop.f32.mrb[0].mxu0
      %v2428 = vpop.f32.mrb[0].mxu0
      %v2429 = vadd.f32 0.0, %v2428
      %v2430 = vpop.f32.mrb[0].mxu0
      %2431 = vmatprep.mubr.bf16.mxu0 0
      %2432 = vmatmul.mubr.bf16.gmra.mrb[0].mxu0 %v2278
      %v2433 = vpop.f32.mrb[0].mxu0
      %v2434 = vadd.f32 0.0, %v2433
      %v2435 = vpop.f32.mrb[0].mxu0
      %v2436 = vpop.f32.mrb[0].mxu0
      %v2437 = vadd.f32 0.0, %v2436
      %v2438 = vpop.f32.mrb[0].mxu0
      %2439 = vmatprep.mubr.bf16.mxu0 0
      %2440 = vmatmul.mubr.bf16.gmra.mrb[0].mxu0 %v2281
      %v2441 = vpop.f32.mrb[0].mxu0
      %v2442 = vadd.f32 0.0, %v2441
      %v2443 = vpop.f32.mrb[0].mxu0
      %v2444 = vpop.f32.mrb[0].mxu0
      %v2445 = vadd.f32 0.0, %v2444
      %v2446 = vpop.f32.mrb[0].mxu0
      %2447 = vmatprep.mubr.bf16.mxu0 0
      %2448 = vmatmul.mubr.bf16.gmra.mrb[0].mxu0 %v2284
      %v2449 = vpop.f32.mrb[0].mxu0
      %v2450 = vadd.f32 0.0, %v2449
      %v2451 = vpop.f32.mrb[0].mxu0
      %v2452 = vpop.f32.mrb[0].mxu0
      %v2453 = vadd.f32 0.0, %v2452
      %v2454 = vpop.f32.mrb[0].mxu0
      %2455 = vmatprep.mubr.bf16.mxu0 0
      %2456 = vmatmul.mubr.bf16.gmra.mrb[0].mxu0 %v2287
      %v2457 = vpop.f32.mrb[0].mxu0
      %v2458 = vadd.f32 0.0, %v2457
      %v2459 = vpop.f32.mrb[0].mxu0
      %v2460 = vpop.f32.mrb[0].mxu0
      %v2461 = vadd.f32 0.0, %v2460
      %v2462 = vpop.f32.mrb[0].mxu0
      %2463 = vmatprep.mubr.bf16.mxu0 0
      %2464 = vmatmul.mubr.bf16.gmra.mrb[0].mxu0 %v2290
      %v2465 = vpop.f32.mrb[0].mxu0
      %v2466 = vadd.f32 0.0, %v2465
      %v2467 = vpop.f32.mrb[0].mxu0
      %v2468 = vpop.f32.mrb[0].mxu0
      %v2469 = vadd.f32 0.0, %v2468
      %v2470 = vpop.f32.mrb[0].mxu0
      %2471 = vdwg.mxu0
      %v2472 = vadd.f32 %v2155, %v2330
      %v2473 = vadd.f32 %v2156, %v2333
      %v2474 = vadd.f32 %v2157, %v2338
      %v2475 = vadd.f32 %v2158, %v2341
      %v2476 = vadd.f32 %v2159, %v2346
      %v2477 = vadd.f32 %v2160, %v2349
      %v2478 = vadd.f32 %v2161, %v2354
      %v2479 = vadd.f32 %v2162, %v2357
      %v2480 = vadd.f32 %v2163, %v2362
      %v2481 = vadd.f32 %v2164, %v2365
      %v2482 = vadd.f32 %v2165, %v2370
      %v2483 = vadd.f32 %v2166, %v2373
      %v2484 = vadd.f32 %v2167, %v2378
      %v2485 = vadd.f32 %v2168, %v2381
      %v2486 = vadd.f32 %v2169, %v2386
      %v2487 = vadd.f32 %v2170, %v2389
      %v2488 = vadd.f32 %v2171, %v2394
      %v2489 = vadd.f32 %v2172, %v2397
      %v2490 = vadd.f32 %v2173, %v2402
      %v2491 = vadd.f32 %v2174, %v2405
      %v2492 = vadd.f32 %v2175, %v2410
      %v2493 = vadd.f32 %v2176, %v2413
      %v2494 = vadd.f32 %v2177, %v2418
      %v2495 = vadd.f32 %v2178, %v2421
      %v2496 = vadd.f32 %v2179, %v2426
      %v2497 = vadd.f32 %v2180, %v2429
      %v2498 = vadd.f32 %v2181, %v2434
      %v2499 = vadd.f32 %v2182, %v2437
      %v2500 = vadd.f32 %v2183, %v2442
      %v2501 = vadd.f32 %v2184, %v2445
      %v2502 = vadd.f32 %v2185, %v2450
      %v2503 = vadd.f32 %v2186, %v2453
      %v2504 = vadd.f32 %v2187, %v2458
      %v2505 = vadd.f32 %v2188, %v2461
      %v2506 = vadd.f32 %v2189, %v2466
      %v2507 = vadd.f32 %v2190, %v2469
      %v2508 = vld [vmem:[%s246 + $0x10] sm:$0xc]
      %v2509 = vld [vmem:[%s246 + $0x14] sm:$0xf]
      %v2510 = vld [vmem:[%s246 + $0x18] sm:$0xf]
      %v2511 = vld [vmem:[%s246 + $0x1c] sm:$0xf]
      %v2512 = vld [vmem:[%s246 + $0x20] sm:$0xf]
      %v2513 = vld [vmem:[%s246 + $0x24] sm:$0xf]
      %v2514 = vld [vmem:[%s246 + $0x28] sm:$0xf]
      %v2515 = vld [vmem:[%s246 + $0x2c] sm:$0xf]
      %v2516 = vld [vmem:[%s246 + $0x30] sm:$0xf]
      %v2517 = vld [vmem:[%s246 + $0x34] sm:$0xf]
      %v2518 = vld [vmem:[%s246 + $0x38] sm:$0xf]
      %v2519 = vld [vmem:[%s246 + $0x3c] sm:$0xf]
      %v2520 = vld [vmem:[%s246 + $0x40] sm:$0xf]
      %v2521 = vld [vmem:[%s246 + $0x44] sm:$0xf]
      %v2522 = vld [vmem:[%s246 + $0x48] sm:$0xf]
      %v2523 = vld [vmem:[%s246 + $0x4c] sm:$0xf]
      %v2524 = vld [vmem:[%s246 + $0x50] sm:$0xf]
      %v2525 = vld [vmem:[%s246 + $0x54] sm:$0xf]
      %v2526 = vld [vmem:[%s246 + $0x58] sm:$0xf]
      %v2527 = vld [vmem:[%s246 + $0x5c] sm:$0xf]
      %v2528 = vld [vmem:[%s246 + $0x60] sm:$0xf]
      %v2529 = vld [vmem:[%s246 + $0x64] sm:$0xf]
      %v2530 = vld [vmem:[%s246 + $0x68] sm:$0xf]
      %v2531 = vld [vmem:[%s246 + $0x6c] sm:$0xf]
      %v2532 = vld [vmem:[%s246 + $0x70] sm:$0xf]
      %v2533 = vld [vmem:[%s246 + $0x74] sm:$0xf]
      %v2534 = vld [vmem:[%s246 + $0x78] sm:$0xf]
      %v2535 = vld [vmem:[%s246 + $0x7c] sm:$0xf]
      %v2536 = vld [vmem:[%s246 + $0x80] sm:$0xf]
      %v2537 = vld [vmem:[%s246 + $0x84] sm:$0xf]
      %v2538 = vld [vmem:[%s246 + $0x88] sm:$0xf]
      %v2539 = vld [vmem:[%s246 + $0x8c] sm:$0xf]
      %v2540 = vld [vmem:[%s246 + $0x90] sm:$0xf]
      %v2541 = vld [vmem:[%s246 + $0x94] sm:$0xf]
      %v2542 = vld [vmem:[%s246 + $0x98] sm:$0xf]
      %v2543 = vld [vmem:[%s246 + $0x9c] sm:$0xf]
      %v2544 = vld [vmem:[%s246 + $0xa0] sm:$0x3]
      %v2545 = vld [vmem:[%s1 + $0xc] sm:$0x3]
      %v2583 = vunpack.c.l.b16 %v2508
      %v2584 = vunpack.c.l.b16 %v2509
      %v2585 = vunpack.c.l.b16 %v2510
      %v2586 = vunpack.c.l.b16 %v2511
      %v2587 = vunpack.c.l.b16 %v2512
      %v2588 = vunpack.c.l.b16 %v2513
      %v2589 = vunpack.c.l.b16 %v2514
      %v2590 = vunpack.c.l.b16 %v2515
      %v2591 = vunpack.c.l.b16 %v2516
      %v2592 = vunpack.c.l.b16 %v2517
      %v2593 = vunpack.c.l.b16 %v2518
      %v2594 = vunpack.c.l.b16 %v2519
      %v2595 = vunpack.c.l.b16 %v2520
      %v2596 = vunpack.c.l.b16 %v2521
      %v2597 = vunpack.c.l.b16 %v2522
      %v2598 = vunpack.c.l.b16 %v2523
      %v2599 = vunpack.c.l.b16 %v2524
      %v2600 = vunpack.c.l.b16 %v2525
      %v2601 = vunpack.c.l.b16 %v2526
      %v2602 = vunpack.c.l.b16 %v2527
      %v2603 = vunpack.c.l.b16 %v2528
      %v2604 = vunpack.c.l.b16 %v2529
      %v2605 = vunpack.c.l.b16 %v2530
      %v2606 = vunpack.c.l.b16 %v2531
      %v2607 = vunpack.c.l.b16 %v2532
      %v2608 = vunpack.c.l.b16 %v2533
      %v2609 = vunpack.c.l.b16 %v2534
      %v2610 = vunpack.c.l.b16 %v2535
      %v2611 = vunpack.c.l.b16 %v2536
      %v2612 = vunpack.c.l.b16 %v2537
      %v2613 = vunpack.c.l.b16 %v2538
      %v2614 = vunpack.c.l.b16 %v2539
      %v2615 = vunpack.c.l.b16 %v2540
      %v2616 = vunpack.c.l.b16 %v2541
      %v2617 = vunpack.c.l.b16 %v2542
      %v2618 = vunpack.c.l.b16 %v2543
      %v2619 = vunpack.c.l.b16 %v2544
      %v2620 = vpack.c.b16 %v2584, %v2583
      %v2621 = vpack.c.b16 %v2586, %v2585
      %v2622 = vpack.c.b16 %v2588, %v2587
      %v2623 = vpack.c.b16 %v2590, %v2589
      %v2624 = vpack.c.b16 %v2592, %v2591
      %v2625 = vpack.c.b16 %v2594, %v2593
      %v2626 = vpack.c.b16 %v2596, %v2595
      %v2627 = vpack.c.b16 %v2598, %v2597
      %v2628 = vpack.c.b16 %v2600, %v2599
      %v2629 = vpack.c.b16 %v2602, %v2601
      %v2630 = vpack.c.b16 %v2604, %v2603
      %v2631 = vpack.c.b16 %v2606, %v2605
      %v2632 = vpack.c.b16 %v2608, %v2607
      %v2633 = vpack.c.b16 %v2610, %v2609
      %v2634 = vpack.c.b16 %v2612, %v2611
      %v2635 = vpack.c.b16 %v2614, %v2613
      %v2636 = vpack.c.b16 %v2616, %v2615
      %v2637 = vpack.c.b16 %v2618, %v2617
      %v2638 = vpack.c.b16 %v2619, %v2619
      %v2639 = vrot.slane %v2620, 2
      %v2640 = vrot.slane %v2621, 2
      %v2641 = vsel %vm2196, %v2639, %v2640
      %v2642 = vrot.slane %v2622, 2
      %v2643 = vsel %vm2196, %v2640, %v2642
      %v2644 = vrot.slane %v2623, 2
      %v2645 = vsel %vm2196, %v2642, %v2644
      %v2646 = vrot.slane %v2624, 2
      %v2647 = vsel %vm2196, %v2644, %v2646
      %v2648 = vrot.slane %v2625, 2
      %v2649 = vsel %vm2196, %v2646, %v2648
      %v2650 = vrot.slane %v2626, 2
      %v2651 = vsel %vm2196, %v2648, %v2650
      %v2652 = vrot.slane %v2627, 2
      %v2653 = vsel %vm2196, %v2650, %v2652
      %v2654 = vrot.slane %v2628, 2
      %v2655 = vsel %vm2196, %v2652, %v2654
      %v2656 = vrot.slane %v2629, 2
      %v2657 = vsel %vm2196, %v2654, %v2656
      %v2658 = vrot.slane %v2630, 2
      %v2659 = vsel %vm2196, %v2656, %v2658
      %v2660 = vrot.slane %v2631, 2
      %v2661 = vsel %vm2196, %v2658, %v2660
      %v2662 = vrot.slane %v2632, 2
      %v2663 = vsel %vm2196, %v2660, %v2662
      %v2664 = vrot.slane %v2633, 2
      %v2665 = vsel %vm2196, %v2662, %v2664
      %v2666 = vrot.slane %v2634, 2
      %v2667 = vsel %vm2196, %v2664, %v2666
      %v2668 = vrot.slane %v2635, 2
      %v2669 = vsel %vm2196, %v2666, %v2668
      %v2670 = vrot.slane %v2636, 2
      %v2671 = vsel %vm2196, %v2668, %v2670
      %v2672 = vrot.slane %v2637, 2
      %v2673 = vsel %vm2196, %v2670, %v2672
      %v2674 = vrot.slane %v2638, 2
      %v2675 = vsel %vm2196, %v2672, %v2674
      %v2677 = vsel %vm538, %v2641, 0
      %v2680 = vsel %vm538, %v2643, 0
      %v2683 = vsel %vm538, %v2645, 0
      %v2686 = vsel %vm538, %v2647, 0
      %v2689 = vsel %vm538, %v2649, 0
      %v2692 = vsel %vm538, %v2651, 0
      %v2695 = vsel %vm538, %v2653, 0
      %v2698 = vsel %vm538, %v2655, 0
      %v2701 = vsel %vm538, %v2657, 0
      %v2704 = vsel %vm538, %v2659, 0
      %v2707 = vsel %vm538, %v2661, 0
      %v2710 = vsel %vm538, %v2663, 0
      %v2713 = vsel %vm538, %v2665, 0
      %v2716 = vsel %vm538, %v2667, 0
      %v2719 = vsel %vm538, %v2669, 0
      %v2722 = vsel %vm538, %v2671, 0
      %v2725 = vsel %vm538, %v2673, 0
      %v2728 = vsel %vm538, %v2675, 0
      %v2731 = vsel %vm593, %v2545, 0
      %2733 = vmatprep.subr.bf16.mxu0 0
      %2734 = vmatpush1.bf16.msra.mxu0 %v2731
      %2735 = vmatprep.subr.bf16.mxu0 0
      %2736 = vmatpush1.bf16.msra.mxu0 0
      %2737 = vmatprep.subr.bf16.mxu0 0
      %2738 = vmatpush1.bf16.msra.mxu0 0
      %2739 = vmatprep.subr.bf16.mxu0 0
      %2740 = vmatpush1.bf16.msra.mxu0 0
      %2741 = vmatprep.subr.bf16.mxu0 0
      %2742 = vmatpush1.bf16.msra.mxu0 0
      %2743 = vmatprep.subr.bf16.mxu0 0
      %2744 = vmatpush1.bf16.msra.mxu0 0
      %2745 = vmatprep.subr.bf16.mxu0 0
      %2746 = vmatpush1.bf16.msra.mxu0 0
      %2747 = vmatprep.subr.bf16.mxu0 0
      %2748 = vmatpush1.bf16.msra.mxu0 0
      %2749 = vmatprep.subr.bf16.mxu0 0
      %2750 = vmatpush1.bf16.msra.mxu0 0
      %2751 = vmatprep.subr.bf16.mxu0 0
      %2752 = vmatpush1.bf16.msra.mxu0 0
      %2753 = vmatprep.subr.bf16.mxu0 0
      %2754 = vmatpush1.bf16.msra.mxu0 0
      %2755 = vmatprep.subr.bf16.mxu0 0
      %2756 = vmatpush1.bf16.msra.mxu0 0
      %2757 = vmatprep.subr.bf16.mxu0 0
      %2758 = vmatpush1.bf16.msra.mxu0 0
      %2759 = vmatprep.subr.bf16.mxu0 0
      %2760 = vmatpush1.bf16.msra.mxu0 0
      %2761 = vmatprep.subr.bf16.mxu0 0
      %2762 = vmatpush1.bf16.msra.mxu0 0
      %2763 = vmatprep.subr.bf16.mxu0 0
      %2764 = vmatpush1.bf16.msra.mxu0 0
      %2765 = vmatprep.mubr.bf16.mxu0 0
      %2766 = vmatmul.mubr.bf16.gmra.mrb[0].mxu0 %v2677
      %v2767 = vpop.f32.mrb[0].mxu0
      %v2768 = vadd.f32 0.0, %v2767
      %v2769 = vpop.f32.mrb[0].mxu0
      %v2770 = vpop.f32.mrb[0].mxu0
      %v2771 = vadd.f32 0.0, %v2770
      %v2772 = vpop.f32.mrb[0].mxu0
      %2773 = vmatprep.mubr.bf16.mxu0 0
      %2774 = vmatmul.mubr.bf16.gmra.mrb[0].mxu0 %v2680
      %v2775 = vpop.f32.mrb[0].mxu0
      %v2776 = vadd.f32 0.0, %v2775
      %v2777 = vpop.f32.mrb[0].mxu0
      %v2778 = vpop.f32.mrb[0].mxu0
      %v2779 = vadd.f32 0.0, %v2778
      %v2780 = vpop.f32.mrb[0].mxu0
      %2781 = vmatprep.mubr.bf16.mxu0 0
      %2782 = vmatmul.mubr.bf16.gmra.mrb[0].mxu0 %v2683
      %v2783 = vpop.f32.mrb[0].mxu0
      %v2784 = vadd.f32 0.0, %v2783
      %v2785 = vpop.f32.mrb[0].mxu0
      %v2786 = vpop.f32.mrb[0].mxu0
      %v2787 = vadd.f32 0.0, %v2786
      %v2788 = vpop.f32.mrb[0].mxu0
      %2789 = vmatprep.mubr.bf16.mxu0 0
      %2790 = vmatmul.mubr.bf16.gmra.mrb[0].mxu0 %v2686
      %v2791 = vpop.f32.mrb[0].mxu0
      %v2792 = vadd.f32 0.0, %v2791
      %v2793 = vpop.f32.mrb[0].mxu0
      %v2794 = vpop.f32.mrb[0].mxu0
      %v2795 = vadd.f32 0.0, %v2794
      %v2796 = vpop.f32.mrb[0].mxu0
      %2797 = vmatprep.mubr.bf16.mxu0 0
      %2798 = vmatmul.mubr.bf16.gmra.mrb[0].mxu0 %v2689
      %v2799 = vpop.f32.mrb[0].mxu0
      %v2800 = vadd.f32 0.0, %v2799
      %v2801 = vpop.f32.mrb[0].mxu0
      %v2802 = vpop.f32.mrb[0].mxu0
      %v2803 = vadd.f32 0.0, %v2802
      %v2804 = vpop.f32.mrb[0].mxu0
      %2805 = vmatprep.mubr.bf16.mxu0 0
      %2806 = vmatmul.mubr.bf16.gmra.mrb[0].mxu0 %v2692
      %v2807 = vpop.f32.mrb[0].mxu0
      %v2808 = vadd.f32 0.0, %v2807
      %v2809 = vpop.f32.mrb[0].mxu0
      %v2810 = vpop.f32.mrb[0].mxu0
      %v2811 = vadd.f32 0.0, %v2810
      %v2812 = vpop.f32.mrb[0].mxu0
      %2813 = vmatprep.mubr.bf16.mxu0 0
      %2814 = vmatmul.mubr.bf16.gmra.mrb[0].mxu0 %v2695
      %v2815 = vpop.f32.mrb[0].mxu0
      %v2816 = vadd.f32 0.0, %v2815
      %v2817 = vpop.f32.mrb[0].mxu0
      %v2818 = vpop.f32.mrb[0].mxu0
      %v2819 = vadd.f32 0.0, %v2818
      %v2820 = vpop.f32.mrb[0].mxu0
      %2821 = vmatprep.mubr.bf16.mxu0 0
      %2822 = vmatmul.mubr.bf16.gmra.mrb[0].mxu0 %v2698
      %v2823 = vpop.f32.mrb[0].mxu0
      %v2824 = vadd.f32 0.0, %v2823
      %v2825 = vpop.f32.mrb[0].mxu0
      %v2826 = vpop.f32.mrb[0].mxu0
      %v2827 = vadd.f32 0.0, %v2826
      %v2828 = vpop.f32.mrb[0].mxu0
      %2829 = vmatprep.mubr.bf16.mxu0 0
      %2830 = vmatmul.mubr.bf16.gmra.mrb[0].mxu0 %v2701
      %v2831 = vpop.f32.mrb[0].mxu0
      %v2832 = vadd.f32 0.0, %v2831
      %v2833 = vpop.f32.mrb[0].mxu0
      %v2834 = vpop.f32.mrb[0].mxu0
      %v2835 = vadd.f32 0.0, %v2834
      %v2836 = vpop.f32.mrb[0].mxu0
      %2837 = vmatprep.mubr.bf16.mxu0 0
      %2838 = vmatmul.mubr.bf16.gmra.mrb[0].mxu0 %v2704
      %v2839 = vpop.f32.mrb[0].mxu0
      %v2840 = vadd.f32 0.0, %v2839
      %v2841 = vpop.f32.mrb[0].mxu0
      %v2842 = vpop.f32.mrb[0].mxu0
      %v2843 = vadd.f32 0.0, %v2842
      %v2844 = vpop.f32.mrb[0].mxu0
      %2845 = vmatprep.mubr.bf16.mxu0 0
      %2846 = vmatmul.mubr.bf16.gmra.mrb[0].mxu0 %v2707
      %v2847 = vpop.f32.mrb[0].mxu0
      %v2848 = vadd.f32 0.0, %v2847
      %v2849 = vpop.f32.mrb[0].mxu0
      %v2850 = vpop.f32.mrb[0].mxu0
      %v2851 = vadd.f32 0.0, %v2850
      %v2852 = vpop.f32.mrb[0].mxu0
      %2853 = vmatprep.mubr.bf16.mxu0 0
      %2854 = vmatmul.mubr.bf16.gmra.mrb[0].mxu0 %v2710
      %v2855 = vpop.f32.mrb[0].mxu0
      %v2856 = vadd.f32 0.0, %v2855
      %v2857 = vpop.f32.mrb[0].mxu0
      %v2858 = vpop.f32.mrb[0].mxu0
      %v2859 = vadd.f32 0.0, %v2858
      %v2860 = vpop.f32.mrb[0].mxu0
      %2861 = vmatprep.mubr.bf16.mxu0 0
      %2862 = vmatmul.mubr.bf16.gmra.mrb[0].mxu0 %v2713
      %v2863 = vpop.f32.mrb[0].mxu0
      %v2864 = vadd.f32 0.0, %v2863
      %v2865 = vpop.f32.mrb[0].mxu0
      %v2866 = vpop.f32.mrb[0].mxu0
      %v2867 = vadd.f32 0.0, %v2866
      %v2868 = vpop.f32.mrb[0].mxu0
      %2869 = vmatprep.mubr.bf16.mxu0 0
      %2870 = vmatmul.mubr.bf16.gmra.mrb[0].mxu0 %v2716
      %v2871 = vpop.f32.mrb[0].mxu0
      %v2872 = vadd.f32 0.0, %v2871
      %v2873 = vpop.f32.mrb[0].mxu0
      %v2874 = vpop.f32.mrb[0].mxu0
      %v2875 = vadd.f32 0.0, %v2874
      %v2876 = vpop.f32.mrb[0].mxu0
      %2877 = vmatprep.mubr.bf16.mxu0 0
      %2878 = vmatmul.mubr.bf16.gmra.mrb[0].mxu0 %v2719
      %v2879 = vpop.f32.mrb[0].mxu0
      %v2880 = vadd.f32 0.0, %v2879
      %v2881 = vpop.f32.mrb[0].mxu0
      %v2882 = vpop.f32.mrb[0].mxu0
      %v2883 = vadd.f32 0.0, %v2882
      %v2884 = vpop.f32.mrb[0].mxu0
      %2885 = vmatprep.mubr.bf16.mxu0 0
      %2886 = vmatmul.mubr.bf16.gmra.mrb[0].mxu0 %v2722
      %v2887 = vpop.f32.mrb[0].mxu0
      %v2888 = vadd.f32 0.0, %v2887
      %v2889 = vpop.f32.mrb[0].mxu0
      %v2890 = vpop.f32.mrb[0].mxu0
      %v2891 = vadd.f32 0.0, %v2890
      %v2892 = vpop.f32.mrb[0].mxu0
      %2893 = vmatprep.mubr.bf16.mxu0 0
      %2894 = vmatmul.mubr.bf16.gmra.mrb[0].mxu0 %v2725
      %v2895 = vpop.f32.mrb[0].mxu0
      %v2896 = vadd.f32 0.0, %v2895
      %v2897 = vpop.f32.mrb[0].mxu0
      %v2898 = vpop.f32.mrb[0].mxu0
      %v2899 = vadd.f32 0.0, %v2898
      %v2900 = vpop.f32.mrb[0].mxu0
      %2901 = vmatprep.mubr.bf16.mxu0 0
      %2902 = vmatmul.mubr.bf16.gmra.mrb[0].mxu0 %v2728
      %v2903 = vpop.f32.mrb[0].mxu0
      %v2904 = vadd.f32 0.0, %v2903
      %v2905 = vpop.f32.mrb[0].mxu0
      %v2906 = vpop.f32.mrb[0].mxu0
      %v2907 = vadd.f32 0.0, %v2906
      %v2908 = vpop.f32.mrb[0].mxu0
      %2909 = vdwg.mxu0
      %v2910 = vadd.f32 %v2472, %v2768
      %v2911 = vadd.f32 %v2473, %v2771
      %v2912 = vadd.f32 %v2474, %v2776
      %v2913 = vadd.f32 %v2475, %v2779
      %v2914 = vadd.f32 %v2476, %v2784
      %v2915 = vadd.f32 %v2477, %v2787
      %v2916 = vadd.f32 %v2478, %v2792
      %v2917 = vadd.f32 %v2479, %v2795
      %v2918 = vadd.f32 %v2480, %v2800
      %v2919 = vadd.f32 %v2481, %v2803
      %v2920 = vadd.f32 %v2482, %v2808
      %v2921 = vadd.f32 %v2483, %v2811
      %v2922 = vadd.f32 %v2484, %v2816
      %v2923 = vadd.f32 %v2485, %v2819
      %v2924 = vadd.f32 %v2486, %v2824
      %v2925 = vadd.f32 %v2487, %v2827
      %v2926 = vadd.f32 %v2488, %v2832
      %v2927 = vadd.f32 %v2489, %v2835
      %v2928 = vadd.f32 %v2490, %v2840
      %v2929 = vadd.f32 %v2491, %v2843
      %v2930 = vadd.f32 %v2492, %v2848
      %v2931 = vadd.f32 %v2493, %v2851
      %v2932 = vadd.f32 %v2494, %v2856
      %v2933 = vadd.f32 %v2495, %v2859
      %v2934 = vadd.f32 %v2496, %v2864
      %v2935 = vadd.f32 %v2497, %v2867
      %v2936 = vadd.f32 %v2498, %v2872
      %v2937 = vadd.f32 %v2499, %v2875
      %v2938 = vadd.f32 %v2500, %v2880
      %v2939 = vadd.f32 %v2501, %v2883
      %v2940 = vadd.f32 %v2502, %v2888
      %v2941 = vadd.f32 %v2503, %v2891
      %v2942 = vadd.f32 %v2504, %v2896
      %v2943 = vadd.f32 %v2505, %v2899
      %v2944 = vadd.f32 %v2506, %v2904
      %v2945 = vadd.f32 %v2507, %v2907
      %v2946 = vld [vmem:[%s246 + $0xa0] sm:$0x7]
      %v2947 = vld [vmem:[%s1 + $0xc] sm:$0xc]
      %v2949 = vunpack.c.l.b16 %v2946
      %v2950 = vpack.c.b16 %v2949, %v2949
      %vm2951 = vsmask.f32 5376
      %v2953 = vshrl.u32 %v2620, 16
      %v2955 = vrot.slane %v2953, 2
      %v2956 = vshll.u32 %v2620, 16
      %v2958 = vrot.slane %v2956, 3
      %v2959 = vor.u32 %v2955, %v2958
      %v2961 = vshrl.u32 %v2621, 16
      %v2963 = vrot.slane %v2961, 2
      %v2964 = vshll.u32 %v2621, 16
      %v2966 = vrot.slane %v2964, 3
      %v2967 = vor.u32 %v2963, %v2966
      %v2968 = vsel %vm2951, %v2959, %v2967
      %v2970 = vshrl.u32 %v2622, 16
      %v2972 = vrot.slane %v2970, 2
      %v2973 = vshll.u32 %v2622, 16
      %v2975 = vrot.slane %v2973, 3
      %v2976 = vor.u32 %v2972, %v2975
      %v2977 = vsel %vm2951, %v2967, %v2976
      %v2979 = vshrl.u32 %v2623, 16
      %v2981 = vrot.slane %v2979, 2
      %v2982 = vshll.u32 %v2623, 16
      %v2984 = vrot.slane %v2982, 3
      %v2985 = vor.u32 %v2981, %v2984
      %v2986 = vsel %vm2951, %v2976, %v2985
      %v2988 = vshrl.u32 %v2624, 16
      %v2990 = vrot.slane %v2988, 2
      %v2991 = vshll.u32 %v2624, 16
      %v2993 = vrot.slane %v2991, 3
      %v2994 = vor.u32 %v2990, %v2993
      %v2995 = vsel %vm2951, %v2985, %v2994
      %v2997 = vshrl.u32 %v2625, 16
      %v2999 = vrot.slane %v2997, 2
      %v3000 = vshll.u32 %v2625, 16
      %v3002 = vrot.slane %v3000, 3
      %v3003 = vor.u32 %v2999, %v3002
      %v3004 = vsel %vm2951, %v2994, %v3003
      %v3006 = vshrl.u32 %v2626, 16
      %v3008 = vrot.slane %v3006, 2
      %v3009 = vshll.u32 %v2626, 16
      %v3011 = vrot.slane %v3009, 3
      %v3012 = vor.u32 %v3008, %v3011
      %v3013 = vsel %vm2951, %v3003, %v3012
      %v3015 = vshrl.u32 %v2627, 16
      %v3017 = vrot.slane %v3015, 2
      %v3018 = vshll.u32 %v2627, 16
      %v3020 = vrot.slane %v3018, 3
      %v3021 = vor.u32 %v3017, %v3020
      %v3022 = vsel %vm2951, %v3012, %v3021
      %v3024 = vshrl.u32 %v2628, 16
      %v3026 = vrot.slane %v3024, 2
      %v3027 = vshll.u32 %v2628, 16
      %v3029 = vrot.slane %v3027, 3
      %v3030 = vor.u32 %v3026, %v3029
      %v3031 = vsel %vm2951, %v3021, %v3030
      %v3033 = vshrl.u32 %v2629, 16
      %v3035 = vrot.slane %v3033, 2
      %v3036 = vshll.u32 %v2629, 16
      %v3038 = vrot.slane %v3036, 3
      %v3039 = vor.u32 %v3035, %v3038
      %v3040 = vsel %vm2951, %v3030, %v3039
      %v3042 = vshrl.u32 %v2630, 16
      %v3044 = vrot.slane %v3042, 2
      %v3045 = vshll.u32 %v2630, 16
      %v3047 = vrot.slane %v3045, 3
      %v3048 = vor.u32 %v3044, %v3047
      %v3049 = vsel %vm2951, %v3039, %v3048
      %v3051 = vshrl.u32 %v2631, 16
      %v3053 = vrot.slane %v3051, 2
      %v3054 = vshll.u32 %v2631, 16
      %v3056 = vrot.slane %v3054, 3
      %v3057 = vor.u32 %v3053, %v3056
      %v3058 = vsel %vm2951, %v3048, %v3057
      %v3060 = vshrl.u32 %v2632, 16
      %v3062 = vrot.slane %v3060, 2
      %v3063 = vshll.u32 %v2632, 16
      %v3065 = vrot.slane %v3063, 3
      %v3066 = vor.u32 %v3062, %v3065
      %v3067 = vsel %vm2951, %v3057, %v3066
      %v3069 = vshrl.u32 %v2633, 16
      %v3071 = vrot.slane %v3069, 2
      %v3072 = vshll.u32 %v2633, 16
      %v3074 = vrot.slane %v3072, 3
      %v3075 = vor.u32 %v3071, %v3074
      %v3076 = vsel %vm2951, %v3066, %v3075
      %v3078 = vshrl.u32 %v2634, 16
      %v3080 = vrot.slane %v3078, 2
      %v3081 = vshll.u32 %v2634, 16
      %v3083 = vrot.slane %v3081, 3
      %v3084 = vor.u32 %v3080, %v3083
      %v3085 = vsel %vm2951, %v3075, %v3084
      %v3087 = vshrl.u32 %v2635, 16
      %v3089 = vrot.slane %v3087, 2
      %v3090 = vshll.u32 %v2635, 16
      %v3092 = vrot.slane %v3090, 3
      %v3093 = vor.u32 %v3089, %v3092
      %v3094 = vsel %vm2951, %v3084, %v3093
      %v3096 = vshrl.u32 %v2636, 16
      %v3098 = vrot.slane %v3096, 2
      %v3099 = vshll.u32 %v2636, 16
      %v3101 = vrot.slane %v3099, 3
      %v3102 = vor.u32 %v3098, %v3101
      %v3103 = vsel %vm2951, %v3093, %v3102
      %v3105 = vshrl.u32 %v2637, 16
      %v3107 = vrot.slane %v3105, 2
      %v3108 = vshll.u32 %v2637, 16
      %v3110 = vrot.slane %v3108, 3
      %v3111 = vor.u32 %v3107, %v3110
      %v3112 = vsel %vm2951, %v3102, %v3111
      %v3114 = vshrl.u32 %v2950, 16
      %v3116 = vrot.slane %v3114, 2
      %v3117 = vshll.u32 %v2950, 16
      %v3119 = vrot.slane %v3117, 3
      %v3120 = vor.u32 %v3116, %v3119
      %v3121 = vsel %vm2951, %v3111, %v3120
      %v3123 = vunpack.c.l.b16 %v2947
      %v3124 = vpack.c.b16 %v3123, %v3123
      %v3125 = vrot.slane %v3124, 2
      %v3127 = vsel %vm538, %v2968, 0
      %v3130 = vsel %vm538, %v2977, 0
      %v3133 = vsel %vm538, %v2986, 0
      %v3136 = vsel %vm538, %v2995, 0
      %v3139 = vsel %vm538, %v3004, 0
      %v3142 = vsel %vm538, %v3013, 0
      %v3145 = vsel %vm538, %v3022, 0
      %v3148 = vsel %vm538, %v3031, 0
      %v3151 = vsel %vm538, %v3040, 0
      %v3154 = vsel %vm538, %v3049, 0
      %v3157 = vsel %vm538, %v3058, 0
      %v3160 = vsel %vm538, %v3067, 0
      %v3163 = vsel %vm538, %v3076, 0
      %v3166 = vsel %vm538, %v3085, 0
      %v3169 = vsel %vm538, %v3094, 0
      %v3172 = vsel %vm538, %v3103, 0
      %v3175 = vsel %vm538, %v3112, 0
      %v3178 = vsel %vm538, %v3121, 0
      %v3181 = vsel %vm593, %v3125, 0
      %3183 = vmatprep.subr.bf16.mxu0 0
      %3184 = vmatpush1.bf16.msra.mxu0 %v3181
      %3185 = vmatprep.subr.bf16.mxu0 0
      %3186 = vmatpush1.bf16.msra.mxu0 0
      %3187 = vmatprep.subr.bf16.mxu0 0
      %3188 = vmatpush1.bf16.msra.mxu0 0
      %3189 = vmatprep.subr.bf16.mxu0 0
      %3190 = vmatpush1.bf16.msra.mxu0 0
      %3191 = vmatprep.subr.bf16.mxu0 0
      %3192 = vmatpush1.bf16.msra.mxu0 0
      %3193 = vmatprep.subr.bf16.mxu0 0
      %3194 = vmatpush1.bf16.msra.mxu0 0
      %3195 = vmatprep.subr.bf16.mxu0 0
      %3196 = vmatpush1.bf16.msra.mxu0 0
      %3197 = vmatprep.subr.bf16.mxu0 0
      %3198 = vmatpush1.bf16.msra.mxu0 0
      %3199 = vmatprep.subr.bf16.mxu0 0
      %3200 = vmatpush1.bf16.msra.mxu0 0
      %3201 = vmatprep.subr.bf16.mxu0 0
      %3202 = vmatpush1.bf16.msra.mxu0 0
      %3203 = vmatprep.subr.bf16.mxu0 0
      %3204 = vmatpush1.bf16.msra.mxu0 0
      %3205 = vmatprep.subr.bf16.mxu0 0
      %3206 = vmatpush1.bf16.msra.mxu0 0
      %3207 = vmatprep.subr.bf16.mxu0 0
      %3208 = vmatpush1.bf16.msra.mxu0 0
      %3209 = vmatprep.subr.bf16.mxu0 0
      %3210 = vmatpush1.bf16.msra.mxu0 0
      %3211 = vmatprep.subr.bf16.mxu0 0
      %3212 = vmatpush1.bf16.msra.mxu0 0
      %3213 = vmatprep.subr.bf16.mxu0 0
      %3214 = vmatpush1.bf16.msra.mxu0 0
      %3215 = vmatprep.mubr.bf16.mxu0 0
      %3216 = vmatmul.mubr.bf16.gmra.mrb[0].mxu0 %v3127
      %v3217 = vpop.f32.mrb[0].mxu0
      %v3218 = vadd.f32 0.0, %v3217
      %v3219 = vpop.f32.mrb[0].mxu0
      %v3220 = vpop.f32.mrb[0].mxu0
      %v3221 = vadd.f32 0.0, %v3220
      %v3222 = vpop.f32.mrb[0].mxu0
      %3223 = vmatprep.mubr.bf16.mxu0 0
      %3224 = vmatmul.mubr.bf16.gmra.mrb[0].mxu0 %v3130
      %v3225 = vpop.f32.mrb[0].mxu0
      %v3226 = vadd.f32 0.0, %v3225
      %v3227 = vpop.f32.mrb[0].mxu0
      %v3228 = vpop.f32.mrb[0].mxu0
      %v3229 = vadd.f32 0.0, %v3228
      %v3230 = vpop.f32.mrb[0].mxu0
      %3231 = vmatprep.mubr.bf16.mxu0 0
      %3232 = vmatmul.mubr.bf16.gmra.mrb[0].mxu0 %v3133
      %v3233 = vpop.f32.mrb[0].mxu0
      %v3234 = vadd.f32 0.0, %v3233
      %v3235 = vpop.f32.mrb[0].mxu0
      %v3236 = vpop.f32.mrb[0].mxu0
      %v3237 = vadd.f32 0.0, %v3236
      %v3238 = vpop.f32.mrb[0].mxu0
      %3239 = vmatprep.mubr.bf16.mxu0 0
      %3240 = vmatmul.mubr.bf16.gmra.mrb[0].mxu0 %v3136
      %v3241 = vpop.f32.mrb[0].mxu0
      %v3242 = vadd.f32 0.0, %v3241
      %v3243 = vpop.f32.mrb[0].mxu0
      %v3244 = vpop.f32.mrb[0].mxu0
      %v3245 = vadd.f32 0.0, %v3244
      %v3246 = vpop.f32.mrb[0].mxu0
      %3247 = vmatprep.mubr.bf16.mxu0 0
      %3248 = vmatmul.mubr.bf16.gmra.mrb[0].mxu0 %v3139
      %v3249 = vpop.f32.mrb[0].mxu0
      %v3250 = vadd.f32 0.0, %v3249
      %v3251 = vpop.f32.mrb[0].mxu0
      %v3252 = vpop.f32.mrb[0].mxu0
      %v3253 = vadd.f32 0.0, %v3252
      %v3254 = vpop.f32.mrb[0].mxu0
      %3255 = vmatprep.mubr.bf16.mxu0 0
      %3256 = vmatmul.mubr.bf16.gmra.mrb[0].mxu0 %v3142
      %v3257 = vpop.f32.mrb[0].mxu0
      %v3258 = vadd.f32 0.0, %v3257
      %v3259 = vpop.f32.mrb[0].mxu0
      %v3260 = vpop.f32.mrb[0].mxu0
      %v3261 = vadd.f32 0.0, %v3260
      %v3262 = vpop.f32.mrb[0].mxu0
      %3263 = vmatprep.mubr.bf16.mxu0 0
      %3264 = vmatmul.mubr.bf16.gmra.mrb[0].mxu0 %v3145
      %v3265 = vpop.f32.mrb[0].mxu0
      %v3266 = vadd.f32 0.0, %v3265
      %v3267 = vpop.f32.mrb[0].mxu0
      %v3268 = vpop.f32.mrb[0].mxu0
      %v3269 = vadd.f32 0.0, %v3268
      %v3270 = vpop.f32.mrb[0].mxu0
      %3271 = vmatprep.mubr.bf16.mxu0 0
      %3272 = vmatmul.mubr.bf16.gmra.mrb[0].mxu0 %v3148
      %v3273 = vpop.f32.mrb[0].mxu0
      %v3274 = vadd.f32 0.0, %v3273
      %v3275 = vpop.f32.mrb[0].mxu0
      %v3276 = vpop.f32.mrb[0].mxu0
      %v3277 = vadd.f32 0.0, %v3276
      %v3278 = vpop.f32.mrb[0].mxu0
      %3279 = vmatprep.mubr.bf16.mxu0 0
      %3280 = vmatmul.mubr.bf16.gmra.mrb[0].mxu0 %v3151
      %v3281 = vpop.f32.mrb[0].mxu0
      %v3282 = vadd.f32 0.0, %v3281
      %v3283 = vpop.f32.mrb[0].mxu0
      %v3284 = vpop.f32.mrb[0].mxu0
      %v3285 = vadd.f32 0.0, %v3284
      %v3286 = vpop.f32.mrb[0].mxu0
      %3287 = vmatprep.mubr.bf16.mxu0 0
      %3288 = vmatmul.mubr.bf16.gmra.mrb[0].mxu0 %v3154
      %v3289 = vpop.f32.mrb[0].mxu0
      %v3290 = vadd.f32 0.0, %v3289
      %v3291 = vpop.f32.mrb[0].mxu0
      %v3292 = vpop.f32.mrb[0].mxu0
      %v3293 = vadd.f32 0.0, %v3292
      %v3294 = vpop.f32.mrb[0].mxu0
      %3295 = vmatprep.mubr.bf16.mxu0 0
      %3296 = vmatmul.mubr.bf16.gmra.mrb[0].mxu0 %v3157
      %v3297 = vpop.f32.mrb[0].mxu0
      %v3298 = vadd.f32 0.0, %v3297
      %v3299 = vpop.f32.mrb[0].mxu0
      %v3300 = vpop.f32.mrb[0].mxu0
      %v3301 = vadd.f32 0.0, %v3300
      %v3302 = vpop.f32.mrb[0].mxu0
      %3303 = vmatprep.mubr.bf16.mxu0 0
      %3304 = vmatmul.mubr.bf16.gmra.mrb[0].mxu0 %v3160
      %v3305 = vpop.f32.mrb[0].mxu0
      %v3306 = vadd.f32 0.0, %v3305
      %v3307 = vpop.f32.mrb[0].mxu0
      %v3308 = vpop.f32.mrb[0].mxu0
      %v3309 = vadd.f32 0.0, %v3308
      %v3310 = vpop.f32.mrb[0].mxu0
      %3311 = vmatprep.mubr.bf16.mxu0 0
      %3312 = vmatmul.mubr.bf16.gmra.mrb[0].mxu0 %v3163
      %v3313 = vpop.f32.mrb[0].mxu0
      %v3314 = vadd.f32 0.0, %v3313
      %v3315 = vpop.f32.mrb[0].mxu0
      %v3316 = vpop.f32.mrb[0].mxu0
      %v3317 = vadd.f32 0.0, %v3316
      %v3318 = vpop.f32.mrb[0].mxu0
      %3319 = vmatprep.mubr.bf16.mxu0 0
      %3320 = vmatmul.mubr.bf16.gmra.mrb[0].mxu0 %v3166
      %v3321 = vpop.f32.mrb[0].mxu0
      %v3322 = vadd.f32 0.0, %v3321
      %v3323 = vpop.f32.mrb[0].mxu0
      %v3324 = vpop.f32.mrb[0].mxu0
      %v3325 = vadd.f32 0.0, %v3324
      %v3326 = vpop.f32.mrb[0].mxu0
      %3327 = vmatprep.mubr.bf16.mxu0 0
      %3328 = vmatmul.mubr.bf16.gmra.mrb[0].mxu0 %v3169
      %v3329 = vpop.f32.mrb[0].mxu0
      %v3330 = vadd.f32 0.0, %v3329
      %v3331 = vpop.f32.mrb[0].mxu0
      %v3332 = vpop.f32.mrb[0].mxu0
      %v3333 = vadd.f32 0.0, %v3332
      %v3334 = vpop.f32.mrb[0].mxu0
      %3335 = vmatprep.mubr.bf16.mxu0 0
      %3336 = vmatmul.mubr.bf16.gmra.mrb[0].mxu0 %v3172
      %v3337 = vpop.f32.mrb[0].mxu0
      %v3338 = vadd.f32 0.0, %v3337
      %v3339 = vpop.f32.mrb[0].mxu0
      %v3340 = vpop.f32.mrb[0].mxu0
      %v3341 = vadd.f32 0.0, %v3340
      %v3342 = vpop.f32.mrb[0].mxu0
      %3343 = vmatprep.mubr.bf16.mxu0 0
      %3344 = vmatmul.mubr.bf16.gmra.mrb[0].mxu0 %v3175
      %v3345 = vpop.f32.mrb[0].mxu0
      %v3346 = vadd.f32 0.0, %v3345
      %v3347 = vpop.f32.mrb[0].mxu0
      %v3348 = vpop.f32.mrb[0].mxu0
      %v3349 = vadd.f32 0.0, %v3348
      %v3350 = vpop.f32.mrb[0].mxu0
      %3351 = vmatprep.mubr.bf16.mxu0 0
      %3352 = vmatmul.mubr.bf16.gmra.mrb[0].mxu0 %v3178
      %v3353 = vpop.f32.mrb[0].mxu0
      %v3354 = vadd.f32 0.0, %v3353
      %v3355 = vpop.f32.mrb[0].mxu0
      %v3356 = vpop.f32.mrb[0].mxu0
      %v3357 = vadd.f32 0.0, %v3356
      %v3358 = vpop.f32.mrb[0].mxu0
      %3359 = vdwg.mxu0
      %v3360 = vadd.f32 %v2910, %v3218
      %v3361 = vadd.f32 %v2911, %v3221
      %v3362 = vadd.f32 %v2912, %v3226
      %v3363 = vadd.f32 %v2913, %v3229
      %v3364 = vadd.f32 %v2914, %v3234
      %v3365 = vadd.f32 %v2915, %v3237
      %v3366 = vadd.f32 %v2916, %v3242
      %v3367 = vadd.f32 %v2917, %v3245
      %v3368 = vadd.f32 %v2918, %v3250
      %v3369 = vadd.f32 %v2919, %v3253
      %v3370 = vadd.f32 %v2920, %v3258
      %v3371 = vadd.f32 %v2921, %v3261
      %v3372 = vadd.f32 %v2922, %v3266
      %v3373 = vadd.f32 %v2923, %v3269
      %v3374 = vadd.f32 %v2924, %v3274
      %v3375 = vadd.f32 %v2925, %v3277
      %v3376 = vadd.f32 %v2926, %v3282
      %v3377 = vadd.f32 %v2927, %v3285
      %v3378 = vadd.f32 %v2928, %v3290
      %v3379 = vadd.f32 %v2929, %v3293
      %v3380 = vadd.f32 %v2930, %v3298
      %v3381 = vadd.f32 %v2931, %v3301
      %v3382 = vadd.f32 %v2932, %v3306
      %v3383 = vadd.f32 %v2933, %v3309
      %v3384 = vadd.f32 %v2934, %v3314
      %v3385 = vadd.f32 %v2935, %v3317
      %v3386 = vadd.f32 %v2936, %v3322
      %v3387 = vadd.f32 %v2937, %v3325
      %v3388 = vadd.f32 %v2938, %v3330
      %v3389 = vadd.f32 %v2939, %v3333
      %v3390 = vadd.f32 %v2940, %v3338
      %v3391 = vadd.f32 %v2941, %v3341
      %v3392 = vadd.f32 %v2942, %v3346
      %v3393 = vadd.f32 %v2943, %v3349
      %v3394 = vadd.f32 %v2944, %v3354
      %v3395 = vadd.f32 %v2945, %v3357
      %v3396 = vld [vmem:[%s246 + $0x10] sm:$0x8]
      %v3397 = vld [vmem:[%s1 + $0x10] sm:$0x3]
      %v3399 = vunpack.c.l.b16 %v3396
      %v3400 = vpack.c.b16 %v2584, %v3399
      %vm3401 = vcmask 1044480
      %v3402 = vrot.slane %v3400, 3
      %v3403 = vrot.slane %v2621, 3
      %v3404 = vsel %vm3401, %v3402, %v3403
      %v3405 = vrot.slane %v2622, 3
      %v3406 = vsel %vm3401, %v3403, %v3405
      %v3407 = vrot.slane %v2623, 3
      %v3408 = vsel %vm3401, %v3405, %v3407
      %v3409 = vrot.slane %v2624, 3
      %v3410 = vsel %vm3401, %v3407, %v3409
      %v3411 = vrot.slane %v2625, 3
      %v3412 = vsel %vm3401, %v3409, %v3411
      %v3413 = vrot.slane %v2626, 3
      %v3414 = vsel %vm3401, %v3411, %v3413
      %v3415 = vrot.slane %v2627, 3
      %v3416 = vsel %vm3401, %v3413, %v3415
      %v3417 = vrot.slane %v2628, 3
      %v3418 = vsel %vm3401, %v3415, %v3417
      %v3419 = vrot.slane %v2629, 3
      %v3420 = vsel %vm3401, %v3417, %v3419
      %v3421 = vrot.slane %v2630, 3
      %v3422 = vsel %vm3401, %v3419, %v3421
      %v3423 = vrot.slane %v2631, 3
      %v3424 = vsel %vm3401, %v3421, %v3423
      %v3425 = vrot.slane %v2632, 3
      %v3426 = vsel %vm3401, %v3423, %v3425
      %v3427 = vrot.slane %v2633, 3
      %v3428 = vsel %vm3401, %v3425, %v3427
      %v3429 = vrot.slane %v2634, 3
      %v3430 = vsel %vm3401, %v3427, %v3429
      %v3431 = vrot.slane %v2635, 3
      %v3432 = vsel %vm3401, %v3429, %v3431
      %v3433 = vrot.slane %v2636, 3
      %v3434 = vsel %vm3401, %v3431, %v3433
      %v3435 = vrot.slane %v2637, 3
      %v3436 = vsel %vm3401, %v3433, %v3435
      %v3437 = vrot.slane %v2950, 3
      %v3438 = vsel %vm3401, %v3435, %v3437
      %v3440 = vsel %vm538, %v3404, 0
      %v3443 = vsel %vm538, %v3406, 0
      %v3446 = vsel %vm538, %v3408, 0
      %v3449 = vsel %vm538, %v3410, 0
      %v3452 = vsel %vm538, %v3412, 0
      %v3455 = vsel %vm538, %v3414, 0
      %v3458 = vsel %vm538, %v3416, 0
      %v3461 = vsel %vm538, %v3418, 0
      %v3464 = vsel %vm538, %v3420, 0
      %v3467 = vsel %vm538, %v3422, 0
      %v3470 = vsel %vm538, %v3424, 0
      %v3473 = vsel %vm538, %v3426, 0
      %v3476 = vsel %vm538, %v3428, 0
      %v3479 = vsel %vm538, %v3430, 0
      %v3482 = vsel %vm538, %v3432, 0
      %v3485 = vsel %vm538, %v3434, 0
      %v3488 = vsel %vm538, %v3436, 0
      %v3491 = vsel %vm538, %v3438, 0
      %v3494 = vsel %vm593, %v3397, 0
      %3496 = vmatprep.subr.bf16.mxu0 0
      %3497 = vmatpush1.bf16.msra.mxu0 %v3494
      %3498 = vmatprep.subr.bf16.mxu0 0
      %3499 = vmatpush1.bf16.msra.mxu0 0
      %3500 = vmatprep.subr.bf16.mxu0 0
      %3501 = vmatpush1.bf16.msra.mxu0 0
      %3502 = vmatprep.subr.bf16.mxu0 0
      %3503 = vmatpush1.bf16.msra.mxu0 0
      %3504 = vmatprep.subr.bf16.mxu0 0
      %3505 = vmatpush1.bf16.msra.mxu0 0
      %3506 = vmatprep.subr.bf16.mxu0 0
      %3507 = vmatpush1.bf16.msra.mxu0 0
      %3508 = vmatprep.subr.bf16.mxu0 0
      %3509 = vmatpush1.bf16.msra.mxu0 0
      %3510 = vmatprep.subr.bf16.mxu0 0
      %3511 = vmatpush1.bf16.msra.mxu0 0
      %3512 = vmatprep.subr.bf16.mxu0 0
      %3513 = vmatpush1.bf16.msra.mxu0 0
      %3514 = vmatprep.subr.bf16.mxu0 0
      %3515 = vmatpush1.bf16.msra.mxu0 0
      %3516 = vmatprep.subr.bf16.mxu0 0
      %3517 = vmatpush1.bf16.msra.mxu0 0
      %3518 = vmatprep.subr.bf16.mxu0 0
      %3519 = vmatpush1.bf16.msra.mxu0 0
      %3520 = vmatprep.subr.bf16.mxu0 0
      %3521 = vmatpush1.bf16.msra.mxu0 0
      %3522 = vmatprep.subr.bf16.mxu0 0
      %3523 = vmatpush1.bf16.msra.mxu0 0
      %3524 = vmatprep.subr.bf16.mxu0 0
      %3525 = vmatpush1.bf16.msra.mxu0 0
      %3526 = vmatprep.subr.bf16.mxu0 0
      %3527 = vmatpush1.bf16.msra.mxu0 0
      %3528 = vmatprep.mubr.bf16.mxu0 0
      %3529 = vmatmul.mubr.bf16.gmra.mrb[0].mxu0 %v3440
      %v3530 = vpop.f32.mrb[0].mxu0
      %v3531 = vadd.f32 0.0, %v3530
      %v3532 = vpop.f32.mrb[0].mxu0
      %v3533 = vpop.f32.mrb[0].mxu0
      %v3534 = vadd.f32 0.0, %v3533
      %v3535 = vpop.f32.mrb[0].mxu0
      %3536 = vmatprep.mubr.bf16.mxu0 0
      %3537 = vmatmul.mubr.bf16.gmra.mrb[0].mxu0 %v3443
      %v3538 = vpop.f32.mrb[0].mxu0
      %v3539 = vadd.f32 0.0, %v3538
      %v3540 = vpop.f32.mrb[0].mxu0
      %v3541 = vpop.f32.mrb[0].mxu0
      %v3542 = vadd.f32 0.0, %v3541
      %v3543 = vpop.f32.mrb[0].mxu0
      %3544 = vmatprep.mubr.bf16.mxu0 0
      %3545 = vmatmul.mubr.bf16.gmra.mrb[0].mxu0 %v3446
      %v3546 = vpop.f32.mrb[0].mxu0
      %v3547 = vadd.f32 0.0, %v3546
      %v3548 = vpop.f32.mrb[0].mxu0
      %v3549 = vpop.f32.mrb[0].mxu0
      %v3550 = vadd.f32 0.0, %v3549
      %v3551 = vpop.f32.mrb[0].mxu0
      %3552 = vmatprep.mubr.bf16.mxu0 0
      %3553 = vmatmul.mubr.bf16.gmra.mrb[0].mxu0 %v3449
      %v3554 = vpop.f32.mrb[0].mxu0
      %v3555 = vadd.f32 0.0, %v3554
      %v3556 = vpop.f32.mrb[0].mxu0
      %v3557 = vpop.f32.mrb[0].mxu0
      %v3558 = vadd.f32 0.0, %v3557
      %v3559 = vpop.f32.mrb[0].mxu0
      %3560 = vmatprep.mubr.bf16.mxu0 0
      %3561 = vmatmul.mubr.bf16.gmra.mrb[0].mxu0 %v3452
      %v3562 = vpop.f32.mrb[0].mxu0
      %v3563 = vadd.f32 0.0, %v3562
      %v3564 = vpop.f32.mrb[0].mxu0
      %v3565 = vpop.f32.mrb[0].mxu0
      %v3566 = vadd.f32 0.0, %v3565
      %v3567 = vpop.f32.mrb[0].mxu0
      %3568 = vmatprep.mubr.bf16.mxu0 0
      %3569 = vmatmul.mubr.bf16.gmra.mrb[0].mxu0 %v3455
      %v3570 = vpop.f32.mrb[0].mxu0
      %v3571 = vadd.f32 0.0, %v3570
      %v3572 = vpop.f32.mrb[0].mxu0
      %v3573 = vpop.f32.mrb[0].mxu0
      %v3574 = vadd.f32 0.0, %v3573
      %v3575 = vpop.f32.mrb[0].mxu0
      %3576 = vmatprep.mubr.bf16.mxu0 0
      %3577 = vmatmul.mubr.bf16.gmra.mrb[0].mxu0 %v3458
      %v3578 = vpop.f32.mrb[0].mxu0
      %v3579 = vadd.f32 0.0, %v3578
      %v3580 = vpop.f32.mrb[0].mxu0
      %v3581 = vpop.f32.mrb[0].mxu0
      %v3582 = vadd.f32 0.0, %v3581
      %v3583 = vpop.f32.mrb[0].mxu0
      %3584 = vmatprep.mubr.bf16.mxu0 0
      %3585 = vmatmul.mubr.bf16.gmra.mrb[0].mxu0 %v3461
      %v3586 = vpop.f32.mrb[0].mxu0
      %v3587 = vadd.f32 0.0, %v3586
      %v3588 = vpop.f32.mrb[0].mxu0
      %v3589 = vpop.f32.mrb[0].mxu0
      %v3590 = vadd.f32 0.0, %v3589
      %v3591 = vpop.f32.mrb[0].mxu0
      %3592 = vmatprep.mubr.bf16.mxu0 0
      %3593 = vmatmul.mubr.bf16.gmra.mrb[0].mxu0 %v3464
      %v3594 = vpop.f32.mrb[0].mxu0
      %v3595 = vadd.f32 0.0, %v3594
      %v3596 = vpop.f32.mrb[0].mxu0
      %v3597 = vpop.f32.mrb[0].mxu0
      %v3598 = vadd.f32 0.0, %v3597
      %v3599 = vpop.f32.mrb[0].mxu0
      %3600 = vmatprep.mubr.bf16.mxu0 0
      %3601 = vmatmul.mubr.bf16.gmra.mrb[0].mxu0 %v3467
      %v3602 = vpop.f32.mrb[0].mxu0
      %v3603 = vadd.f32 0.0, %v3602
      %v3604 = vpop.f32.mrb[0].mxu0
      %v3605 = vpop.f32.mrb[0].mxu0
      %v3606 = vadd.f32 0.0, %v3605
      %v3607 = vpop.f32.mrb[0].mxu0
      %3608 = vmatprep.mubr.bf16.mxu0 0
      %3609 = vmatmul.mubr.bf16.gmra.mrb[0].mxu0 %v3470
      %v3610 = vpop.f32.mrb[0].mxu0
      %v3611 = vadd.f32 0.0, %v3610
      %v3612 = vpop.f32.mrb[0].mxu0
      %v3613 = vpop.f32.mrb[0].mxu0
      %v3614 = vadd.f32 0.0, %v3613
      %v3615 = vpop.f32.mrb[0].mxu0
      %3616 = vmatprep.mubr.bf16.mxu0 0
      %3617 = vmatmul.mubr.bf16.gmra.mrb[0].mxu0 %v3473
      %v3618 = vpop.f32.mrb[0].mxu0
      %v3619 = vadd.f32 0.0, %v3618
      %v3620 = vpop.f32.mrb[0].mxu0
      %v3621 = vpop.f32.mrb[0].mxu0
      %v3622 = vadd.f32 0.0, %v3621
      %v3623 = vpop.f32.mrb[0].mxu0
      %3624 = vmatprep.mubr.bf16.mxu0 0
      %3625 = vmatmul.mubr.bf16.gmra.mrb[0].mxu0 %v3476
      %v3626 = vpop.f32.mrb[0].mxu0
      %v3627 = vadd.f32 0.0, %v3626
      %v3628 = vpop.f32.mrb[0].mxu0
      %v3629 = vpop.f32.mrb[0].mxu0
      %v3630 = vadd.f32 0.0, %v3629
      %v3631 = vpop.f32.mrb[0].mxu0
      %3632 = vmatprep.mubr.bf16.mxu0 0
      %3633 = vmatmul.mubr.bf16.gmra.mrb[0].mxu0 %v3479
      %v3634 = vpop.f32.mrb[0].mxu0
      %v3635 = vadd.f32 0.0, %v3634
      %v3636 = vpop.f32.mrb[0].mxu0
      %v3637 = vpop.f32.mrb[0].mxu0
      %v3638 = vadd.f32 0.0, %v3637
      %v3639 = vpop.f32.mrb[0].mxu0
      %3640 = vmatprep.mubr.bf16.mxu0 0
      %3641 = vmatmul.mubr.bf16.gmra.mrb[0].mxu0 %v3482
      %v3642 = vpop.f32.mrb[0].mxu0
      %v3643 = vadd.f32 0.0, %v3642
      %v3644 = vpop.f32.mrb[0].mxu0
      %v3645 = vpop.f32.mrb[0].mxu0
      %v3646 = vadd.f32 0.0, %v3645
      %v3647 = vpop.f32.mrb[0].mxu0
      %3648 = vmatprep.mubr.bf16.mxu0 0
      %3649 = vmatmul.mubr.bf16.gmra.mrb[0].mxu0 %v3485
      %v3650 = vpop.f32.mrb[0].mxu0
      %v3651 = vadd.f32 0.0, %v3650
      %v3652 = vpop.f32.mrb[0].mxu0
      %v3653 = vpop.f32.mrb[0].mxu0
      %v3654 = vadd.f32 0.0, %v3653
      %v3655 = vpop.f32.mrb[0].mxu0
      %3656 = vmatprep.mubr.bf16.mxu0 0
      %3657 = vmatmul.mubr.bf16.gmra.mrb[0].mxu0 %v3488
      %v3658 = vpop.f32.mrb[0].mxu0
      %v3659 = vadd.f32 0.0, %v3658
      %v3660 = vpop.f32.mrb[0].mxu0
      %v3661 = vpop.f32.mrb[0].mxu0
      %v3662 = vadd.f32 0.0, %v3661
      %v3663 = vpop.f32.mrb[0].mxu0
      %3664 = vmatprep.mubr.bf16.mxu0 0
      %3665 = vmatmul.mubr.bf16.gmra.mrb[0].mxu0 %v3491
      %v3666 = vpop.f32.mrb[0].mxu0
      %v3667 = vadd.f32 0.0, %v3666
      %v3668 = vpop.f32.mrb[0].mxu0
      %v3669 = vpop.f32.mrb[0].mxu0
      %v3670 = vadd.f32 0.0, %v3669
      %v3671 = vpop.f32.mrb[0].mxu0
      %3672 = vdwg.mxu0
      %v3673 = vadd.f32 %v3360, %v3531
      %v3674 = vadd.f32 %v3361, %v3534
      %v3675 = vadd.f32 %v3362, %v3539
      %v3676 = vadd.f32 %v3363, %v3542
      %v3677 = vadd.f32 %v3364, %v3547
      %v3678 = vadd.f32 %v3365, %v3550
      %v3679 = vadd.f32 %v3366, %v3555
      %v3680 = vadd.f32 %v3367, %v3558
      %v3681 = vadd.f32 %v3368, %v3563
      %v3682 = vadd.f32 %v3369, %v3566
      %v3683 = vadd.f32 %v3370, %v3571
      %v3684 = vadd.f32 %v3371, %v3574
      %v3685 = vadd.f32 %v3372, %v3579
      %v3686 = vadd.f32 %v3373, %v3582
      %v3687 = vadd.f32 %v3374, %v3587
      %v3688 = vadd.f32 %v3375, %v3590
      %v3689 = vadd.f32 %v3376, %v3595
      %v3690 = vadd.f32 %v3377, %v3598
      %v3691 = vadd.f32 %v3378, %v3603
      %v3692 = vadd.f32 %v3379, %v3606
      %v3693 = vadd.f32 %v3380, %v3611
      %v3694 = vadd.f32 %v3381, %v3614
      %v3695 = vadd.f32 %v3382, %v3619
      %v3696 = vadd.f32 %v3383, %v3622
      %v3697 = vadd.f32 %v3384, %v3627
      %v3698 = vadd.f32 %v3385, %v3630
      %v3699 = vadd.f32 %v3386, %v3635
      %v3700 = vadd.f32 %v3387, %v3638
      %v3701 = vadd.f32 %v3388, %v3643
      %v3702 = vadd.f32 %v3389, %v3646
      %v3703 = vadd.f32 %v3390, %v3651
      %v3704 = vadd.f32 %v3391, %v3654
      %v3705 = vadd.f32 %v3392, %v3659
      %v3706 = vadd.f32 %v3393, %v3662
      %v3707 = vadd.f32 %v3394, %v3667
      %v3708 = vadd.f32 %v3395, %v3670
      %v3709 = vld [vmem:[%s2] sm:$0x1]
      %v3711 = vlaneseq
      %v3712 = vshrl.u32 %v3711, 7
      %v3713 = vsub.s32 0, %v3712
      %v3714 = vrot.slane %v3709, %v3713
      %v3716 = vadd.f32 %v3673, %v3714
      %v3717 = vadd.f32 %v3674, %v3714
      %v3718 = vadd.f32 %v3675, %v3714
      %v3719 = vadd.f32 %v3676, %v3714
      %v3720 = vadd.f32 %v3677, %v3714
      %v3721 = vadd.f32 %v3678, %v3714
      %v3722 = vadd.f32 %v3679, %v3714
      %v3723 = vadd.f32 %v3680, %v3714
      %v3724 = vadd.f32 %v3681, %v3714
      %v3725 = vadd.f32 %v3682, %v3714
      %v3726 = vadd.f32 %v3683, %v3714
      %v3727 = vadd.f32 %v3684, %v3714
      %v3728 = vadd.f32 %v3685, %v3714
      %v3729 = vadd.f32 %v3686, %v3714
      %v3730 = vadd.f32 %v3687, %v3714
      %v3731 = vadd.f32 %v3688, %v3714
      %v3732 = vadd.f32 %v3689, %v3714
      %v3733 = vadd.f32 %v3690, %v3714
      %v3734 = vadd.f32 %v3691, %v3714
      %v3735 = vadd.f32 %v3692, %v3714
      %v3736 = vadd.f32 %v3693, %v3714
      %v3737 = vadd.f32 %v3694, %v3714
      %v3738 = vadd.f32 %v3695, %v3714
      %v3739 = vadd.f32 %v3696, %v3714
      %v3740 = vadd.f32 %v3697, %v3714
      %v3741 = vadd.f32 %v3698, %v3714
      %v3742 = vadd.f32 %v3699, %v3714
      %v3743 = vadd.f32 %v3700, %v3714
      %v3744 = vadd.f32 %v3701, %v3714
      %v3745 = vadd.f32 %v3702, %v3714
      %v3746 = vadd.f32 %v3703, %v3714
      %v3747 = vadd.f32 %v3704, %v3714
      %v3748 = vadd.f32 %v3705, %v3714
      %v3749 = vadd.f32 %v3706, %v3714
      %v3750 = vadd.f32 %v3707, %v3714
      %v3751 = vadd.f32 %v3708, %v3714
      %v3752 = vmax.f32 %v3716, 0.0
      %v3753 = vmax.f32 %v3717, 0.0
      %v3754 = vmax.f32 %v3718, 0.0
      %v3755 = vmax.f32 %v3719, 0.0
      %v3756 = vmax.f32 %v3720, 0.0
      %v3757 = vmax.f32 %v3721, 0.0
      %v3758 = vmax.f32 %v3722, 0.0
      %v3759 = vmax.f32 %v3723, 0.0
      %v3760 = vmax.f32 %v3724, 0.0
      %v3761 = vmax.f32 %v3725, 0.0
      %v3762 = vmax.f32 %v3726, 0.0
      %v3763 = vmax.f32 %v3727, 0.0
      %v3764 = vmax.f32 %v3728, 0.0
      %v3765 = vmax.f32 %v3729, 0.0
      %v3766 = vmax.f32 %v3730, 0.0
      %v3767 = vmax.f32 %v3731, 0.0
      %v3768 = vmax.f32 %v3732, 0.0
      %v3769 = vmax.f32 %v3733, 0.0
      %v3770 = vmax.f32 %v3734, 0.0
      %v3771 = vmax.f32 %v3735, 0.0
      %v3772 = vmax.f32 %v3736, 0.0
      %v3773 = vmax.f32 %v3737, 0.0
      %v3774 = vmax.f32 %v3738, 0.0
      %v3775 = vmax.f32 %v3739, 0.0
      %v3776 = vmax.f32 %v3740, 0.0
      %v3777 = vmax.f32 %v3741, 0.0
      %v3778 = vmax.f32 %v3742, 0.0
      %v3779 = vmax.f32 %v3743, 0.0
      %v3780 = vmax.f32 %v3744, 0.0
      %v3781 = vmax.f32 %v3745, 0.0
      %v3782 = vmax.f32 %v3746, 0.0
      %v3783 = vmax.f32 %v3747, 0.0
      %v3784 = vmax.f32 %v3748, 0.0
      %v3785 = vmax.f32 %v3749, 0.0
      %v3786 = vmax.f32 %v3750, 0.0
      %v3787 = vmax.f32 %v3751, 0.0
      %v3788 = vld [vmem:[%s5] sm:$0x7]
      %v3790 = vlaneseq
      %v3791 = vshrl.u32 %v3790, 7
      %v3792 = vsub.s32 0, %v3791
      %v3793 = vrot.slane %v3788, %v3792
      %v3794 = vlaneseq
      %v3795 = vshrl.u32 %v3794, 7
      %v3796 = vsub.s32 1, %v3795
      %v3797 = vrot.slane %v3788, %v3796
      %v3798 = vlaneseq
      %v3799 = vshrl.u32 %v3798, 7
      %v3800 = vsub.s32 2, %v3799
      %v3801 = vrot.slane %v3788, %v3800
      %vm3804 = vcmask 261120
      %v3805 = vsel %vm3804, %v3801, 0
      %3807 = vmatprep.subr.mxu0 0.0
      %3808 = vmatpush1.msra.mxu0 %v3752
      %3809 = vmatprep.subr.mxu0 0.0
      %3810 = vmatpush1.msra.mxu0 %v3753
      %3811 = vmatprep.subr.mxu0 0.0
      %3812 = vmatpush1.msra.mxu0 %v3754
      %3813 = vmatprep.subr.mxu0 0.0
      %3814 = vmatpush1.msra.mxu0 %v3755
      %3815 = vmatprep.subr.mxu0 0.0
      %3816 = vmatpush1.msra.mxu0 %v3756
      %3817 = vmatprep.subr.mxu0 0.0
      %3818 = vmatpush1.msra.mxu0 %v3757
      %3819 = vmatprep.subr.mxu0 0.0
      %3820 = vmatpush1.msra.mxu0 %v3758
      %3821 = vmatprep.subr.mxu0 0.0
      %3822 = vmatpush1.msra.mxu0 %v3759
      %3823 = vmatprep.subr.mxu0 0.0
      %3824 = vmatpush1.msra.mxu0 %v3760
      %3825 = vmatprep.subr.mxu0 0.0
      %3826 = vmatpush1.msra.mxu0 %v3761
      %3827 = vmatprep.subr.mxu0 0.0
      %3828 = vmatpush1.msra.mxu0 %v3762
      %3829 = vmatprep.subr.mxu0 0.0
      %3830 = vmatpush1.msra.mxu0 %v3763
      %3831 = vmatprep.subr.mxu0 0.0
      %3832 = vmatpush1.msra.mxu0 %v3764
      %3833 = vmatprep.subr.mxu0 0.0
      %3834 = vmatpush1.msra.mxu0 %v3765
      %3835 = vmatprep.subr.mxu0 0.0
      %3836 = vmatpush1.msra.mxu0 %v3766
      %3837 = vmatprep.subr.mxu0 0.0
      %3838 = vmatpush1.msra.mxu0 %v3767
      %3839 = vmatprep.subr.mxu0 0.0
      %3840 = vmatpush1.msra.mxu0 %v3768
      %3841 = vmatprep.subr.mxu0 0.0
      %3842 = vmatpush1.msra.mxu0 %v3769
      %3843 = vmatprep.subr.mxu0 0.0
      %3844 = vmatpush1.msra.mxu0 %v3770
      %3845 = vmatprep.subr.mxu0 0.0
      %3846 = vmatpush1.msra.mxu0 %v3771
      %3847 = vmatprep.subr.mxu0 0.0
      %3848 = vmatpush1.msra.mxu0 %v3772
      %3849 = vmatprep.subr.mxu0 0.0
      %3850 = vmatpush1.msra.mxu0 %v3773
      %3851 = vmatprep.subr.mxu0 0.0
      %3852 = vmatpush1.msra.mxu0 %v3774
      %3853 = vmatprep.subr.mxu0 0.0
      %3854 = vmatpush1.msra.mxu0 %v3775
      %3855 = vmatprep.subr.mxu0 0.0
      %3856 = vmatpush1.msra.mxu0 %v3776
      %3857 = vmatprep.subr.mxu0 0.0
      %3858 = vmatpush1.msra.mxu0 %v3777
      %3859 = vmatprep.subr.mxu0 0.0
      %3860 = vmatpush1.msra.mxu0 %v3778
      %3861 = vmatprep.subr.mxu0 0.0
      %3862 = vmatpush1.msra.mxu0 %v3779
      %3863 = vmatprep.subr.mxu0 0.0
      %3864 = vmatpush1.msra.mxu0 %v3780
      %3865 = vmatprep.subr.mxu0 0.0
      %3866 = vmatpush1.msra.mxu0 %v3781
      %3867 = vmatprep.subr.mxu0 0.0
      %3868 = vmatpush1.msra.mxu0 %v3782
      %3869 = vmatprep.subr.mxu0 0.0
      %3870 = vmatpush1.msra.mxu0 %v3783
      %3871 = vmatprep.mubr.f32.mxu0 %v3797
      %3872 = vmatmul.mubr.f32.gmra.mrb[0].mxu0 %v3793
      %v3873 = vpop.f32.mrb[0].mxu0
      %v3874 = vadd.f32 0.0, %v3873
      %v3875 = vpop.f32.mrb[0].mxu0
      %3876 = vdwg.mxu0
      %3877 = vmatprep.subr.mxu0 0.0
      %3878 = vmatpush1.msra.mxu0 %v3784
      %3879 = vmatprep.subr.mxu0 0.0
      %3880 = vmatpush1.msra.mxu0 %v3785
      %3881 = vmatprep.subr.mxu0 0.0
      %3882 = vmatpush1.msra.mxu0 %v3786
      %3883 = vmatprep.subr.mxu0 0.0
      %3884 = vmatpush1.msra.mxu0 %v3787
      %3885 = vmatprep.subr.mxu0 0.0
      %3886 = vmatpush1.msra.mxu0 0.0
      %3887 = vmatprep.subr.mxu0 0.0
      %3888 = vmatpush1.msra.mxu0 0.0
      %3889 = vmatprep.subr.mxu0 0.0
      %3890 = vmatpush1.msra.mxu0 0.0
      %3891 = vmatprep.subr.mxu0 0.0
      %3892 = vmatpush1.msra.mxu0 0.0
      %3893 = vmatprep.subr.mxu0 0.0
      %3894 = vmatpush1.msra.mxu0 0.0
      %3895 = vmatprep.subr.mxu0 0.0
      %3896 = vmatpush1.msra.mxu0 0.0
      %3897 = vmatprep.subr.mxu0 0.0
      %3898 = vmatpush1.msra.mxu0 0.0
      %3899 = vmatprep.subr.mxu0 0.0
      %3900 = vmatpush1.msra.mxu0 0.0
      %3901 = vmatprep.subr.mxu0 0.0
      %3902 = vmatpush1.msra.mxu0 0.0
      %3903 = vmatprep.subr.mxu0 0.0
      %3904 = vmatpush1.msra.mxu0 0.0
      %3905 = vmatprep.subr.mxu0 0.0
      %3906 = vmatpush1.msra.mxu0 0.0
      %3907 = vmatprep.subr.mxu0 0.0
      %3908 = vmatpush1.msra.mxu0 0.0
      %3909 = vmatprep.subr.mxu0 0.0
      %3910 = vmatpush1.msra.mxu0 0.0
      %3911 = vmatprep.subr.mxu0 0.0
      %3912 = vmatpush1.msra.mxu0 0.0
      %3913 = vmatprep.subr.mxu0 0.0
      %3914 = vmatpush1.msra.mxu0 0.0
      %3915 = vmatprep.subr.mxu0 0.0
      %3916 = vmatpush1.msra.mxu0 0.0
      %3917 = vmatprep.subr.mxu0 0.0
      %3918 = vmatpush1.msra.mxu0 0.0
      %3919 = vmatprep.subr.mxu0 0.0
      %3920 = vmatpush1.msra.mxu0 0.0
      %3921 = vmatprep.subr.mxu0 0.0
      %3922 = vmatpush1.msra.mxu0 0.0
      %3923 = vmatprep.subr.mxu0 0.0
      %3924 = vmatpush1.msra.mxu0 0.0
      %3925 = vmatprep.subr.mxu0 0.0
      %3926 = vmatpush1.msra.mxu0 0.0
      %3927 = vmatprep.subr.mxu0 0.0
      %3928 = vmatpush1.msra.mxu0 0.0
      %3929 = vmatprep.subr.mxu0 0.0
      %3930 = vmatpush1.msra.mxu0 0.0
      %3931 = vmatprep.subr.mxu0 0.0
      %3932 = vmatpush1.msra.mxu0 0.0
      %3933 = vmatprep.subr.mxu0 0.0
      %3934 = vmatpush1.msra.mxu0 0.0
      %3935 = vmatprep.subr.mxu0 0.0
      %3936 = vmatpush1.msra.mxu0 0.0
      %3937 = vmatprep.subr.mxu0 0.0
      %3938 = vmatpush1.msra.mxu0 0.0
      %3939 = vmatprep.subr.mxu0 0.0
      %3940 = vmatpush1.msra.mxu0 0.0
      %3941 = vmatprep.mubr.f32.mxu0 0.0
      %3942 = vmatmul.mubr.f32.gmra.mrb[0].mxu0 %v3805
      %v3943 = vpop.f32.mrb[0].mxu0
      %v3944 = vadd.f32 %v3874, %v3943
      %v3945 = vpop.f32.mrb[0].mxu0
      %3946 = vdwg.mxu0
      %v3947 = vld [vmem:[%s3] sm:$0xff]
      %v3948 = vld [vmem:[%s3 + $0x8] sm:$0xff]
      %v3949 = vld [vmem:[%s3 + $0x10] sm:$0xff]
      %v3950 = vld [vmem:[%s3 + $0x18] sm:$0xff]
      %v3951 = vld [vmem:[%s3 + $0x20] sm:$0xff]
      %v3952 = vld [vmem:[%s3 + $0x28] sm:$0xff]
      %v3953 = vld [vmem:[%s3 + $0x30] sm:$0xff]
      %v3954 = vld [vmem:[%s3 + $0x38] sm:$0xff]
      %v3955 = vld [vmem:[%s3 + $0x40] sm:$0xff]
      %v3956 = vld [vmem:[%s3 + $0x48] sm:$0xff]
      %v3957 = vld [vmem:[%s3 + $0x50] sm:$0xff]
      %v3958 = vld [vmem:[%s3 + $0x58] sm:$0xff]
      %v3959 = vld [vmem:[%s3 + $0x60] sm:$0xff]
      %v3960 = vld [vmem:[%s3 + $0x68] sm:$0xff]
      %v3961 = vld [vmem:[%s3 + $0x70] sm:$0xff]
      %v3962 = vld [vmem:[%s3 + $0x78] sm:$0xff]
      %v3963 = vld [vmem:[%s4] sm:$0x1]
      %3964 = vmatprep.subr.mxu0 0.0
      %3965 = vmatpush1.msra.mxu0 %v3947
      %3966 = vmatprep.subr.mxu0 0.0
      %3967 = vmatpush1.msra.mxu0 %v3948
      %3968 = vmatprep.subr.mxu0 0.0
      %3969 = vmatpush1.msra.mxu0 %v3949
      %3970 = vmatprep.subr.mxu0 0.0
      %3971 = vmatpush1.msra.mxu0 %v3950
      %3972 = vmatprep.subr.mxu0 0.0
      %3973 = vmatpush1.msra.mxu0 %v3951
      %3974 = vmatprep.subr.mxu0 0.0
      %3975 = vmatpush1.msra.mxu0 %v3952
      %3976 = vmatprep.subr.mxu0 0.0
      %3977 = vmatpush1.msra.mxu0 %v3953
      %3978 = vmatprep.subr.mxu0 0.0
      %3979 = vmatpush1.msra.mxu0 %v3954
      %3980 = vmatprep.subr.mxu0 0.0
      %3981 = vmatpush1.msra.mxu0 %v3955
      %3982 = vmatprep.subr.mxu0 0.0
      %3983 = vmatpush1.msra.mxu0 %v3956
      %3984 = vmatprep.subr.mxu0 0.0
      %3985 = vmatpush1.msra.mxu0 %v3957
      %3986 = vmatprep.subr.mxu0 0.0
      %3987 = vmatpush1.msra.mxu0 %v3958
      %3988 = vmatprep.subr.mxu0 0.0
      %3989 = vmatpush1.msra.mxu0 %v3959
      %3990 = vmatprep.subr.mxu0 0.0
      %3991 = vmatpush1.msra.mxu0 %v3960
      %3992 = vmatprep.subr.mxu0 0.0
      %3993 = vmatpush1.msra.mxu0 %v3961
      %3994 = vmatprep.subr.mxu0 0.0
      %3995 = vmatpush1.msra.mxu0 %v3962
      %3996 = vmatprep.subr.mxu0 0.0
      %3997 = vmatpush1.msra.mxu0 0.0
      %3998 = vmatprep.subr.mxu0 0.0
      %3999 = vmatpush1.msra.mxu0 0.0
      %4000 = vmatprep.subr.mxu0 0.0
      %4001 = vmatpush1.msra.mxu0 0.0
      %4002 = vmatprep.subr.mxu0 0.0
      %4003 = vmatpush1.msra.mxu0 0.0
      %4004 = vmatprep.subr.mxu0 0.0
      %4005 = vmatpush1.msra.mxu0 0.0
      %4006 = vmatprep.subr.mxu0 0.0
      %4007 = vmatpush1.msra.mxu0 0.0
      %4008 = vmatprep.subr.mxu0 0.0
      %4009 = vmatpush1.msra.mxu0 0.0
      %4010 = vmatprep.subr.mxu0 0.0
      %4011 = vmatpush1.msra.mxu0 0.0
      %4012 = vmatprep.subr.mxu0 0.0
      %4013 = vmatpush1.msra.mxu0 0.0
      %4014 = vmatprep.subr.mxu0 0.0
      %4015 = vmatpush1.msra.mxu0 0.0
      %4016 = vmatprep.subr.mxu0 0.0
      %4017 = vmatpush1.msra.mxu0 0.0
      %4018 = vmatprep.subr.mxu0 0.0
      %4019 = vmatpush1.msra.mxu0 0.0
      %4020 = vmatprep.subr.mxu0 0.0
      %4021 = vmatpush1.msra.mxu0 0.0
      %4022 = vmatprep.subr.mxu0 0.0
      %4023 = vmatpush1.msra.mxu0 0.0
      %4024 = vmatprep.subr.mxu0 0.0
      %4025 = vmatpush1.msra.mxu0 0.0
      %4026 = vmatprep.subr.mxu0 0.0
      %4027 = vmatpush1.msra.mxu0 0.0
      %4028 = vmatprep.mubr.f32.mxu0 0.0
      %4029 = vmatmul.mubr.f32.gmra.mrb[0].mxu0 %v3944
      %v4030 = vpop.f32.mrb[0].mxu0
      %v4031 = vadd.f32 %v3963, %v4030
      %v4032 = vpop.f32.mrb[0].mxu0
      %4033 = vdwg.mxu0
      %v4034 = vxor.u32 %v4031, 2147483648
      %v4035 = vmul.f32 %v4034, 1.442695
      %v4036 = vpow.pop %v4035
      %v4037 = vadd.f32 %v4036, 1.0
      %v4038 = vrcp.pop %v4037
      %v4039 = vmul.f32 1.0, %v4038
      %v4040 = vlaneseq
      %v4041 = vshrl.u32 %v4040, 7
      %v4042 = vsub.s32 0, %v4041
      %v4043 = vrot.slane %v4039, %v4042
      %v4044 = vmul.f32 %v3752, %v4043
      %v4045 = vmul.f32 %v3753, %v4043
      %v4046 = vmul.f32 %v3754, %v4043
      %v4047 = vmul.f32 %v3755, %v4043
      %v4048 = vmul.f32 %v3756, %v4043
      %v4049 = vmul.f32 %v3757, %v4043
      %v4050 = vmul.f32 %v3758, %v4043
      %v4051 = vmul.f32 %v3759, %v4043
      %v4052 = vmul.f32 %v3760, %v4043
      %v4053 = vmul.f32 %v3761, %v4043
      %v4054 = vmul.f32 %v3762, %v4043
      %v4055 = vmul.f32 %v3763, %v4043
      %v4056 = vmul.f32 %v3764, %v4043
      %v4057 = vmul.f32 %v3765, %v4043
      %v4058 = vmul.f32 %v3766, %v4043
      %v4059 = vmul.f32 %v3767, %v4043
      %v4060 = vmul.f32 %v3768, %v4043
      %v4061 = vmul.f32 %v3769, %v4043
      %v4062 = vmul.f32 %v3770, %v4043
      %v4063 = vmul.f32 %v3771, %v4043
      %v4064 = vmul.f32 %v3772, %v4043
      %v4065 = vmul.f32 %v3773, %v4043
      %v4066 = vmul.f32 %v3774, %v4043
      %v4067 = vmul.f32 %v3775, %v4043
      %v4068 = vmul.f32 %v3776, %v4043
      %v4069 = vmul.f32 %v3777, %v4043
      %v4070 = vmul.f32 %v3778, %v4043
      %v4071 = vmul.f32 %v3779, %v4043
      %v4072 = vmul.f32 %v3780, %v4043
      %v4073 = vmul.f32 %v3781, %v4043
      %v4074 = vmul.f32 %v3782, %v4043
      %v4075 = vmul.f32 %v3783, %v4043
      %v4076 = vmul.f32 %v3784, %v4043
      %v4077 = vmul.f32 %v3785, %v4043
      %v4078 = vmul.f32 %v3786, %v4043
      %v4079 = vmul.f32 %v3787, %v4043
      %v4080 = vpack.c.bf16 %v4045, %v4044
      %v4081 = vpack.c.bf16 %v4047, %v4046
      %v4082 = vpack.c.bf16 %v4049, %v4048
      %v4083 = vpack.c.bf16 %v4051, %v4050
      %v4084 = vpack.c.bf16 %v4053, %v4052
      %v4085 = vpack.c.bf16 %v4055, %v4054
      %v4086 = vpack.c.bf16 %v4057, %v4056
      %v4087 = vpack.c.bf16 %v4059, %v4058
      %v4088 = vpack.c.bf16 %v4061, %v4060
      %v4089 = vpack.c.bf16 %v4063, %v4062
      %v4090 = vpack.c.bf16 %v4065, %v4064
      %v4091 = vpack.c.bf16 %v4067, %v4066
      %v4092 = vpack.c.bf16 %v4069, %v4068
      %v4093 = vpack.c.bf16 %v4071, %v4070
      %v4094 = vpack.c.bf16 %v4073, %v4072
      %v4095 = vpack.c.bf16 %v4075, %v4074
      %v4096 = vpack.c.bf16 %v4077, %v4076
      %v4097 = vpack.c.bf16 %v4079, %v4078
      %v4116 = vunpack.c.l.b16 %v4080
      %v4117 = vunpack.c.h.b16 %v4080
      %v4118 = vunpack.c.l.b16 %v4081
      %v4119 = vunpack.c.h.b16 %v4081
      %v4120 = vunpack.c.l.b16 %v4082
      %v4121 = vunpack.c.h.b16 %v4082
      %v4122 = vunpack.c.l.b16 %v4083
      %v4123 = vunpack.c.h.b16 %v4083
      %v4124 = vunpack.c.l.b16 %v4084
      %v4125 = vunpack.c.h.b16 %v4084
      %v4126 = vunpack.c.l.b16 %v4085
      %v4127 = vunpack.c.h.b16 %v4085
      %v4128 = vunpack.c.l.b16 %v4086
      %v4129 = vunpack.c.h.b16 %v4086
      %v4130 = vunpack.c.l.b16 %v4087
      %v4131 = vunpack.c.h.b16 %v4087
      %v4132 = vunpack.c.l.b16 %v4088
      %v4133 = vunpack.c.h.b16 %v4088
      %v4134 = vunpack.c.l.b16 %v4089
      %v4135 = vunpack.c.h.b16 %v4089
      %v4136 = vunpack.c.l.b16 %v4090
      %v4137 = vunpack.c.h.b16 %v4090
      %v4138 = vunpack.c.l.b16 %v4091
      %v4139 = vunpack.c.h.b16 %v4091
      %v4140 = vunpack.c.l.b16 %v4092
      %v4141 = vunpack.c.h.b16 %v4092
      %v4142 = vunpack.c.l.b16 %v4093
      %v4143 = vunpack.c.h.b16 %v4093
      %v4144 = vunpack.c.l.b16 %v4094
      %v4145 = vunpack.c.h.b16 %v4094
      %v4146 = vunpack.c.l.b16 %v4095
      %v4147 = vunpack.c.h.b16 %v4095
      %v4148 = vunpack.c.l.b16 %v4096
      %v4149 = vunpack.c.h.b16 %v4096
      %v4150 = vunpack.c.l.b16 %v4097
      %v4151 = vunpack.c.h.b16 %v4097
      %v4152 = vpack.c.b16 %v4116, %v4116
      %v4153 = vpack.c.b16 %v4117, %v4117
      %v4154 = vpack.c.b16 %v4118, %v4118
      %v4155 = vpack.c.b16 %v4119, %v4119
      %v4156 = vpack.c.b16 %v4120, %v4120
      %v4157 = vpack.c.b16 %v4121, %v4121
      %v4158 = vpack.c.b16 %v4122, %v4122
      %v4159 = vpack.c.b16 %v4123, %v4123
      %v4160 = vpack.c.b16 %v4124, %v4124
      %v4161 = vpack.c.b16 %v4125, %v4125
      %v4162 = vpack.c.b16 %v4126, %v4126
      %v4163 = vpack.c.b16 %v4127, %v4127
      %v4164 = vpack.c.b16 %v4128, %v4128
      %v4165 = vpack.c.b16 %v4129, %v4129
      %v4166 = vpack.c.b16 %v4130, %v4130
      %v4167 = vpack.c.b16 %v4131, %v4131
      %v4168 = vpack.c.b16 %v4132, %v4132
      %v4169 = vpack.c.b16 %v4133, %v4133
      %v4170 = vpack.c.b16 %v4134, %v4134
      %v4171 = vpack.c.b16 %v4135, %v4135
      %v4172 = vpack.c.b16 %v4136, %v4136
      %v4173 = vpack.c.b16 %v4137, %v4137
      %v4174 = vpack.c.b16 %v4138, %v4138
      %v4175 = vpack.c.b16 %v4139, %v4139
      %v4176 = vpack.c.b16 %v4140, %v4140
      %v4177 = vpack.c.b16 %v4141, %v4141
      %v4178 = vpack.c.b16 %v4142, %v4142
      %v4179 = vpack.c.b16 %v4143, %v4143
      %v4180 = vpack.c.b16 %v4144, %v4144
      %v4181 = vpack.c.b16 %v4145, %v4145
      %v4182 = vpack.c.b16 %v4146, %v4146
      %v4183 = vpack.c.b16 %v4147, %v4147
      %v4184 = vpack.c.b16 %v4148, %v4148
      %v4185 = vpack.c.b16 %v4149, %v4149
      %v4186 = vpack.c.b16 %v4150, %v4150
      %v4187 = vpack.c.b16 %v4151, %v4151
      %4224 = vst [vmem:[%s251] sm:$0xf] %v4152
      %4225 = vst [vmem:[%s251 + $0x4] sm:$0xf] %v4153
      %4226 = vst [vmem:[%s251 + $0x8] sm:$0xf] %v4154
      %4227 = vst [vmem:[%s251 + $0xc] sm:$0xf] %v4155
      %4228 = vst [vmem:[%s251 + $0x10] sm:$0xf] %v4156
      %4229 = vst [vmem:[%s251 + $0x14] sm:$0xf] %v4157
      %4230 = vst [vmem:[%s251 + $0x18] sm:$0xf] %v4158
      %4231 = vst [vmem:[%s251 + $0x1c] sm:$0xf] %v4159
      %4232 = vst [vmem:[%s251 + $0x20] sm:$0xf] %v4160
      %4233 = vst [vmem:[%s251 + $0x24] sm:$0xf] %v4161
      %4234 = vst [vmem:[%s251 + $0x28] sm:$0xf] %v4162
      %4235 = vst [vmem:[%s251 + $0x2c] sm:$0xf] %v4163
      %4236 = vst [vmem:[%s251 + $0x30] sm:$0xf] %v4164
      %4237 = vst [vmem:[%s251 + $0x34] sm:$0xf] %v4165
      %4238 = vst [vmem:[%s251 + $0x38] sm:$0xf] %v4166
      %4239 = vst [vmem:[%s251 + $0x3c] sm:$0xf] %v4167
      %4240 = vst [vmem:[%s251 + $0x40] sm:$0xf] %v4168
      %4241 = vst [vmem:[%s251 + $0x44] sm:$0xf] %v4169
      %4242 = vst [vmem:[%s251 + $0x48] sm:$0xf] %v4170
      %4243 = vst [vmem:[%s251 + $0x4c] sm:$0xf] %v4171
      %4244 = vst [vmem:[%s251 + $0x50] sm:$0xf] %v4172
      %4245 = vst [vmem:[%s251 + $0x54] sm:$0xf] %v4173
      %4246 = vst [vmem:[%s251 + $0x58] sm:$0xf] %v4174
      %4247 = vst [vmem:[%s251 + $0x5c] sm:$0xf] %v4175
      %4248 = vst [vmem:[%s251 + $0x60] sm:$0xf] %v4176
      %4249 = vst [vmem:[%s251 + $0x64] sm:$0xf] %v4177
      %4250 = vst [vmem:[%s251 + $0x68] sm:$0xf] %v4178
      %4251 = vst [vmem:[%s251 + $0x6c] sm:$0xf] %v4179
      %4252 = vst [vmem:[%s251 + $0x70] sm:$0xf] %v4180
      %4253 = vst [vmem:[%s251 + $0x74] sm:$0xf] %v4181
      %4254 = vst [vmem:[%s251 + $0x78] sm:$0xf] %v4182
      %4255 = vst [vmem:[%s251 + $0x7c] sm:$0xf] %v4183
      %4256 = vst [vmem:[%s251 + $0x80] sm:$0xf] %v4184
      %4257 = vst [vmem:[%s251 + $0x84] sm:$0xf] %v4185
      %4258 = vst [vmem:[%s251 + $0x88] sm:$0xf] %v4186
      %4259 = vst [vmem:[%s251 + $0x8c] sm:$0xf] %v4187
      %p4260 = scmp.lt.s32.totalorder %s17, 1
      %s4261 = scalar_select %p4260, %s17, 1
      %s4262 = smul.addr %s4261, 36
      %s4263 = smul.addr %s4262, 4
      %s4264 = scalar_lea.vmem %s6, %s4263
      // Predicated region
      $region45: #{_arm_forward.1} parent=43 // pred_check
        %p4265 = pneg %p166
      $region46: #{_arm_forward.1} parent=43 // pred_check_branch
        %4267 = sbr.rel (%p4265) target = $region48
      $region47: #{_arm_forward.1} parent=43 // pred_region
        _
      $region48: #{_arm_forward.1} parent=43 // pred_fallthru
        _
    $region44: #{_arm_forward.1} parent=5 // pred_fallthru
      _
    %p4268 = scmp.le.s32.totalorder 2, %s12
    // Predicated region
    $region49: #{_arm_forward.1} parent=5 // pred_check
      %p4269 = pneg %p4268
    $region50: #{_arm_forward.1} parent=5 // pred_check_branch
      %4271 = sbr.rel (%p4269) target = $region52
    $region51: #{_arm_forward.1} parent=5 // pred_region
      %s4272 = ssub.s32 %s12, 2
      // Predicated region
      $region53: #{_arm_forward.1} parent=51 // pred_check
        %p4273 = pneg %p172
      $region54: #{_arm_forward.1} parent=51 // pred_check_branch
        %4275 = sbr.rel (%p4273) target = $region56
      $region55: #{_arm_forward.1} parent=51 // pred_region
        %p4276 = scmp.lt.s32.totalorder %s18, 1
        %s4277 = scalar_select %p4276, %s18, 1
        %s4278 = smul.addr %s4277, 36
        %s4279 = smul.addr %s4278, 4
        %s4280 = scalar_lea.vmem %s6, %s4279
      $region56: #{_arm_forward.1} parent=51 // pred_fallthru
        _
    $region52: #{_arm_forward.1} parent=5 // pred_fallthru
      _
  $region6: #{_arm_forward.1} parent=0 // loop_footer
    %s16 = sadd.s32 1, %s12
  $region7: #{_arm_forward.1} parent=0 // loop_footer_branch
    %11 = sbr.rel target = $region3
  $region8: #{_arm_forward.1} parent=0 // loop_exit
    _

</llo_original>
